<compile_context>
chip_gen: v6e
topology: v6e:2x2x1
jax: 0.10.0
libtpu: 0.0.40
codegen_flags: <defaults>
</compile_context>

<pallas_src>
import jax
import jax.numpy as jnp
from jax.experimental import pallas as pl
from jax.experimental.pallas import tpu as pltpu

RGB_SPLIT = 1024   # hardcoded in the PyTorch forward: x[:, :, :1024] / x[:, :, 1024:]
HIDDEN = 512       # fc1 width of each unit
TILE_M_MAX = 512   # safe for v5e/v6e/v7x VMEM budgets (bf16 tile + resident weights)


def _joint_kernel(x_ref, w1r_ref, b1r_ref, w1f_ref, b1f_ref,
                  wr_ref, wf_ref, beff_ref, o_ref):
    # Static, lane-aligned slices of the (TILE_M, 2048) bf16 input tile.
    xr = x_ref[:, :RGB_SPLIT]
    xf = x_ref[:, RGB_SPLIT:]

    # RGB unit fc1 -> relu (dropout = identity in eval). bf16 MXU, f32 accumulate.
    hr = jnp.dot(xr, w1r_ref[...], preferred_element_type=jnp.float32)
    hr = jnp.maximum(hr + b1r_ref[...], 0.0)

    # Flow unit fc1 -> relu.
    hf = jnp.dot(xf, w1f_ref[...], preferred_element_type=jnp.float32)
    hf = jnp.maximum(hf + b1f_ref[...], 0.0)

    # Folded affine tail (fc2 + joint fc1 + joint fc2) as two f32 matvecs + bias.
    s = (jnp.dot(hr, wr_ref[...], preferred_element_type=jnp.float32)
         + jnp.dot(hf, wf_ref[...], preferred_element_type=jnp.float32)
         + beff_ref[...])
    o_ref[...] = jax.nn.sigmoid(s)


def _prepare_params(params):
    """Fold the all-affine tail and cast the big fc1 weights to bf16 (done once)."""
    (w1r, b1r, w2r, b2r, w1f, b1f, w2f, b2f, wj1, bj1, wj2, bj2) = params
    wj1_r = wj1[:128]                              # (128, 32)
    wj1_f = wj1[128:]                              # (128, 32)
    w_eff_r = (w2r @ wj1_r) @ wj2                  # (512, 1)
    w_eff_f = (w2f @ wj1_f) @ wj2                  # (512, 1)
    b_eff = (b2r @ wj1_r + b2f @ wj1_f + bj1) @ wj2 + bj2   # (1, 1)
    return (w1r.astype(jnp.bfloat16), b1r,
            w1f.astype(jnp.bfloat16), b1f,
            w_eff_r.astype(jnp.float32), w_eff_f.astype(jnp.float32),
            b_eff.astype(jnp.float32))


def _choose_tile_m(m):
    if m >= TILE_M_MAX:
        return TILE_M_MAX
    return ((m + 7) // 8) * 8   # small problems: one tile, sublane-aligned


def rn_vanilla_joint_forward(x, params):
    """x: (B, T, 2*RGB_SPLIT) float32. Returns scores (B, T, 1) float32."""
    B, T, D = x.shape
    assert D == 2 * RGB_SPLIT, "forward slices at 1024; expects last dim == 2048"
    M = B * T

    x2d = x.reshape(M, D).astype(jnp.bfloat16)
    (w1r_bf, b1r, w1f_bf, b1f, w_eff_r, w_eff_f, b_eff) = _prepare_params(params)

    tile_m = _choose_tile_m(M)
    n_tiles = pl.cdiv(M, tile_m)
    m_pad = n_tiles * tile_m
    if m_pad != M:
        x2d = jnp.pad(x2d, ((0, m_pad - M), (0, 0)))

    flops = 2 * M * (2 * RGB_SPLIT * HIDDEN + 2 * HIDDEN * 1)
    bytes_accessed = m_pad * D * 2 + 2 * RGB_SPLIT * HIDDEN * 2 + m_pad * 4

    out = pl.pallas_call(
        _joint_kernel,
        out_shape=jax.ShapeDtypeStruct((m_pad, 1), jnp.float32),
        grid_spec=pltpu.PrefetchScalarGridSpec(
            num_scalar_prefetch=0,
            grid=(n_tiles,),
            in_specs=[
                pl.BlockSpec((tile_m, D), lambda i: (i, 0)),            # x tile
                pl.BlockSpec((RGB_SPLIT, HIDDEN), lambda i: (0, 0)),    # w1r (bf16)
                pl.BlockSpec((1, HIDDEN), lambda i: (0, 0)),            # b1r
                pl.BlockSpec((RGB_SPLIT, HIDDEN), lambda i: (0, 0)),    # w1f (bf16)
                pl.BlockSpec((1, HIDDEN), lambda i: (0, 0)),            # b1f
                pl.BlockSpec((HIDDEN, 1), lambda i: (0, 0)),            # w_eff_r
                pl.BlockSpec((HIDDEN, 1), lambda i: (0, 0)),            # w_eff_f
                pl.BlockSpec((1, 1), lambda i: (0, 0)),                 # b_eff
            ],
            out_specs=pl.BlockSpec((tile_m, 1), lambda i: (i, 0)),
        ),
        compiler_params=pltpu.CompilerParams(
            dimension_semantics=("parallel",),
            vmem_limit_bytes=32 * 1024 * 1024,
        ),
        cost_estimate=pl.CostEstimate(
            flops=flops, transcendentals=M, bytes_accessed=bytes_accessed),
    )(x2d, w1r_bf, b1r, w1f_bf, b1f, w_eff_r, w_eff_f, b_eff)

    return out[:M].reshape(B, T, 1)


# ----------------------------- parameter init ------------------------------

def _xavier_normal(key, fan_out, fan_in):
    std = (2.0 / (fan_in + fan_out)) ** 0.5
    # PyTorch weight shape is (out, in); we keep the transposed (in, out) layout.
    return std * jax.random.normal(key, (fan_in, fan_out), dtype=jnp.float32)


def _bias(key, fan_in, fan_out):
    bound = 1.0 / (fan_in ** 0.5)
    return jax.random.uniform(key, (1, fan_out), dtype=jnp.float32,
                              minval=-bound, maxval=bound)


def init_params(key, input_dim):
    ks = jax.random.split(key, 12)
    # rgb unit
    w1r = _xavier_normal(ks[0], HIDDEN, input_dim)     # (1024, 512)
    b1r = _bias(ks[1], input_dim, HIDDEN)
    w2r = _xavier_normal(ks[2], 128, HIDDEN)           # (512, 128)
    b2r = _bias(ks[3], HIDDEN, 128)
    # flow unit
    w1f = _xavier_normal(ks[4], HIDDEN, input_dim)
    b1f = _bias(ks[5], input_dim, HIDDEN)
    w2f = _xavier_normal(ks[6], 128, HIDDEN)
    b2f = _bias(ks[7], HIDDEN, 128)
    # joint head
    wj1 = _xavier_normal(ks[8], 32, 256)               # (256, 32)
    bj1 = _bias(ks[9], 256, 32)
    wj2 = _xavier_normal(ks[10], 1, 32)                # (32, 1)
    bj2 = _bias(ks[11], 32, 1)
    return (w1r, b1r, w2r, b2r, w1f, b1f, w2f, b2f, wj1, bj1, wj2, bj2)


# ------------------------------- references --------------------------------

def _reference_f32(x, params):
    """Pure-f32 reference matching the original PyTorch graph."""
    (w1r, b1r, w2r, b2r, w1f, b1f, w2f, b2f, wj1, bj1, wj2, bj2) = params
    xr = x[:, :, :RGB_SPLIT]
    xf = x[:, :, RGB_SPLIT:]
    rr = jnp.maximum(xr @ w1r + b1r[0], 0.0) @ w2r + b2r[0]
    rf = jnp.maximum(xf @ w1f + b1f[0], 0.0) @ w2f + b2f[0]
    cat = jnp.concatenate([rr, rf], axis=-1)
    return jax.nn.sigmoid((cat @ wj1 + bj1[0]) @ wj2 + bj2[0])


def _reference_mixed(x, params):
    """Reference that mirrors the kernel's precision (bf16 MXU, f32 accum, folded tail)."""
    (w1r, b1r, w2r, b2r, w1f, b1f, w2f, b2f, wj1, bj1, wj2, bj2) = params
    xr = x[:, :, :RGB_SPLIT].astype(jnp.bfloat16)
    xf = x[:, :, RGB_SPLIT:].astype(jnp.bfloat16)
    hr = jnp.maximum(jnp.dot(xr, w1r.astype(jnp.bfloat16),
                             preferred_element_type=jnp.float32) + b1r[0], 0.0)
    hf = jnp.maximum(jnp.dot(xf, w1f.astype(jnp.bfloat16),
                             preferred_element_type=jnp.float32) + b1f[0], 0.0)
    w_eff_r = (w2r @ wj1[:128]) @ wj2
    w_eff_f = (w2f @ wj1[128:]) @ wj2
    b_eff = (b2r @ wj1[:128] + b2f @ wj1[128:] + bj1) @ wj2 + bj2
    return jax.nn.sigmoid(hr @ w_eff_r + hf @ w_eff_f + b_eff[0])


# ---------------------------------- main ------------------------------------

if __name__ == "__main__":
    # The forward slices features at index 1024, so per-stream input_dim is 1024 and
    # the full input last dim is 2048. Batch=2, seq=8 keeps the example small.
    B, T = 2, 8
    input_dim = RGB_SPLIT
    key = jax.random.PRNGKey(0)
    kx, kp = jax.random.split(key)

    x = jax.random.normal(kx, (B, T, 2 * input_dim), dtype=jnp.float32)
    params = init_params(kp, input_dim)

    scores = rn_vanilla_joint_forward(x, params)
    scores = jax.block_until_ready(scores)
    assert scores.shape == (B, T, 1)

    # Tight check vs a reference with identical precision choices (structural parity).
    ref_mixed = _reference_mixed(x, params)
    assert jnp.allclose(scores, ref_mixed, rtol=0.0, atol=1e-3), \
        "mismatch vs mixed-precision JAX reference"

    # Looser check vs the pure-f32 PyTorch-equivalent graph (bf16 MXU tolerance).
    ref_f32 = _reference_f32(x, params)
    assert jnp.allclose(scores, ref_f32, rtol=0.0, atol=2e-2), \
        "mismatch vs f32 JAX reference"

    print("KERNEL_OK")
</pallas_src>

<mosaic_0001>
module attributes {stable_mosaic.version = 11 : i64} {
  func.func @_joint_kernel(%arg0: i32, %arg1: memref<16x2048xbf16, #tpu.memory_space<vmem>>, %arg2: memref<1024x512xbf16, #tpu.memory_space<vmem>>, %arg3: memref<1x512xf32, #tpu.memory_space<vmem>>, %arg4: memref<1024x512xbf16, #tpu.memory_space<vmem>>, %arg5: memref<1x512xf32, #tpu.memory_space<vmem>>, %arg6: memref<512x1xf32, #tpu.memory_space<vmem>>, %arg7: memref<512x1xf32, #tpu.memory_space<vmem>>, %arg8: memref<1x1xf32, #tpu.memory_space<vmem>>, %arg9: memref<16x1xf32, #tpu.memory_space<vmem>>) attributes {dimension_semantics = [#tpu.dimension_semantics<parallel>], iteration_bounds = array<i64: 1>, scalar_prefetch = 0 : i64, scratch_operands = 0 : i64, tpu.core_type = #tpu.core_type<tc>, window_params = [{transform_indices = @transform_0, window_bounds = array<i64: 16, 2048>}, {pipeline_mode = #tpu.pipeline_mode<synchronous>, transform_indices = @transform_1, window_bounds = array<i64: 1024, 512>}, {pipeline_mode = #tpu.pipeline_mode<synchronous>, transform_indices = @transform_2, window_bounds = array<i64: 1, 512>}, {pipeline_mode = #tpu.pipeline_mode<synchronous>, transform_indices = @transform_3, window_bounds = array<i64: 1024, 512>}, {pipeline_mode = #tpu.pipeline_mode<synchronous>, transform_indices = @transform_4, window_bounds = array<i64: 1, 512>}, {pipeline_mode = #tpu.pipeline_mode<synchronous>, transform_indices = @transform_5, window_bounds = array<i64: 512, 1>}, {pipeline_mode = #tpu.pipeline_mode<synchronous>, transform_indices = @transform_6, window_bounds = array<i64: 512, 1>}, {pipeline_mode = #tpu.pipeline_mode<synchronous>, transform_indices = @transform_7, window_bounds = array<i64: 1, 1>}, {transform_indices = @transform_8, window_bounds = array<i64: 16, 1>}]} {
    %c0 = arith.constant 0 : index
    %c0_0 = arith.constant 0 : index
    %0 = vector.load %arg1[%c0, %c0_0] : memref<16x2048xbf16, #tpu.memory_space<vmem>>, vector<16x1024xbf16>
    %c0_1 = arith.constant 0 : index
    %c1024 = arith.constant 1024 : index
    %1 = vector.load %arg1[%c0_1, %c1024] : memref<16x2048xbf16, #tpu.memory_space<vmem>>, vector<16x1024xbf16>
    %c0_2 = arith.constant 0 : index
    %c0_3 = arith.constant 0 : index
    %2 = vector.load %arg2[%c0_2, %c0_3] : memref<1024x512xbf16, #tpu.memory_space<vmem>>, vector<1024x512xbf16>
    %cst = arith.constant dense<0.000000e+00> : vector<16x512xf32>
    %3 = tpu.matmul %0, %2, %cst {dimension_numbers = #tpu.dot_dimension_numbers<[1], [0], [0], [1], [0, 0, 1, 1], [], []>} : vector<16x1024xbf16>, vector<1024x512xbf16>, vector<16x512xf32> -> vector<16x512xf32>
    %c0_4 = arith.constant 0 : index
    %c0_5 = arith.constant 0 : index
    %4 = vector.load %arg3[%c0_4, %c0_5] : memref<1x512xf32, #tpu.memory_space<vmem>>, vector<1x512xf32>
    %5 = vector.broadcast %4 : vector<1x512xf32> to vector<16x512xf32>
    %6 = arith.addf %3, %5 : vector<16x512xf32>
    %cst_6 = arith.constant 0.000000e+00 : f32
    %7 = vector.broadcast %cst_6 : f32 to vector<16x512xf32>
    %8 = arith.maximumf %6, %7 : vector<16x512xf32>
    %c0_7 = arith.constant 0 : index
    %c0_8 = arith.constant 0 : index
    %9 = vector.load %arg4[%c0_7, %c0_8] : memref<1024x512xbf16, #tpu.memory_space<vmem>>, vector<1024x512xbf16>
    %cst_9 = arith.constant dense<0.000000e+00> : vector<16x512xf32>
    %10 = tpu.matmul %1, %9, %cst_9 {dimension_numbers = #tpu.dot_dimension_numbers<[1], [0], [0], [1], [0, 0, 1, 1], [], []>} : vector<16x1024xbf16>, vector<1024x512xbf16>, vector<16x512xf32> -> vector<16x512xf32>
    %c0_10 = arith.constant 0 : index
    %c0_11 = arith.constant 0 : index
    %11 = vector.load %arg5[%c0_10, %c0_11] : memref<1x512xf32, #tpu.memory_space<vmem>>, vector<1x512xf32>
    %12 = vector.broadcast %11 : vector<1x512xf32> to vector<16x512xf32>
    %13 = arith.addf %10, %12 : vector<16x512xf32>
    %cst_12 = arith.constant 0.000000e+00 : f32
    %14 = vector.broadcast %cst_12 : f32 to vector<16x512xf32>
    %15 = arith.maximumf %13, %14 : vector<16x512xf32>
    %c0_13 = arith.constant 0 : index
    %c0_14 = arith.constant 0 : index
    %16 = vector.load %arg6[%c0_13, %c0_14] : memref<512x1xf32, #tpu.memory_space<vmem>>, vector<512x1xf32>
    %cst_15 = arith.constant dense<0.000000e+00> : vector<16x1xf32>
    %17 = tpu.matmul %8, %16, %cst_15 {dimension_numbers = #tpu.dot_dimension_numbers<[1], [0], [0], [1], [0, 0, 1, 1], [], []>} : vector<16x512xf32>, vector<512x1xf32>, vector<16x1xf32> -> vector<16x1xf32>
    %c0_16 = arith.constant 0 : index
    %c0_17 = arith.constant 0 : index
    %18 = vector.load %arg7[%c0_16, %c0_17] : memref<512x1xf32, #tpu.memory_space<vmem>>, vector<512x1xf32>
    %cst_18 = arith.constant dense<0.000000e+00> : vector<16x1xf32>
    %19 = tpu.matmul %15, %18, %cst_18 {dimension_numbers = #tpu.dot_dimension_numbers<[1], [0], [0], [1], [0, 0, 1, 1], [], []>} : vector<16x512xf32>, vector<512x1xf32>, vector<16x1xf32> -> vector<16x1xf32>
    %20 = arith.addf %17, %19 : vector<16x1xf32>
    %c0_19 = arith.constant 0 : index
    %c0_20 = arith.constant 0 : index
    %21 = vector.load %arg8[%c0_19, %c0_20] : memref<1x1xf32, #tpu.memory_space<vmem>>, vector<1x1xf32>
    %22 = vector.broadcast %21 : vector<1x1xf32> to vector<16x1xf32>
    %23 = arith.addf %20, %22 : vector<16x1xf32>
    %24 = arith.negf %23 : vector<16x1xf32>
    %25 = math.exp %24 : vector<16x1xf32>
    %cst_21 = arith.constant 1.000000e+00 : f32
    %26 = vector.broadcast %cst_21 : f32 to vector<16x1xf32>
    %27 = arith.addf %26, %25 : vector<16x1xf32>
    %28 = arith.divf %26, %27 : vector<16x1xf32>
    %c0_22 = arith.constant 0 : index
    %c0_23 = arith.constant 0 : index
    %29 = vector.load %arg9[%c0_22, %c0_23] : memref<16x1xf32, #tpu.memory_space<vmem>>, vector<16x1xf32>
    tpu.vector_store %arg9[%c0_22, %c0_23], %28 {strides = array<i32>} : memref<16x1xf32, #tpu.memory_space<vmem>>, vector<16x1xf32>,
    return
  }
  func.func @transform_0(%arg0: i32) -> (i32, i32) {
    %c0_i32 = arith.constant 0 : i32
    %c0_i32_0 = arith.constant 0 : i32
    return %arg0, %c0_i32 : i32, i32
  }
  func.func @transform_1(%arg0: i32) -> (i32, i32) {
    %c0_i32 = arith.constant 0 : i32
    %c0_i32_0 = arith.constant 0 : i32
    %c0_i32_1 = arith.constant 0 : i32
    return %c0_i32, %c0_i32_0 : i32, i32
  }
  func.func @transform_2(%arg0: i32) -> (i32, i32) {
    %c0_i32 = arith.constant 0 : i32
    %c0_i32_0 = arith.constant 0 : i32
    %c0_i32_1 = arith.constant 0 : i32
    return %c0_i32, %c0_i32_0 : i32, i32
  }
  func.func @transform_3(%arg0: i32) -> (i32, i32) {
    %c0_i32 = arith.constant 0 : i32
    %c0_i32_0 = arith.constant 0 : i32
    %c0_i32_1 = arith.constant 0 : i32
    return %c0_i32, %c0_i32_0 : i32, i32
  }
  func.func @transform_4(%arg0: i32) -> (i32, i32) {
    %c0_i32 = arith.constant 0 : i32
    %c0_i32_0 = arith.constant 0 : i32
    %c0_i32_1 = arith.constant 0 : i32
    return %c0_i32, %c0_i32_0 : i32, i32
  }
  func.func @transform_5(%arg0: i32) -> (i32, i32) {
    %c0_i32 = arith.constant 0 : i32
    %c0_i32_0 = arith.constant 0 : i32
    %c0_i32_1 = arith.constant 0 : i32
    return %c0_i32, %c0_i32_0 : i32, i32
  }
  func.func @transform_6(%arg0: i32) -> (i32, i32) {
    %c0_i32 = arith.constant 0 : i32
    %c0_i32_0 = arith.constant 0 : i32
    %c0_i32_1 = arith.constant 0 : i32
    return %c0_i32, %c0_i32_0 : i32, i32
  }
  func.func @transform_7(%arg0: i32) -> (i32, i32) {
    %c0_i32 = arith.constant 0 : i32
    %c0_i32_0 = arith.constant 0 : i32
    %c0_i32_1 = arith.constant 0 : i32
    return %c0_i32, %c0_i32_0 : i32, i32
  }
  func.func @transform_8(%arg0: i32) -> (i32, i32) {
    %c0_i32 = arith.constant 0 : i32
    %c0_i32_0 = arith.constant 0 : i32
    return %arg0, %c0_i32 : i32, i32
  }
}

</mosaic_0001>

<llo_original>
// kernel: tpu_custom_call.1
$region0: #{tpu_custom_call.1}
  #allocation0 [shape = 'u32[]', space=smem, size = 0x4, offset = 0x4, fixed_abs, tag = 'smem constant byte address 0x4 - core index']
  #allocation1 [shape = 'u32[144,128]{1,0:T(1,128)}', space=vmem, size = 0x12000, scoped, tag = 'internal scratch']
  #allocation2 [shape = 'f32[1,1]{1,0:T(1,128)S(1)}', space=vmem, size = 0x200, scoped, tag = 'scoped memory for tpu_custom_call.1']
  %s0 = inlined_call_operand.vmem [shape: bf16[16,2048], index: 0, kind: input, shape index: {}]
  %s1 = inlined_call_operand.hbm [shape: bf16[1024,512], index: 1, kind: input, shape index: {}]
  %s2 = inlined_call_operand.vmem [shape: f32[1,512], index: 2, kind: input, shape index: {}]
  %s3 = inlined_call_operand.hbm [shape: bf16[1024,512], index: 3, kind: input, shape index: {}]
  %s4 = inlined_call_operand.vmem [shape: f32[1,512], index: 4, kind: input, shape index: {}]
  %s5 = inlined_call_operand.vmem [shape: f32[512,1], index: 5, kind: input, shape index: {}]
  %s6 = inlined_call_operand.vmem [shape: f32[512,1], index: 6, kind: input, shape index: {}]
  %s7 = inlined_call_operand.<no memory space> [shape: f32[1,1], index: 7, kind: input, shape index: {}]
  %s8 = inlined_call_operand.vmem [shape: f32[16,1], index: 8, kind: output, shape index: {}]
  %s9 = sld [smem:[#allocation0]]
  $region50: #{tpu_custom_call.1} parent=0
    _
  %s11 = ssub.s32 1, %s9
  %s12 = scalar_select 0, %s11, %s9
  %v13 = vstv %s7
  %14 = vst [vmem:[#allocation2] sm:$0x1] %v13
  $region1: #{tpu_custom_call.1} parent=0
    #allocation3 [shape = 'u8[1048576]{0}', space=vmem, size = 0x100000, scoped, tag = 'input window, operand 1, single buffered']
    #allocation4 [shape = 's32[1]{0}', space=sflag, size = 0x4, scoped, tag = 'scoped memory for tpu_custom_call.1']
    #allocation5 [shape = 'u8[1048576]{0}', space=vmem, size = 0x100000, scoped, tag = 'input window, operand 3, single buffered']
    #allocation6 [shape = 's32[1]{0}', space=sflag, size = 0x4, scoped, tag = 'scoped memory for tpu_custom_call.1']
    %15 = vsyncpa [#allocation4], 0
    %16 = vsyncpa [#allocation6], 0
    // Predicated region
    $region2: #{tpu_custom_call.1} parent=1 // pred_check
      _
    $region3: #{tpu_custom_call.1} parent=1 // pred_check_branch
      %18 = sbr.rel (0) target = $region5
    $region4: #{tpu_custom_call.1} parent=1 // pred_region
      _
    $region5: #{tpu_custom_call.1} parent=1 // pred_fallthru
      _
    // Predicated region
    $region6: #{tpu_custom_call.1} parent=1 // pred_check
      _
    $region7: #{tpu_custom_call.1} parent=1 // pred_check_branch
      %20 = sbr.rel (0) target = $region9
    $region8: #{tpu_custom_call.1} parent=1 // pred_region
      %s22 = ssub.s32 32768, 32768
      %23 = vsyncadd [#allocation4], %s22
      %s24 = sshll.u32 [#allocation3], 4
      %s25 = int_to_ptr.vmem [resolvable:$true] %s24
      %30 = dma.hbm_to_vmem [thread:$0]  %s1, 32768, %s25, [#allocation4], 256, 256, 16
    $region9: #{tpu_custom_call.1} parent=1 // pred_fallthru
      _
    // Predicated region
    $region10: #{tpu_custom_call.1} parent=1 // pred_check
      _
    $region11: #{tpu_custom_call.1} parent=1 // pred_check_branch
      %32 = sbr.rel (0) target = $region13
    $region12: #{tpu_custom_call.1} parent=1 // pred_region
      _
    $region13: #{tpu_custom_call.1} parent=1 // pred_fallthru
      _
    // Predicated region
    $region14: #{tpu_custom_call.1} parent=1 // pred_check
      _
    $region15: #{tpu_custom_call.1} parent=1 // pred_check_branch
      %34 = sbr.rel (0) target = $region17
    $region16: #{tpu_custom_call.1} parent=1 // pred_region
      %s36 = ssub.s32 32768, 32768
      %37 = vsyncadd [#allocation6], %s36
      %s38 = sshll.u32 [#allocation5], 4
      %s39 = int_to_ptr.vmem [resolvable:$true] %s38
      %44 = dma.hbm_to_vmem [thread:$0]  %s3, 32768, %s39, [#allocation6], 256, 256, 16
    $region17: #{tpu_custom_call.1} parent=1 // pred_fallthru
      _
    // Predicated region
    $region18: #{tpu_custom_call.1} parent=1 // pred_check
      _
    $region19: #{tpu_custom_call.1} parent=1 // pred_check_branch
      %46 = sbr.rel (0) target = $region21
    $region20: #{tpu_custom_call.1} parent=1 // pred_region
      _
    $region21: #{tpu_custom_call.1} parent=1 // pred_fallthru
      _
    // Predicated region
    $region22: #{tpu_custom_call.1} parent=1 // pred_check
      _
    $region23: #{tpu_custom_call.1} parent=1 // pred_check_branch
      %48 = sbr.rel (0) target = $region25
    $region24: #{tpu_custom_call.1} parent=1 // pred_region
      _
    $region25: #{tpu_custom_call.1} parent=1 // pred_fallthru
      _
    // Predicated region
    $region26: #{tpu_custom_call.1} parent=1 // pred_check
      _
    $region27: #{tpu_custom_call.1} parent=1 // pred_check_branch
      %50 = sbr.rel (0) target = $region29
    $region28: #{tpu_custom_call.1} parent=1 // pred_region
      _
    $region29: #{tpu_custom_call.1} parent=1 // pred_fallthru
      _
    // Predicated region
    $region30: #{tpu_custom_call.1} parent=1 // pred_check
      _
    $region31: #{tpu_custom_call.1} parent=1 // pred_check_branch
      %52 = sbr.rel (0) target = $region33
    $region32: #{tpu_custom_call.1} parent=1 // pred_region
      _
    $region33: #{tpu_custom_call.1} parent=1 // pred_fallthru
      _
    // Predicated region
    $region34: #{tpu_custom_call.1} parent=1 // pred_check
      _
    $region35: #{tpu_custom_call.1} parent=1 // pred_check_branch
      %54 = sbr.rel (0) target = $region37
    $region36: #{tpu_custom_call.1} parent=1 // pred_region
      %55 = dma.done [#allocation4], 32768
    $region37: #{tpu_custom_call.1} parent=1 // pred_fallthru
      _
    // Predicated region
    $region38: #{tpu_custom_call.1} parent=1 // pred_check
      _
    $region39: #{tpu_custom_call.1} parent=1 // pred_check_branch
      %57 = sbr.rel (0) target = $region41
    $region40: #{tpu_custom_call.1} parent=1 // pred_region
      %58 = dma.done [#allocation6], 32768
    $region41: #{tpu_custom_call.1} parent=1 // pred_fallthru
      _
    %v59 = vld [vmem:[%s0] sm:$0xff]
    %v60 = vld [vmem:[%s0 + $0x8] sm:$0xff]
    %v61 = vld [vmem:[%s0 + $0x10] sm:$0xff]
    %v62 = vld [vmem:[%s0 + $0x18] sm:$0xff]
    %v63 = vld [vmem:[%s0 + $0x40] sm:$0xff]
    %v64 = vld [vmem:[%s0 + $0x48] sm:$0xff]
    %v65 = vld [vmem:[%s0 + $0x50] sm:$0xff]
    %v66 = vld [vmem:[%s0 + $0x58] sm:$0xff]
    %v67 = vld [vmem:[%s0 + $0x20] sm:$0xff]
    %v68 = vld [vmem:[%s0 + $0x28] sm:$0xff]
    %v69 = vld [vmem:[%s0 + $0x30] sm:$0xff]
    %v70 = vld [vmem:[%s0 + $0x38] sm:$0xff]
    %v71 = vld [vmem:[%s0 + $0x60] sm:$0xff]
    %v72 = vld [vmem:[%s0 + $0x68] sm:$0xff]
    %v73 = vld [vmem:[%s0 + $0x70] sm:$0xff]
    %v74 = vld [vmem:[%s0 + $0x78] sm:$0xff]
    %v75 = vld [vmem:[#allocation3] sm:$0xff]
    %v76 = vld [vmem:[#allocation3 + $0x8] sm:$0xff]
    %v77 = vld [vmem:[#allocation3 + $0x10] sm:$0xff]
    %v78 = vld [vmem:[#allocation3 + $0x18] sm:$0xff]
    %v79 = vld [vmem:[#allocation3 + $0x20] sm:$0xff]
    %v80 = vld [vmem:[#allocation3 + $0x28] sm:$0xff]
    %v81 = vld [vmem:[#allocation3 + $0x30] sm:$0xff]
    %v82 = vld [vmem:[#allocation3 + $0x38] sm:$0xff]
    %v83 = vld [vmem:[#allocation3 + $0x40] sm:$0xff]
    %v84 = vld [vmem:[#allocation3 + $0x48] sm:$0xff]
    %v85 = vld [vmem:[#allocation3 + $0x50] sm:$0xff]
    %v86 = vld [vmem:[#allocation3 + $0x58] sm:$0xff]
    %v87 = vld [vmem:[#allocation3 + $0x60] sm:$0xff]
    %v88 = vld [vmem:[#allocation3 + $0x68] sm:$0xff]
    %v89 = vld [vmem:[#allocation3 + $0x70] sm:$0xff]
    %v90 = vld [vmem:[#allocation3 + $0x78] sm:$0xff]
    %v91 = vld [vmem:[#allocation3 + $0x80] sm:$0xff]
    %v92 = vld [vmem:[#allocation3 + $0x88] sm:$0xff]
    %v93 = vld [vmem:[#allocation3 + $0x90] sm:$0xff]
    %v94 = vld [vmem:[#allocation3 + $0x98] sm:$0xff]
    %v95 = vld [vmem:[#allocation3 + $0xa0] sm:$0xff]
    %v96 = vld [vmem:[#allocation3 + $0xa8] sm:$0xff]
    %v97 = vld [vmem:[#allocation3 + $0xb0] sm:$0xff]
    %v98 = vld [vmem:[#allocation3 + $0xb8] sm:$0xff]
    %v99 = vld [vmem:[#allocation3 + $0xc0] sm:$0xff]
    %v100 = vld [vmem:[#allocation3 + $0xc8] sm:$0xff]
    %v101 = vld [vmem:[#allocation3 + $0xd0] sm:$0xff]
    %v102 = vld [vmem:[#allocation3 + $0xd8] sm:$0xff]
    %v103 = vld [vmem:[#allocation3 + $0xe0] sm:$0xff]
    %v104 = vld [vmem:[#allocation3 + $0xe8] sm:$0xff]
    %v105 = vld [vmem:[#allocation3 + $0xf0] sm:$0xff]
    %v106 = vld [vmem:[#allocation3 + $0xf8] sm:$0xff]
    %v107 = vld [vmem:[#allocation3 + $0x100] sm:$0xff]
    %v108 = vld [vmem:[#allocation3 + $0x108] sm:$0xff]
    %v109 = vld [vmem:[#allocation3 + $0x110] sm:$0xff]
    %v110 = vld [vmem:[#allocation3 + $0x118] sm:$0xff]
    %v111 = vld [vmem:[#allocation3 + $0x120] sm:$0xff]
    %v112 = vld [vmem:[#allocation3 + $0x128] sm:$0xff]
    %v113 = vld [vmem:[#allocation3 + $0x130] sm:$0xff]
    %v114 = vld [vmem:[#allocation3 + $0x138] sm:$0xff]
    %v115 = vld [vmem:[#allocation3 + $0x140] sm:$0xff]
    %v116 = vld [vmem:[#allocation3 + $0x148] sm:$0xff]
    %v117 = vld [vmem:[#allocation3 + $0x150] sm:$0xff]
    %v118 = vld [vmem:[#allocation3 + $0x158] sm:$0xff]
    %v119 = vld [vmem:[#allocation3 + $0x160] sm:$0xff]
    %v120 = vld [vmem:[#allocation3 + $0x168] sm:$0xff]
    %v121 = vld [vmem:[#allocation3 + $0x170] sm:$0xff]
    %v122 = vld [vmem:[#allocation3 + $0x178] sm:$0xff]
    %v123 = vld [vmem:[#allocation3 + $0x180] sm:$0xff]
    %v124 = vld [vmem:[#allocation3 + $0x188] sm:$0xff]
    %v125 = vld [vmem:[#allocation3 + $0x190] sm:$0xff]
    %v126 = vld [vmem:[#allocation3 + $0x198] sm:$0xff]
    %v127 = vld [vmem:[#allocation3 + $0x1a0] sm:$0xff]
    %v128 = vld [vmem:[#allocation3 + $0x1a8] sm:$0xff]
    %v129 = vld [vmem:[#allocation3 + $0x1b0] sm:$0xff]
    %v130 = vld [vmem:[#allocation3 + $0x1b8] sm:$0xff]
    %v131 = vld [vmem:[#allocation3 + $0x1c0] sm:$0xff]
    %v132 = vld [vmem:[#allocation3 + $0x1c8] sm:$0xff]
    %v133 = vld [vmem:[#allocation3 + $0x1d0] sm:$0xff]
    %v134 = vld [vmem:[#allocation3 + $0x1d8] sm:$0xff]
    %v135 = vld [vmem:[#allocation3 + $0x1e0] sm:$0xff]
    %v136 = vld [vmem:[#allocation3 + $0x1e8] sm:$0xff]
    %v137 = vld [vmem:[#allocation3 + $0x1f0] sm:$0xff]
    %v138 = vld [vmem:[#allocation3 + $0x1f8] sm:$0xff]
    %v139 = vld [vmem:[#allocation3 + $0x200] sm:$0xff]
    %v140 = vld [vmem:[#allocation3 + $0x208] sm:$0xff]
    %v141 = vld [vmem:[#allocation3 + $0x210] sm:$0xff]
    %v142 = vld [vmem:[#allocation3 + $0x218] sm:$0xff]
    %v143 = vld [vmem:[#allocation3 + $0x220] sm:$0xff]
    %v144 = vld [vmem:[#allocation3 + $0x228] sm:$0xff]
    %v145 = vld [vmem:[#allocation3 + $0x230] sm:$0xff]
    %v146 = vld [vmem:[#allocation3 + $0x238] sm:$0xff]
    %v147 = vld [vmem:[#allocation3 + $0x240] sm:$0xff]
    %v148 = vld [vmem:[#allocation3 + $0x248] sm:$0xff]
    %v149 = vld [vmem:[#allocation3 + $0x250] sm:$0xff]
    %v150 = vld [vmem:[#allocation3 + $0x258] sm:$0xff]
    %v151 = vld [vmem:[#allocation3 + $0x260] sm:$0xff]
    %v152 = vld [vmem:[#allocation3 + $0x268] sm:$0xff]
    %v153 = vld [vmem:[#allocation3 + $0x270] sm:$0xff]
    %v154 = vld [vmem:[#allocation3 + $0x278] sm:$0xff]
    %v155 = vld [vmem:[#allocation3 + $0x280] sm:$0xff]
    %v156 = vld [vmem:[#allocation3 + $0x288] sm:$0xff]
    %v157 = vld [vmem:[#allocation3 + $0x290] sm:$0xff]
    %v158 = vld [vmem:[#allocation3 + $0x298] sm:$0xff]
    %v159 = vld [vmem:[#allocation3 + $0x2a0] sm:$0xff]
    %v160 = vld [vmem:[#allocation3 + $0x2a8] sm:$0xff]
    %v161 = vld [vmem:[#allocation3 + $0x2b0] sm:$0xff]
    %v162 = vld [vmem:[#allocation3 + $0x2b8] sm:$0xff]
    %v163 = vld [vmem:[#allocation3 + $0x2c0] sm:$0xff]
    %v164 = vld [vmem:[#allocation3 + $0x2c8] sm:$0xff]
    %v165 = vld [vmem:[#allocation3 + $0x2d0] sm:$0xff]
    %v166 = vld [vmem:[#allocation3 + $0x2d8] sm:$0xff]
    %v167 = vld [vmem:[#allocation3 + $0x2e0] sm:$0xff]
    %v168 = vld [vmem:[#allocation3 + $0x2e8] sm:$0xff]
    %v169 = vld [vmem:[#allocation3 + $0x2f0] sm:$0xff]
    %v170 = vld [vmem:[#allocation3 + $0x2f8] sm:$0xff]
    %v171 = vld [vmem:[#allocation3 + $0x300] sm:$0xff]
    %v172 = vld [vmem:[#allocation3 + $0x308] sm:$0xff]
    %v173 = vld [vmem:[#allocation3 + $0x310] sm:$0xff]
    %v174 = vld [vmem:[#allocation3 + $0x318] sm:$0xff]
    %v175 = vld [vmem:[#allocation3 + $0x320] sm:$0xff]
    %v176 = vld [vmem:[#allocation3 + $0x328] sm:$0xff]
    %v177 = vld [vmem:[#allocation3 + $0x330] sm:$0xff]
    %v178 = vld [vmem:[#allocation3 + $0x338] sm:$0xff]
    %v179 = vld [vmem:[#allocation3 + $0x340] sm:$0xff]
    %v180 = vld [vmem:[#allocation3 + $0x348] sm:$0xff]
    %v181 = vld [vmem:[#allocation3 + $0x350] sm:$0xff]
    %v182 = vld [vmem:[#allocation3 + $0x358] sm:$0xff]
    %v183 = vld [vmem:[#allocation3 + $0x360] sm:$0xff]
    %v184 = vld [vmem:[#allocation3 + $0x368] sm:$0xff]
    %v185 = vld [vmem:[#allocation3 + $0x370] sm:$0xff]
    %v186 = vld [vmem:[#allocation3 + $0x378] sm:$0xff]
    %v187 = vld [vmem:[#allocation3 + $0x380] sm:$0xff]
    %v188 = vld [vmem:[#allocation3 + $0x388] sm:$0xff]
    %v189 = vld [vmem:[#allocation3 + $0x390] sm:$0xff]
    %v190 = vld [vmem:[#allocation3 + $0x398] sm:$0xff]
    %v191 = vld [vmem:[#allocation3 + $0x3a0] sm:$0xff]
    %v192 = vld [vmem:[#allocation3 + $0x3a8] sm:$0xff]
    %v193 = vld [vmem:[#allocation3 + $0x3b0] sm:$0xff]
    %v194 = vld [vmem:[#allocation3 + $0x3b8] sm:$0xff]
    %v195 = vld [vmem:[#allocation3 + $0x3c0] sm:$0xff]
    %v196 = vld [vmem:[#allocation3 + $0x3c8] sm:$0xff]
    %v197 = vld [vmem:[#allocation3 + $0x3d0] sm:$0xff]
    %v198 = vld [vmem:[#allocation3 + $0x3d8] sm:$0xff]
    %v199 = vld [vmem:[#allocation3 + $0x3e0] sm:$0xff]
    %v200 = vld [vmem:[#allocation3 + $0x3e8] sm:$0xff]
    %v201 = vld [vmem:[#allocation3 + $0x3f0] sm:$0xff]
    %v202 = vld [vmem:[#allocation3 + $0x3f8] sm:$0xff]
    %v203 = vld [vmem:[#allocation3 + $0x400] sm:$0xff]
    %v204 = vld [vmem:[#allocation3 + $0x408] sm:$0xff]
    %v205 = vld [vmem:[#allocation3 + $0x410] sm:$0xff]
    %v206 = vld [vmem:[#allocation3 + $0x418] sm:$0xff]
    %v207 = vld [vmem:[#allocation3 + $0x420] sm:$0xff]
    %v208 = vld [vmem:[#allocation3 + $0x428] sm:$0xff]
    %v209 = vld [vmem:[#allocation3 + $0x430] sm:$0xff]
    %v210 = vld [vmem:[#allocation3 + $0x438] sm:$0xff]
    %v211 = vld [vmem:[#allocation3 + $0x440] sm:$0xff]
    %v212 = vld [vmem:[#allocation3 + $0x448] sm:$0xff]
    %v213 = vld [vmem:[#allocation3 + $0x450] sm:$0xff]
    %v214 = vld [vmem:[#allocation3 + $0x458] sm:$0xff]
    %v215 = vld [vmem:[#allocation3 + $0x460] sm:$0xff]
    %v216 = vld [vmem:[#allocation3 + $0x468] sm:$0xff]
    %v217 = vld [vmem:[#allocation3 + $0x470] sm:$0xff]
    %v218 = vld [vmem:[#allocation3 + $0x478] sm:$0xff]
    %v219 = vld [vmem:[#allocation3 + $0x480] sm:$0xff]
    %v220 = vld [vmem:[#allocation3 + $0x488] sm:$0xff]
    %v221 = vld [vmem:[#allocation3 + $0x490] sm:$0xff]
    %v222 = vld [vmem:[#allocation3 + $0x498] sm:$0xff]
    %v223 = vld [vmem:[#allocation3 + $0x4a0] sm:$0xff]
    %v224 = vld [vmem:[#allocation3 + $0x4a8] sm:$0xff]
    %v225 = vld [vmem:[#allocation3 + $0x4b0] sm:$0xff]
    %v226 = vld [vmem:[#allocation3 + $0x4b8] sm:$0xff]
    %v227 = vld [vmem:[#allocation3 + $0x4c0] sm:$0xff]
    %v228 = vld [vmem:[#allocation3 + $0x4c8] sm:$0xff]
    %v229 = vld [vmem:[#allocation3 + $0x4d0] sm:$0xff]
    %v230 = vld [vmem:[#allocation3 + $0x4d8] sm:$0xff]
    %v231 = vld [vmem:[#allocation3 + $0x4e0] sm:$0xff]
    %v232 = vld [vmem:[#allocation3 + $0x4e8] sm:$0xff]
    %v233 = vld [vmem:[#allocation3 + $0x4f0] sm:$0xff]
    %v234 = vld [vmem:[#allocation3 + $0x4f8] sm:$0xff]
    %v235 = vld [vmem:[#allocation3 + $0x500] sm:$0xff]
    %v236 = vld [vmem:[#allocation3 + $0x508] sm:$0xff]
    %v237 = vld [vmem:[#allocation3 + $0x510] sm:$0xff]
    %v238 = vld [vmem:[#allocation3 + $0x518] sm:$0xff]
    %v239 = vld [vmem:[#allocation3 + $0x520] sm:$0xff]
    %v240 = vld [vmem:[#allocation3 + $0x528] sm:$0xff]
    %v241 = vld [vmem:[#allocation3 + $0x530] sm:$0xff]
    %v242 = vld [vmem:[#allocation3 + $0x538] sm:$0xff]
    %v243 = vld [vmem:[#allocation3 + $0x540] sm:$0xff]
    %v244 = vld [vmem:[#allocation3 + $0x548] sm:$0xff]
    %v245 = vld [vmem:[#allocation3 + $0x550] sm:$0xff]
    %v246 = vld [vmem:[#allocation3 + $0x558] sm:$0xff]
    %v247 = vld [vmem:[#allocation3 + $0x560] sm:$0xff]
    %v248 = vld [vmem:[#allocation3 + $0x568] sm:$0xff]
    %v249 = vld [vmem:[#allocation3 + $0x570] sm:$0xff]
    %v250 = vld [vmem:[#allocation3 + $0x578] sm:$0xff]
    %v251 = vld [vmem:[#allocation3 + $0x580] sm:$0xff]
    %v252 = vld [vmem:[#allocation3 + $0x588] sm:$0xff]
    %v253 = vld [vmem:[#allocation3 + $0x590] sm:$0xff]
    %v254 = vld [vmem:[#allocation3 + $0x598] sm:$0xff]
    %v255 = vld [vmem:[#allocation3 + $0x5a0] sm:$0xff]
    %v256 = vld [vmem:[#allocation3 + $0x5a8] sm:$0xff]
    %v257 = vld [vmem:[#allocation3 + $0x5b0] sm:$0xff]
    %v258 = vld [vmem:[#allocation3 + $0x5b8] sm:$0xff]
    %v259 = vld [vmem:[#allocation3 + $0x5c0] sm:$0xff]
    %v260 = vld [vmem:[#allocation3 + $0x5c8] sm:$0xff]
    %v261 = vld [vmem:[#allocation3 + $0x5d0] sm:$0xff]
    %v262 = vld [vmem:[#allocation3 + $0x5d8] sm:$0xff]
    %v263 = vld [vmem:[#allocation3 + $0x5e0] sm:$0xff]
    %v264 = vld [vmem:[#allocation3 + $0x5e8] sm:$0xff]
    %v265 = vld [vmem:[#allocation3 + $0x5f0] sm:$0xff]
    %v266 = vld [vmem:[#allocation3 + $0x5f8] sm:$0xff]
    %v267 = vld [vmem:[#allocation3 + $0x600] sm:$0xff]
    %v268 = vld [vmem:[#allocation3 + $0x608] sm:$0xff]
    %v269 = vld [vmem:[#allocation3 + $0x610] sm:$0xff]
    %v270 = vld [vmem:[#allocation3 + $0x618] sm:$0xff]
    %v271 = vld [vmem:[#allocation3 + $0x620] sm:$0xff]
    %v272 = vld [vmem:[#allocation3 + $0x628] sm:$0xff]
    %v273 = vld [vmem:[#allocation3 + $0x630] sm:$0xff]
    %v274 = vld [vmem:[#allocation3 + $0x638] sm:$0xff]
    %v275 = vld [vmem:[#allocation3 + $0x640] sm:$0xff]
    %v276 = vld [vmem:[#allocation3 + $0x648] sm:$0xff]
    %v277 = vld [vmem:[#allocation3 + $0x650] sm:$0xff]
    %v278 = vld [vmem:[#allocation3 + $0x658] sm:$0xff]
    %v279 = vld [vmem:[#allocation3 + $0x660] sm:$0xff]
    %v280 = vld [vmem:[#allocation3 + $0x668] sm:$0xff]
    %v281 = vld [vmem:[#allocation3 + $0x670] sm:$0xff]
    %v282 = vld [vmem:[#allocation3 + $0x678] sm:$0xff]
    %v283 = vld [vmem:[#allocation3 + $0x680] sm:$0xff]
    %v284 = vld [vmem:[#allocation3 + $0x688] sm:$0xff]
    %v285 = vld [vmem:[#allocation3 + $0x690] sm:$0xff]
    %v286 = vld [vmem:[#allocation3 + $0x698] sm:$0xff]
    %v287 = vld [vmem:[#allocation3 + $0x6a0] sm:$0xff]
    %v288 = vld [vmem:[#allocation3 + $0x6a8] sm:$0xff]
    %v289 = vld [vmem:[#allocation3 + $0x6b0] sm:$0xff]
    %v290 = vld [vmem:[#allocation3 + $0x6b8] sm:$0xff]
    %v291 = vld [vmem:[#allocation3 + $0x6c0] sm:$0xff]
    %v292 = vld [vmem:[#allocation3 + $0x6c8] sm:$0xff]
    %v293 = vld [vmem:[#allocation3 + $0x6d0] sm:$0xff]
    %v294 = vld [vmem:[#allocation3 + $0x6d8] sm:$0xff]
    %v295 = vld [vmem:[#allocation3 + $0x6e0] sm:$0xff]
    %v296 = vld [vmem:[#allocation3 + $0x6e8] sm:$0xff]
    %v297 = vld [vmem:[#allocation3 + $0x6f0] sm:$0xff]
    %v298 = vld [vmem:[#allocation3 + $0x6f8] sm:$0xff]
    %v299 = vld [vmem:[#allocation3 + $0x700] sm:$0xff]
    %v300 = vld [vmem:[#allocation3 + $0x708] sm:$0xff]
    %v301 = vld [vmem:[#allocation3 + $0x710] sm:$0xff]
    %v302 = vld [vmem:[#allocation3 + $0x718] sm:$0xff]
    %v303 = vld [vmem:[#allocation3 + $0x720] sm:$0xff]
    %v304 = vld [vmem:[#allocation3 + $0x728] sm:$0xff]
    %v305 = vld [vmem:[#allocation3 + $0x730] sm:$0xff]
    %v306 = vld [vmem:[#allocation3 + $0x738] sm:$0xff]
    %v307 = vld [vmem:[#allocation3 + $0x740] sm:$0xff]
    %v308 = vld [vmem:[#allocation3 + $0x748] sm:$0xff]
    %v309 = vld [vmem:[#allocation3 + $0x750] sm:$0xff]
    %v310 = vld [vmem:[#allocation3 + $0x758] sm:$0xff]
    %v311 = vld [vmem:[#allocation3 + $0x760] sm:$0xff]
    %v312 = vld [vmem:[#allocation3 + $0x768] sm:$0xff]
    %v313 = vld [vmem:[#allocation3 + $0x770] sm:$0xff]
    %v314 = vld [vmem:[#allocation3 + $0x778] sm:$0xff]
    %v315 = vld [vmem:[#allocation3 + $0x780] sm:$0xff]
    %v316 = vld [vmem:[#allocation3 + $0x788] sm:$0xff]
    %v317 = vld [vmem:[#allocation3 + $0x790] sm:$0xff]
    %v318 = vld [vmem:[#allocation3 + $0x798] sm:$0xff]
    %v319 = vld [vmem:[#allocation3 + $0x7a0] sm:$0xff]
    %v320 = vld [vmem:[#allocation3 + $0x7a8] sm:$0xff]
    %v321 = vld [vmem:[#allocation3 + $0x7b0] sm:$0xff]
    %v322 = vld [vmem:[#allocation3 + $0x7b8] sm:$0xff]
    %v323 = vld [vmem:[#allocation3 + $0x7c0] sm:$0xff]
    %v324 = vld [vmem:[#allocation3 + $0x7c8] sm:$0xff]
    %v325 = vld [vmem:[#allocation3 + $0x7d0] sm:$0xff]
    %v326 = vld [vmem:[#allocation3 + $0x7d8] sm:$0xff]
    %v327 = vld [vmem:[#allocation3 + $0x7e0] sm:$0xff]
    %v328 = vld [vmem:[#allocation3 + $0x7e8] sm:$0xff]
    %v329 = vld [vmem:[#allocation3 + $0x7f0] sm:$0xff]
    %v330 = vld [vmem:[#allocation3 + $0x7f8] sm:$0xff]
    %v331 = vld [vmem:[%s2] sm:$0xf]
    %v333 = vlaneseq
    %v334 = vshrl.u32 %v333, 7
    %v335 = vsub.s32 0, %v334
    %v336 = vrot.slane %v331, %v335
    %v337 = vlaneseq
    %v338 = vshrl.u32 %v337, 7
    %v339 = vsub.s32 1, %v338
    %v340 = vrot.slane %v331, %v339
    %v341 = vlaneseq
    %v342 = vshrl.u32 %v341, 7
    %v343 = vsub.s32 2, %v342
    %v344 = vrot.slane %v331, %v343
    %v345 = vlaneseq
    %v346 = vshrl.u32 %v345, 7
    %v347 = vsub.s32 3, %v346
    %v348 = vrot.slane %v331, %v347
    %v361 = vunpack.c.l.b16 %v59
    %v362 = vunpack.c.h.b16 %v59
    %v363 = vunpack.c.l.b16 %v60
    %v364 = vunpack.c.h.b16 %v60
    %v365 = vunpack.c.l.b16 %v61
    %v366 = vunpack.c.h.b16 %v61
    %v367 = vunpack.c.l.b16 %v62
    %v368 = vunpack.c.h.b16 %v62
    %v369 = vunpack.c.l.b16 %v63
    %v370 = vunpack.c.h.b16 %v63
    %v371 = vunpack.c.l.b16 %v64
    %v372 = vunpack.c.h.b16 %v64
    %v373 = vunpack.c.l.b16 %v65
    %v374 = vunpack.c.h.b16 %v65
    %v375 = vunpack.c.l.b16 %v66
    %v376 = vunpack.c.h.b16 %v66
    %v377 = vpack.c.b16 %v369, %v361
    %v378 = vpack.c.b16 %v370, %v362
    %v379 = vpack.c.b16 %v371, %v363
    %v380 = vpack.c.b16 %v372, %v364
    %v381 = vpack.c.b16 %v373, %v365
    %v382 = vpack.c.b16 %v374, %v366
    %v383 = vpack.c.b16 %v375, %v367
    %v384 = vpack.c.b16 %v376, %v368
    %v649 = vunpack.c.l.b16 %v75
    %v650 = vunpack.c.h.b16 %v75
    %v651 = vunpack.c.l.b16 %v76
    %v652 = vunpack.c.h.b16 %v76
    %v653 = vunpack.c.l.b16 %v77
    %v654 = vunpack.c.h.b16 %v77
    %v655 = vunpack.c.l.b16 %v78
    %v656 = vunpack.c.h.b16 %v78
    %v657 = vunpack.c.l.b16 %v79
    %v658 = vunpack.c.h.b16 %v79
    %v659 = vunpack.c.l.b16 %v80
    %v660 = vunpack.c.h.b16 %v80
    %v661 = vunpack.c.l.b16 %v81
    %v662 = vunpack.c.h.b16 %v81
    %v663 = vunpack.c.l.b16 %v82
    %v664 = vunpack.c.h.b16 %v82
    %v665 = vunpack.c.l.b16 %v83
    %v666 = vunpack.c.h.b16 %v83
    %v667 = vunpack.c.l.b16 %v84
    %v668 = vunpack.c.h.b16 %v84
    %v669 = vunpack.c.l.b16 %v85
    %v670 = vunpack.c.h.b16 %v85
    %v671 = vunpack.c.l.b16 %v86
    %v672 = vunpack.c.h.b16 %v86
    %v673 = vunpack.c.l.b16 %v87
    %v674 = vunpack.c.h.b16 %v87
    %v675 = vunpack.c.l.b16 %v88
    %v676 = vunpack.c.h.b16 %v88
    %v677 = vunpack.c.l.b16 %v89
    %v678 = vunpack.c.h.b16 %v89
    %v679 = vunpack.c.l.b16 %v90
    %v680 = vunpack.c.h.b16 %v90
    %v681 = vunpack.c.l.b16 %v91
    %v682 = vunpack.c.h.b16 %v91
    %v683 = vunpack.c.l.b16 %v92
    %v684 = vunpack.c.h.b16 %v92
    %v685 = vunpack.c.l.b16 %v93
    %v686 = vunpack.c.h.b16 %v93
    %v687 = vunpack.c.l.b16 %v94
    %v688 = vunpack.c.h.b16 %v94
    %v689 = vunpack.c.l.b16 %v95
    %v690 = vunpack.c.h.b16 %v95
    %v691 = vunpack.c.l.b16 %v96
    %v692 = vunpack.c.h.b16 %v96
    %v693 = vunpack.c.l.b16 %v97
    %v694 = vunpack.c.h.b16 %v97
    %v695 = vunpack.c.l.b16 %v98
    %v696 = vunpack.c.h.b16 %v98
    %v697 = vunpack.c.l.b16 %v99
    %v698 = vunpack.c.h.b16 %v99
    %v699 = vunpack.c.l.b16 %v100
    %v700 = vunpack.c.h.b16 %v100
    %v701 = vunpack.c.l.b16 %v101
    %v702 = vunpack.c.h.b16 %v101
    %v703 = vunpack.c.l.b16 %v102
    %v704 = vunpack.c.h.b16 %v102
    %v705 = vunpack.c.l.b16 %v103
    %v706 = vunpack.c.h.b16 %v103
    %v707 = vunpack.c.l.b16 %v104
    %v708 = vunpack.c.h.b16 %v104
    %v709 = vunpack.c.l.b16 %v105
    %v710 = vunpack.c.h.b16 %v105
    %v711 = vunpack.c.l.b16 %v106
    %v712 = vunpack.c.h.b16 %v106
    %v713 = vunpack.c.l.b16 %v107
    %v714 = vunpack.c.h.b16 %v107
    %v715 = vunpack.c.l.b16 %v108
    %v716 = vunpack.c.h.b16 %v108
    %v717 = vunpack.c.l.b16 %v109
    %v718 = vunpack.c.h.b16 %v109
    %v719 = vunpack.c.l.b16 %v110
    %v720 = vunpack.c.h.b16 %v110
    %v721 = vunpack.c.l.b16 %v111
    %v722 = vunpack.c.h.b16 %v111
    %v723 = vunpack.c.l.b16 %v112
    %v724 = vunpack.c.h.b16 %v112
    %v725 = vunpack.c.l.b16 %v113
    %v726 = vunpack.c.h.b16 %v113
    %v727 = vunpack.c.l.b16 %v114
    %v728 = vunpack.c.h.b16 %v114
    %v729 = vunpack.c.l.b16 %v115
    %v730 = vunpack.c.h.b16 %v115
    %v731 = vunpack.c.l.b16 %v116
    %v732 = vunpack.c.h.b16 %v116
    %v733 = vunpack.c.l.b16 %v117
    %v734 = vunpack.c.h.b16 %v117
    %v735 = vunpack.c.l.b16 %v118
    %v736 = vunpack.c.h.b16 %v118
    %v737 = vunpack.c.l.b16 %v119
    %v738 = vunpack.c.h.b16 %v119
    %v739 = vunpack.c.l.b16 %v120
    %v740 = vunpack.c.h.b16 %v120
    %v741 = vunpack.c.l.b16 %v121
    %v742 = vunpack.c.h.b16 %v121
    %v743 = vunpack.c.l.b16 %v122
    %v744 = vunpack.c.h.b16 %v122
    %v745 = vunpack.c.l.b16 %v123
    %v746 = vunpack.c.h.b16 %v123
    %v747 = vunpack.c.l.b16 %v124
    %v748 = vunpack.c.h.b16 %v124
    %v749 = vunpack.c.l.b16 %v125
    %v750 = vunpack.c.h.b16 %v125
    %v751 = vunpack.c.l.b16 %v126
    %v752 = vunpack.c.h.b16 %v126
    %v753 = vunpack.c.l.b16 %v127
    %v754 = vunpack.c.h.b16 %v127
    %v755 = vunpack.c.l.b16 %v128
    %v756 = vunpack.c.h.b16 %v128
    %v757 = vunpack.c.l.b16 %v129
    %v758 = vunpack.c.h.b16 %v129
    %v759 = vunpack.c.l.b16 %v130
    %v760 = vunpack.c.h.b16 %v130
    %v761 = vunpack.c.l.b16 %v131
    %v762 = vunpack.c.h.b16 %v131
    %v763 = vunpack.c.l.b16 %v132
    %v764 = vunpack.c.h.b16 %v132
    %v765 = vunpack.c.l.b16 %v133
    %v766 = vunpack.c.h.b16 %v133
    %v767 = vunpack.c.l.b16 %v134
    %v768 = vunpack.c.h.b16 %v134
    %v769 = vunpack.c.l.b16 %v135
    %v770 = vunpack.c.h.b16 %v135
    %v771 = vunpack.c.l.b16 %v136
    %v772 = vunpack.c.h.b16 %v136
    %v773 = vunpack.c.l.b16 %v137
    %v774 = vunpack.c.h.b16 %v137
    %v775 = vunpack.c.l.b16 %v138
    %v776 = vunpack.c.h.b16 %v138
    %v777 = vunpack.c.l.b16 %v139
    %v778 = vunpack.c.h.b16 %v139
    %v779 = vunpack.c.l.b16 %v140
    %v780 = vunpack.c.h.b16 %v140
    %v781 = vunpack.c.l.b16 %v141
    %v782 = vunpack.c.h.b16 %v141
    %v783 = vunpack.c.l.b16 %v142
    %v784 = vunpack.c.h.b16 %v142
    %v785 = vunpack.c.l.b16 %v143
    %v786 = vunpack.c.h.b16 %v143
    %v787 = vunpack.c.l.b16 %v144
    %v788 = vunpack.c.h.b16 %v144
    %v789 = vunpack.c.l.b16 %v145
    %v790 = vunpack.c.h.b16 %v145
    %v791 = vunpack.c.l.b16 %v146
    %v792 = vunpack.c.h.b16 %v146
    %v793 = vunpack.c.l.b16 %v147
    %v794 = vunpack.c.h.b16 %v147
    %v795 = vunpack.c.l.b16 %v148
    %v796 = vunpack.c.h.b16 %v148
    %v797 = vunpack.c.l.b16 %v149
    %v798 = vunpack.c.h.b16 %v149
    %v799 = vunpack.c.l.b16 %v150
    %v800 = vunpack.c.h.b16 %v150
    %v801 = vunpack.c.l.b16 %v151
    %v802 = vunpack.c.h.b16 %v151
    %v803 = vunpack.c.l.b16 %v152
    %v804 = vunpack.c.h.b16 %v152
    %v805 = vunpack.c.l.b16 %v153
    %v806 = vunpack.c.h.b16 %v153
    %v807 = vunpack.c.l.b16 %v154
    %v808 = vunpack.c.h.b16 %v154
    %v809 = vunpack.c.l.b16 %v155
    %v810 = vunpack.c.h.b16 %v155
    %v811 = vunpack.c.l.b16 %v156
    %v812 = vunpack.c.h.b16 %v156
    %v813 = vunpack.c.l.b16 %v157
    %v814 = vunpack.c.h.b16 %v157
    %v815 = vunpack.c.l.b16 %v158
    %v816 = vunpack.c.h.b16 %v158
    %v817 = vunpack.c.l.b16 %v159
    %v818 = vunpack.c.h.b16 %v159
    %v819 = vunpack.c.l.b16 %v160
    %v820 = vunpack.c.h.b16 %v160
    %v821 = vunpack.c.l.b16 %v161
    %v822 = vunpack.c.h.b16 %v161
    %v823 = vunpack.c.l.b16 %v162
    %v824 = vunpack.c.h.b16 %v162
    %v825 = vunpack.c.l.b16 %v163
    %v826 = vunpack.c.h.b16 %v163
    %v827 = vunpack.c.l.b16 %v164
    %v828 = vunpack.c.h.b16 %v164
    %v829 = vunpack.c.l.b16 %v165
    %v830 = vunpack.c.h.b16 %v165
    %v831 = vunpack.c.l.b16 %v166
    %v832 = vunpack.c.h.b16 %v166
    %v833 = vunpack.c.l.b16 %v167
    %v834 = vunpack.c.h.b16 %v167
    %v835 = vunpack.c.l.b16 %v168
    %v836 = vunpack.c.h.b16 %v168
    %v837 = vunpack.c.l.b16 %v169
    %v838 = vunpack.c.h.b16 %v169
    %v839 = vunpack.c.l.b16 %v170
    %v840 = vunpack.c.h.b16 %v170
    %v841 = vunpack.c.l.b16 %v171
    %v842 = vunpack.c.h.b16 %v171
    %v843 = vunpack.c.l.b16 %v172
    %v844 = vunpack.c.h.b16 %v172
    %v845 = vunpack.c.l.b16 %v173
    %v846 = vunpack.c.h.b16 %v173
    %v847 = vunpack.c.l.b16 %v174
    %v848 = vunpack.c.h.b16 %v174
    %v849 = vunpack.c.l.b16 %v175
    %v850 = vunpack.c.h.b16 %v175
    %v851 = vunpack.c.l.b16 %v176
    %v852 = vunpack.c.h.b16 %v176
    %v853 = vunpack.c.l.b16 %v177
    %v854 = vunpack.c.h.b16 %v177
    %v855 = vunpack.c.l.b16 %v178
    %v856 = vunpack.c.h.b16 %v178
    %v857 = vunpack.c.l.b16 %v179
    %v858 = vunpack.c.h.b16 %v179
    %v859 = vunpack.c.l.b16 %v180
    %v860 = vunpack.c.h.b16 %v180
    %v861 = vunpack.c.l.b16 %v181
    %v862 = vunpack.c.h.b16 %v181
    %v863 = vunpack.c.l.b16 %v182
    %v864 = vunpack.c.h.b16 %v182
    %v865 = vunpack.c.l.b16 %v183
    %v866 = vunpack.c.h.b16 %v183
    %v867 = vunpack.c.l.b16 %v184
    %v868 = vunpack.c.h.b16 %v184
    %v869 = vunpack.c.l.b16 %v185
    %v870 = vunpack.c.h.b16 %v185
    %v871 = vunpack.c.l.b16 %v186
    %v872 = vunpack.c.h.b16 %v186
    %v873 = vunpack.c.l.b16 %v187
    %v874 = vunpack.c.h.b16 %v187
    %v875 = vunpack.c.l.b16 %v188
    %v876 = vunpack.c.h.b16 %v188
    %v877 = vunpack.c.l.b16 %v189
    %v878 = vunpack.c.h.b16 %v189
    %v879 = vunpack.c.l.b16 %v190
    %v880 = vunpack.c.h.b16 %v190
    %v881 = vunpack.c.l.b16 %v191
    %v882 = vunpack.c.h.b16 %v191
    %v883 = vunpack.c.l.b16 %v192
    %v884 = vunpack.c.h.b16 %v192
    %v885 = vunpack.c.l.b16 %v193
    %v886 = vunpack.c.h.b16 %v193
    %v887 = vunpack.c.l.b16 %v194
    %v888 = vunpack.c.h.b16 %v194
    %v889 = vunpack.c.l.b16 %v195
    %v890 = vunpack.c.h.b16 %v195
    %v891 = vunpack.c.l.b16 %v196
    %v892 = vunpack.c.h.b16 %v196
    %v893 = vunpack.c.l.b16 %v197
    %v894 = vunpack.c.h.b16 %v197
    %v895 = vunpack.c.l.b16 %v198
    %v896 = vunpack.c.h.b16 %v198
    %v897 = vunpack.c.l.b16 %v199
    %v898 = vunpack.c.h.b16 %v199
    %v899 = vunpack.c.l.b16 %v200
    %v900 = vunpack.c.h.b16 %v200
    %v901 = vunpack.c.l.b16 %v201
    %v902 = vunpack.c.h.b16 %v201
    %v903 = vunpack.c.l.b16 %v202
    %v904 = vunpack.c.h.b16 %v202
    %v905 = vunpack.c.l.b16 %v203
    %v906 = vunpack.c.h.b16 %v203
    %v907 = vunpack.c.l.b16 %v204
    %v908 = vunpack.c.h.b16 %v204
    %v909 = vunpack.c.l.b16 %v205
    %v910 = vunpack.c.h.b16 %v205
    %v911 = vunpack.c.l.b16 %v206
    %v912 = vunpack.c.h.b16 %v206
    %v913 = vunpack.c.l.b16 %v207
    %v914 = vunpack.c.h.b16 %v207
    %v915 = vunpack.c.l.b16 %v208
    %v916 = vunpack.c.h.b16 %v208
    %v917 = vunpack.c.l.b16 %v209
    %v918 = vunpack.c.h.b16 %v209
    %v919 = vunpack.c.l.b16 %v210
    %v920 = vunpack.c.h.b16 %v210
    %v921 = vunpack.c.l.b16 %v211
    %v922 = vunpack.c.h.b16 %v211
    %v923 = vunpack.c.l.b16 %v212
    %v924 = vunpack.c.h.b16 %v212
    %v925 = vunpack.c.l.b16 %v213
    %v926 = vunpack.c.h.b16 %v213
    %v927 = vunpack.c.l.b16 %v214
    %v928 = vunpack.c.h.b16 %v214
    %v929 = vunpack.c.l.b16 %v215
    %v930 = vunpack.c.h.b16 %v215
    %v931 = vunpack.c.l.b16 %v216
    %v932 = vunpack.c.h.b16 %v216
    %v933 = vunpack.c.l.b16 %v217
    %v934 = vunpack.c.h.b16 %v217
    %v935 = vunpack.c.l.b16 %v218
    %v936 = vunpack.c.h.b16 %v218
    %v937 = vunpack.c.l.b16 %v219
    %v938 = vunpack.c.h.b16 %v219
    %v939 = vunpack.c.l.b16 %v220
    %v940 = vunpack.c.h.b16 %v220
    %v941 = vunpack.c.l.b16 %v221
    %v942 = vunpack.c.h.b16 %v221
    %v943 = vunpack.c.l.b16 %v222
    %v944 = vunpack.c.h.b16 %v222
    %v945 = vunpack.c.l.b16 %v223
    %v946 = vunpack.c.h.b16 %v223
    %v947 = vunpack.c.l.b16 %v224
    %v948 = vunpack.c.h.b16 %v224
    %v949 = vunpack.c.l.b16 %v225
    %v950 = vunpack.c.h.b16 %v225
    %v951 = vunpack.c.l.b16 %v226
    %v952 = vunpack.c.h.b16 %v226
    %v953 = vunpack.c.l.b16 %v227
    %v954 = vunpack.c.h.b16 %v227
    %v955 = vunpack.c.l.b16 %v228
    %v956 = vunpack.c.h.b16 %v228
    %v957 = vunpack.c.l.b16 %v229
    %v958 = vunpack.c.h.b16 %v229
    %v959 = vunpack.c.l.b16 %v230
    %v960 = vunpack.c.h.b16 %v230
    %v961 = vunpack.c.l.b16 %v231
    %v962 = vunpack.c.h.b16 %v231
    %v963 = vunpack.c.l.b16 %v232
    %v964 = vunpack.c.h.b16 %v232
    %v965 = vunpack.c.l.b16 %v233
    %v966 = vunpack.c.h.b16 %v233
    %v967 = vunpack.c.l.b16 %v234
    %v968 = vunpack.c.h.b16 %v234
    %v969 = vunpack.c.l.b16 %v235
    %v970 = vunpack.c.h.b16 %v235
    %v971 = vunpack.c.l.b16 %v236
    %v972 = vunpack.c.h.b16 %v236
    %v973 = vunpack.c.l.b16 %v237
    %v974 = vunpack.c.h.b16 %v237
    %v975 = vunpack.c.l.b16 %v238
    %v976 = vunpack.c.h.b16 %v238
    %v977 = vunpack.c.l.b16 %v239
    %v978 = vunpack.c.h.b16 %v239
    %v979 = vunpack.c.l.b16 %v240
    %v980 = vunpack.c.h.b16 %v240
    %v981 = vunpack.c.l.b16 %v241
    %v982 = vunpack.c.h.b16 %v241
    %v983 = vunpack.c.l.b16 %v242
    %v984 = vunpack.c.h.b16 %v242
    %v985 = vunpack.c.l.b16 %v243
    %v986 = vunpack.c.h.b16 %v243
    %v987 = vunpack.c.l.b16 %v244
    %v988 = vunpack.c.h.b16 %v244
    %v989 = vunpack.c.l.b16 %v245
    %v990 = vunpack.c.h.b16 %v245
    %v991 = vunpack.c.l.b16 %v246
    %v992 = vunpack.c.h.b16 %v246
    %v993 = vunpack.c.l.b16 %v247
    %v994 = vunpack.c.h.b16 %v247
    %v995 = vunpack.c.l.b16 %v248
    %v996 = vunpack.c.h.b16 %v248
    %v997 = vunpack.c.l.b16 %v249
    %v998 = vunpack.c.h.b16 %v249
    %v999 = vunpack.c.l.b16 %v250
    %v1000 = vunpack.c.h.b16 %v250
    %v1001 = vunpack.c.l.b16 %v251
    %v1002 = vunpack.c.h.b16 %v251
    %v1003 = vunpack.c.l.b16 %v252
    %v1004 = vunpack.c.h.b16 %v252
    %v1005 = vunpack.c.l.b16 %v253
    %v1006 = vunpack.c.h.b16 %v253
    %v1007 = vunpack.c.l.b16 %v254
    %v1008 = vunpack.c.h.b16 %v254
    %v1009 = vunpack.c.l.b16 %v255
    %v1010 = vunpack.c.h.b16 %v255
    %v1011 = vunpack.c.l.b16 %v256
    %v1012 = vunpack.c.h.b16 %v256
    %v1013 = vunpack.c.l.b16 %v257
    %v1014 = vunpack.c.h.b16 %v257
    %v1015 = vunpack.c.l.b16 %v258
    %v1016 = vunpack.c.h.b16 %v258
    %v1017 = vunpack.c.l.b16 %v259
    %v1018 = vunpack.c.h.b16 %v259
    %v1019 = vunpack.c.l.b16 %v260
    %v1020 = vunpack.c.h.b16 %v260
    %v1021 = vunpack.c.l.b16 %v261
    %v1022 = vunpack.c.h.b16 %v261
    %v1023 = vunpack.c.l.b16 %v262
    %v1024 = vunpack.c.h.b16 %v262
    %v1025 = vunpack.c.l.b16 %v263
    %v1026 = vunpack.c.h.b16 %v263
    %v1027 = vunpack.c.l.b16 %v264
    %v1028 = vunpack.c.h.b16 %v264
    %v1029 = vunpack.c.l.b16 %v265
    %v1030 = vunpack.c.h.b16 %v265
    %v1031 = vunpack.c.l.b16 %v266
    %v1032 = vunpack.c.h.b16 %v266
    %v1033 = vunpack.c.l.b16 %v267
    %v1034 = vunpack.c.h.b16 %v267
    %v1035 = vunpack.c.l.b16 %v268
    %v1036 = vunpack.c.h.b16 %v268
    %v1037 = vunpack.c.l.b16 %v269
    %v1038 = vunpack.c.h.b16 %v269
    %v1039 = vunpack.c.l.b16 %v270
    %v1040 = vunpack.c.h.b16 %v270
    %v1041 = vunpack.c.l.b16 %v271
    %v1042 = vunpack.c.h.b16 %v271
    %v1043 = vunpack.c.l.b16 %v272
    %v1044 = vunpack.c.h.b16 %v272
    %v1045 = vunpack.c.l.b16 %v273
    %v1046 = vunpack.c.h.b16 %v273
    %v1047 = vunpack.c.l.b16 %v274
    %v1048 = vunpack.c.h.b16 %v274
    %v1049 = vunpack.c.l.b16 %v275
    %v1050 = vunpack.c.h.b16 %v275
    %v1051 = vunpack.c.l.b16 %v276
    %v1052 = vunpack.c.h.b16 %v276
    %v1053 = vunpack.c.l.b16 %v277
    %v1054 = vunpack.c.h.b16 %v277
    %v1055 = vunpack.c.l.b16 %v278
    %v1056 = vunpack.c.h.b16 %v278
    %v1057 = vunpack.c.l.b16 %v279
    %v1058 = vunpack.c.h.b16 %v279
    %v1059 = vunpack.c.l.b16 %v280
    %v1060 = vunpack.c.h.b16 %v280
    %v1061 = vunpack.c.l.b16 %v281
    %v1062 = vunpack.c.h.b16 %v281
    %v1063 = vunpack.c.l.b16 %v282
    %v1064 = vunpack.c.h.b16 %v282
    %v1065 = vunpack.c.l.b16 %v283
    %v1066 = vunpack.c.h.b16 %v283
    %v1067 = vunpack.c.l.b16 %v284
    %v1068 = vunpack.c.h.b16 %v284
    %v1069 = vunpack.c.l.b16 %v285
    %v1070 = vunpack.c.h.b16 %v285
    %v1071 = vunpack.c.l.b16 %v286
    %v1072 = vunpack.c.h.b16 %v286
    %v1073 = vunpack.c.l.b16 %v287
    %v1074 = vunpack.c.h.b16 %v287
    %v1075 = vunpack.c.l.b16 %v288
    %v1076 = vunpack.c.h.b16 %v288
    %v1077 = vunpack.c.l.b16 %v289
    %v1078 = vunpack.c.h.b16 %v289
    %v1079 = vunpack.c.l.b16 %v290
    %v1080 = vunpack.c.h.b16 %v290
    %v1081 = vunpack.c.l.b16 %v291
    %v1082 = vunpack.c.h.b16 %v291
    %v1083 = vunpack.c.l.b16 %v292
    %v1084 = vunpack.c.h.b16 %v292
    %v1085 = vunpack.c.l.b16 %v293
    %v1086 = vunpack.c.h.b16 %v293
    %v1087 = vunpack.c.l.b16 %v294
    %v1088 = vunpack.c.h.b16 %v294
    %v1089 = vunpack.c.l.b16 %v295
    %v1090 = vunpack.c.h.b16 %v295
    %v1091 = vunpack.c.l.b16 %v296
    %v1092 = vunpack.c.h.b16 %v296
    %v1093 = vunpack.c.l.b16 %v297
    %v1094 = vunpack.c.h.b16 %v297
    %v1095 = vunpack.c.l.b16 %v298
    %v1096 = vunpack.c.h.b16 %v298
    %v1097 = vunpack.c.l.b16 %v299
    %v1098 = vunpack.c.h.b16 %v299
    %v1099 = vunpack.c.l.b16 %v300
    %v1100 = vunpack.c.h.b16 %v300
    %v1101 = vunpack.c.l.b16 %v301
    %v1102 = vunpack.c.h.b16 %v301
    %v1103 = vunpack.c.l.b16 %v302
    %v1104 = vunpack.c.h.b16 %v302
    %v1105 = vunpack.c.l.b16 %v303
    %v1106 = vunpack.c.h.b16 %v303
    %v1107 = vunpack.c.l.b16 %v304
    %v1108 = vunpack.c.h.b16 %v304
    %v1109 = vunpack.c.l.b16 %v305
    %v1110 = vunpack.c.h.b16 %v305
    %v1111 = vunpack.c.l.b16 %v306
    %v1112 = vunpack.c.h.b16 %v306
    %v1113 = vunpack.c.l.b16 %v307
    %v1114 = vunpack.c.h.b16 %v307
    %v1115 = vunpack.c.l.b16 %v308
    %v1116 = vunpack.c.h.b16 %v308
    %v1117 = vunpack.c.l.b16 %v309
    %v1118 = vunpack.c.h.b16 %v309
    %v1119 = vunpack.c.l.b16 %v310
    %v1120 = vunpack.c.h.b16 %v310
    %v1121 = vunpack.c.l.b16 %v311
    %v1122 = vunpack.c.h.b16 %v311
    %v1123 = vunpack.c.l.b16 %v312
    %v1124 = vunpack.c.h.b16 %v312
    %v1125 = vunpack.c.l.b16 %v313
    %v1126 = vunpack.c.h.b16 %v313
    %v1127 = vunpack.c.l.b16 %v314
    %v1128 = vunpack.c.h.b16 %v314
    %v1129 = vunpack.c.l.b16 %v315
    %v1130 = vunpack.c.h.b16 %v315
    %v1131 = vunpack.c.l.b16 %v316
    %v1132 = vunpack.c.h.b16 %v316
    %v1133 = vunpack.c.l.b16 %v317
    %v1134 = vunpack.c.h.b16 %v317
    %v1135 = vunpack.c.l.b16 %v318
    %v1136 = vunpack.c.h.b16 %v318
    %v1137 = vunpack.c.l.b16 %v319
    %v1138 = vunpack.c.h.b16 %v319
    %v1139 = vunpack.c.l.b16 %v320
    %v1140 = vunpack.c.h.b16 %v320
    %v1141 = vunpack.c.l.b16 %v321
    %v1142 = vunpack.c.h.b16 %v321
    %v1143 = vunpack.c.l.b16 %v322
    %v1144 = vunpack.c.h.b16 %v322
    %v1145 = vunpack.c.l.b16 %v323
    %v1146 = vunpack.c.h.b16 %v323
    %v1147 = vunpack.c.l.b16 %v324
    %v1148 = vunpack.c.h.b16 %v324
    %v1149 = vunpack.c.l.b16 %v325
    %v1150 = vunpack.c.h.b16 %v325
    %v1151 = vunpack.c.l.b16 %v326
    %v1152 = vunpack.c.h.b16 %v326
    %v1153 = vunpack.c.l.b16 %v327
    %v1154 = vunpack.c.h.b16 %v327
    %v1155 = vunpack.c.l.b16 %v328
    %v1156 = vunpack.c.h.b16 %v328
    %v1157 = vunpack.c.l.b16 %v329
    %v1158 = vunpack.c.h.b16 %v329
    %v1159 = vunpack.c.l.b16 %v330
    %v1160 = vunpack.c.h.b16 %v330
    %v1161 = vpack.c.b16 %v653, %v649
    %v1162 = vpack.c.b16 %v654, %v650
    %v1163 = vpack.c.b16 %v655, %v651
    %v1164 = vpack.c.b16 %v656, %v652
    %v1165 = vpack.c.b16 %v661, %v657
    %v1166 = vpack.c.b16 %v662, %v658
    %v1167 = vpack.c.b16 %v663, %v659
    %v1168 = vpack.c.b16 %v664, %v660
    %v1169 = vpack.c.b16 %v669, %v665
    %v1170 = vpack.c.b16 %v670, %v666
    %v1171 = vpack.c.b16 %v671, %v667
    %v1172 = vpack.c.b16 %v672, %v668
    %v1173 = vpack.c.b16 %v677, %v673
    %v1174 = vpack.c.b16 %v678, %v674
    %v1175 = vpack.c.b16 %v679, %v675
    %v1176 = vpack.c.b16 %v680, %v676
    %v1177 = vpack.c.b16 %v685, %v681
    %v1178 = vpack.c.b16 %v686, %v682
    %v1179 = vpack.c.b16 %v687, %v683
    %v1180 = vpack.c.b16 %v688, %v684
    %v1181 = vpack.c.b16 %v693, %v689
    %v1182 = vpack.c.b16 %v694, %v690
    %v1183 = vpack.c.b16 %v695, %v691
    %v1184 = vpack.c.b16 %v696, %v692
    %v1185 = vpack.c.b16 %v701, %v697
    %v1186 = vpack.c.b16 %v702, %v698
    %v1187 = vpack.c.b16 %v703, %v699
    %v1188 = vpack.c.b16 %v704, %v700
    %v1189 = vpack.c.b16 %v709, %v705
    %v1190 = vpack.c.b16 %v710, %v706
    %v1191 = vpack.c.b16 %v711, %v707
    %v1192 = vpack.c.b16 %v712, %v708
    %v1193 = vpack.c.b16 %v717, %v713
    %v1194 = vpack.c.b16 %v718, %v714
    %v1195 = vpack.c.b16 %v719, %v715
    %v1196 = vpack.c.b16 %v720, %v716
    %v1197 = vpack.c.b16 %v725, %v721
    %v1198 = vpack.c.b16 %v726, %v722
    %v1199 = vpack.c.b16 %v727, %v723
    %v1200 = vpack.c.b16 %v728, %v724
    %v1201 = vpack.c.b16 %v733, %v729
    %v1202 = vpack.c.b16 %v734, %v730
    %v1203 = vpack.c.b16 %v735, %v731
    %v1204 = vpack.c.b16 %v736, %v732
    %v1205 = vpack.c.b16 %v741, %v737
    %v1206 = vpack.c.b16 %v742, %v738
    %v1207 = vpack.c.b16 %v743, %v739
    %v1208 = vpack.c.b16 %v744, %v740
    %v1209 = vpack.c.b16 %v749, %v745
    %v1210 = vpack.c.b16 %v750, %v746
    %v1211 = vpack.c.b16 %v751, %v747
    %v1212 = vpack.c.b16 %v752, %v748
    %v1213 = vpack.c.b16 %v757, %v753
    %v1214 = vpack.c.b16 %v758, %v754
    %v1215 = vpack.c.b16 %v759, %v755
    %v1216 = vpack.c.b16 %v760, %v756
    %v1217 = vpack.c.b16 %v765, %v761
    %v1218 = vpack.c.b16 %v766, %v762
    %v1219 = vpack.c.b16 %v767, %v763
    %v1220 = vpack.c.b16 %v768, %v764
    %v1221 = vpack.c.b16 %v773, %v769
    %v1222 = vpack.c.b16 %v774, %v770
    %v1223 = vpack.c.b16 %v775, %v771
    %v1224 = vpack.c.b16 %v776, %v772
    %v1225 = vpack.c.b16 %v781, %v777
    %v1226 = vpack.c.b16 %v782, %v778
    %v1227 = vpack.c.b16 %v783, %v779
    %v1228 = vpack.c.b16 %v784, %v780
    %v1229 = vpack.c.b16 %v789, %v785
    %v1230 = vpack.c.b16 %v790, %v786
    %v1231 = vpack.c.b16 %v791, %v787
    %v1232 = vpack.c.b16 %v792, %v788
    %v1233 = vpack.c.b16 %v797, %v793
    %v1234 = vpack.c.b16 %v798, %v794
    %v1235 = vpack.c.b16 %v799, %v795
    %v1236 = vpack.c.b16 %v800, %v796
    %v1237 = vpack.c.b16 %v805, %v801
    %v1238 = vpack.c.b16 %v806, %v802
    %v1239 = vpack.c.b16 %v807, %v803
    %v1240 = vpack.c.b16 %v808, %v804
    %v1241 = vpack.c.b16 %v813, %v809
    %v1242 = vpack.c.b16 %v814, %v810
    %v1243 = vpack.c.b16 %v815, %v811
    %v1244 = vpack.c.b16 %v816, %v812
    %v1245 = vpack.c.b16 %v821, %v817
    %v1246 = vpack.c.b16 %v822, %v818
    %v1247 = vpack.c.b16 %v823, %v819
    %v1248 = vpack.c.b16 %v824, %v820
    %v1249 = vpack.c.b16 %v829, %v825
    %v1250 = vpack.c.b16 %v830, %v826
    %v1251 = vpack.c.b16 %v831, %v827
    %v1252 = vpack.c.b16 %v832, %v828
    %v1253 = vpack.c.b16 %v837, %v833
    %v1254 = vpack.c.b16 %v838, %v834
    %v1255 = vpack.c.b16 %v839, %v835
    %v1256 = vpack.c.b16 %v840, %v836
    %v1257 = vpack.c.b16 %v845, %v841
    %v1258 = vpack.c.b16 %v846, %v842
    %v1259 = vpack.c.b16 %v847, %v843
    %v1260 = vpack.c.b16 %v848, %v844
    %v1261 = vpack.c.b16 %v853, %v849
    %v1262 = vpack.c.b16 %v854, %v850
    %v1263 = vpack.c.b16 %v855, %v851
    %v1264 = vpack.c.b16 %v856, %v852
    %v1265 = vpack.c.b16 %v861, %v857
    %v1266 = vpack.c.b16 %v862, %v858
    %v1267 = vpack.c.b16 %v863, %v859
    %v1268 = vpack.c.b16 %v864, %v860
    %v1269 = vpack.c.b16 %v869, %v865
    %v1270 = vpack.c.b16 %v870, %v866
    %v1271 = vpack.c.b16 %v871, %v867
    %v1272 = vpack.c.b16 %v872, %v868
    %v1273 = vpack.c.b16 %v877, %v873
    %v1274 = vpack.c.b16 %v878, %v874
    %v1275 = vpack.c.b16 %v879, %v875
    %v1276 = vpack.c.b16 %v880, %v876
    %v1277 = vpack.c.b16 %v885, %v881
    %v1278 = vpack.c.b16 %v886, %v882
    %v1279 = vpack.c.b16 %v887, %v883
    %v1280 = vpack.c.b16 %v888, %v884
    %v1281 = vpack.c.b16 %v893, %v889
    %v1282 = vpack.c.b16 %v894, %v890
    %v1283 = vpack.c.b16 %v895, %v891
    %v1284 = vpack.c.b16 %v896, %v892
    %v1285 = vpack.c.b16 %v901, %v897
    %v1286 = vpack.c.b16 %v902, %v898
    %v1287 = vpack.c.b16 %v903, %v899
    %v1288 = vpack.c.b16 %v904, %v900
    %v1289 = vpack.c.b16 %v909, %v905
    %v1290 = vpack.c.b16 %v910, %v906
    %v1291 = vpack.c.b16 %v911, %v907
    %v1292 = vpack.c.b16 %v912, %v908
    %v1293 = vpack.c.b16 %v917, %v913
    %v1294 = vpack.c.b16 %v918, %v914
    %v1295 = vpack.c.b16 %v919, %v915
    %v1296 = vpack.c.b16 %v920, %v916
    %v1297 = vpack.c.b16 %v925, %v921
    %v1298 = vpack.c.b16 %v926, %v922
    %v1299 = vpack.c.b16 %v927, %v923
    %v1300 = vpack.c.b16 %v928, %v924
    %v1301 = vpack.c.b16 %v933, %v929
    %v1302 = vpack.c.b16 %v934, %v930
    %v1303 = vpack.c.b16 %v935, %v931
    %v1304 = vpack.c.b16 %v936, %v932
    %v1305 = vpack.c.b16 %v941, %v937
    %v1306 = vpack.c.b16 %v942, %v938
    %v1307 = vpack.c.b16 %v943, %v939
    %v1308 = vpack.c.b16 %v944, %v940
    %v1309 = vpack.c.b16 %v949, %v945
    %v1310 = vpack.c.b16 %v950, %v946
    %v1311 = vpack.c.b16 %v951, %v947
    %v1312 = vpack.c.b16 %v952, %v948
    %v1313 = vpack.c.b16 %v957, %v953
    %v1314 = vpack.c.b16 %v958, %v954
    %v1315 = vpack.c.b16 %v959, %v955
    %v1316 = vpack.c.b16 %v960, %v956
    %v1317 = vpack.c.b16 %v965, %v961
    %v1318 = vpack.c.b16 %v966, %v962
    %v1319 = vpack.c.b16 %v967, %v963
    %v1320 = vpack.c.b16 %v968, %v964
    %v1321 = vpack.c.b16 %v973, %v969
    %v1322 = vpack.c.b16 %v974, %v970
    %v1323 = vpack.c.b16 %v975, %v971
    %v1324 = vpack.c.b16 %v976, %v972
    %v1325 = vpack.c.b16 %v981, %v977
    %v1326 = vpack.c.b16 %v982, %v978
    %v1327 = vpack.c.b16 %v983, %v979
    %v1328 = vpack.c.b16 %v984, %v980
    %v1329 = vpack.c.b16 %v989, %v985
    %v1330 = vpack.c.b16 %v990, %v986
    %v1331 = vpack.c.b16 %v991, %v987
    %v1332 = vpack.c.b16 %v992, %v988
    %v1333 = vpack.c.b16 %v997, %v993
    %v1334 = vpack.c.b16 %v998, %v994
    %v1335 = vpack.c.b16 %v999, %v995
    %v1336 = vpack.c.b16 %v1000, %v996
    %v1337 = vpack.c.b16 %v1005, %v1001
    %v1338 = vpack.c.b16 %v1006, %v1002
    %v1339 = vpack.c.b16 %v1007, %v1003
    %v1340 = vpack.c.b16 %v1008, %v1004
    %v1341 = vpack.c.b16 %v1013, %v1009
    %v1342 = vpack.c.b16 %v1014, %v1010
    %v1343 = vpack.c.b16 %v1015, %v1011
    %v1344 = vpack.c.b16 %v1016, %v1012
    %v1345 = vpack.c.b16 %v1021, %v1017
    %v1346 = vpack.c.b16 %v1022, %v1018
    %v1347 = vpack.c.b16 %v1023, %v1019
    %v1348 = vpack.c.b16 %v1024, %v1020
    %v1349 = vpack.c.b16 %v1029, %v1025
    %v1350 = vpack.c.b16 %v1030, %v1026
    %v1351 = vpack.c.b16 %v1031, %v1027
    %v1352 = vpack.c.b16 %v1032, %v1028
    %v1353 = vpack.c.b16 %v1037, %v1033
    %v1354 = vpack.c.b16 %v1038, %v1034
    %v1355 = vpack.c.b16 %v1039, %v1035
    %v1356 = vpack.c.b16 %v1040, %v1036
    %v1357 = vpack.c.b16 %v1045, %v1041
    %v1358 = vpack.c.b16 %v1046, %v1042
    %v1359 = vpack.c.b16 %v1047, %v1043
    %v1360 = vpack.c.b16 %v1048, %v1044
    %v1361 = vpack.c.b16 %v1053, %v1049
    %v1362 = vpack.c.b16 %v1054, %v1050
    %v1363 = vpack.c.b16 %v1055, %v1051
    %v1364 = vpack.c.b16 %v1056, %v1052
    %v1365 = vpack.c.b16 %v1061, %v1057
    %v1366 = vpack.c.b16 %v1062, %v1058
    %v1367 = vpack.c.b16 %v1063, %v1059
    %v1368 = vpack.c.b16 %v1064, %v1060
    %v1369 = vpack.c.b16 %v1069, %v1065
    %v1370 = vpack.c.b16 %v1070, %v1066
    %v1371 = vpack.c.b16 %v1071, %v1067
    %v1372 = vpack.c.b16 %v1072, %v1068
    %v1373 = vpack.c.b16 %v1077, %v1073
    %v1374 = vpack.c.b16 %v1078, %v1074
    %v1375 = vpack.c.b16 %v1079, %v1075
    %v1376 = vpack.c.b16 %v1080, %v1076
    %v1377 = vpack.c.b16 %v1085, %v1081
    %v1378 = vpack.c.b16 %v1086, %v1082
    %v1379 = vpack.c.b16 %v1087, %v1083
    %v1380 = vpack.c.b16 %v1088, %v1084
    %v1381 = vpack.c.b16 %v1093, %v1089
    %v1382 = vpack.c.b16 %v1094, %v1090
    %v1383 = vpack.c.b16 %v1095, %v1091
    %v1384 = vpack.c.b16 %v1096, %v1092
    %v1385 = vpack.c.b16 %v1101, %v1097
    %v1386 = vpack.c.b16 %v1102, %v1098
    %v1387 = vpack.c.b16 %v1103, %v1099
    %v1388 = vpack.c.b16 %v1104, %v1100
    %v1389 = vpack.c.b16 %v1109, %v1105
    %v1390 = vpack.c.b16 %v1110, %v1106
    %v1391 = vpack.c.b16 %v1111, %v1107
    %v1392 = vpack.c.b16 %v1112, %v1108
    %v1393 = vpack.c.b16 %v1117, %v1113
    %v1394 = vpack.c.b16 %v1118, %v1114
    %v1395 = vpack.c.b16 %v1119, %v1115
    %v1396 = vpack.c.b16 %v1120, %v1116
    %v1397 = vpack.c.b16 %v1125, %v1121
    %v1398 = vpack.c.b16 %v1126, %v1122
    %v1399 = vpack.c.b16 %v1127, %v1123
    %v1400 = vpack.c.b16 %v1128, %v1124
    %v1401 = vpack.c.b16 %v1133, %v1129
    %v1402 = vpack.c.b16 %v1134, %v1130
    %v1403 = vpack.c.b16 %v1135, %v1131
    %v1404 = vpack.c.b16 %v1136, %v1132
    %v1405 = vpack.c.b16 %v1141, %v1137
    %v1406 = vpack.c.b16 %v1142, %v1138
    %v1407 = vpack.c.b16 %v1143, %v1139
    %v1408 = vpack.c.b16 %v1144, %v1140
    %v1409 = vpack.c.b16 %v1149, %v1145
    %v1410 = vpack.c.b16 %v1150, %v1146
    %v1411 = vpack.c.b16 %v1151, %v1147
    %v1412 = vpack.c.b16 %v1152, %v1148
    %v1413 = vpack.c.b16 %v1157, %v1153
    %v1414 = vpack.c.b16 %v1158, %v1154
    %v1415 = vpack.c.b16 %v1159, %v1155
    %v1416 = vpack.c.b16 %v1160, %v1156
    %1673 = vmatprep.subr.bf16.mxu0 %v1190
    %1674 = vmatpush1.bf16.msra.mxu0 %v1189
    %1675 = vmatprep.subr.bf16.mxu0 %v1186
    %1676 = vmatpush1.bf16.msra.mxu0 %v1185
    %1677 = vmatprep.subr.bf16.mxu0 %v1182
    %1678 = vmatpush1.bf16.msra.mxu0 %v1181
    %1679 = vmatprep.subr.bf16.mxu0 %v1178
    %1680 = vmatpush1.bf16.msra.mxu0 %v1177
    %1681 = vmatprep.subr.bf16.mxu0 %v1174
    %1682 = vmatpush1.bf16.msra.mxu0 %v1173
    %1683 = vmatprep.subr.bf16.mxu0 %v1170
    %1684 = vmatpush1.bf16.msra.mxu0 %v1169
    %1685 = vmatprep.subr.bf16.mxu0 %v1166
    %1686 = vmatpush1.bf16.msra.mxu0 %v1165
    %1687 = vmatprep.subr.bf16.mxu0 %v1162
    %1688 = vmatpush1.bf16.msra.mxu0 %v1161
    %1689 = vmatprep.subr.bf16.mxu0 %v1222
    %1690 = vmatpush2.bf16.msra.mxu0 %v1221
    %1691 = vmatprep.subr.bf16.mxu0 %v1218
    %1692 = vmatpush2.bf16.msra.mxu0 %v1217
    %1693 = vmatprep.subr.bf16.mxu0 %v1214
    %1694 = vmatpush2.bf16.msra.mxu0 %v1213
    %1695 = vmatprep.subr.bf16.mxu0 %v1210
    %1696 = vmatpush2.bf16.msra.mxu0 %v1209
    %1697 = vmatprep.subr.bf16.mxu0 %v1206
    %1698 = vmatpush2.bf16.msra.mxu0 %v1205
    %1699 = vmatprep.subr.bf16.mxu0 %v1202
    %1700 = vmatpush2.bf16.msra.mxu0 %v1201
    %1701 = vmatprep.subr.bf16.mxu0 %v1198
    %1702 = vmatpush2.bf16.msra.mxu0 %v1197
    %1703 = vmatprep.subr.bf16.mxu0 %v1194
    %1704 = vmatpush2.bf16.msra.mxu0 %v1193
    %1705 = vmatprep.mubr.bf16.mxu0 %v378
    %1706 = vmatmul.mubr.bf16.gmra.mxu0 %v377
    %v1707 = vpop.f32.mrf.mxu0
    %v1708 = vadd.f32 %v336, %v1707
    %v1709 = vpop.f32.mrf.mxu0
    %v1710 = vadd.f32 %v340, %v1709
    %v1711 = vpop.f32.mrf.mxu0
    %v1712 = vadd.f32 %v336, %v1711
    %v1713 = vpop.f32.mrf.mxu0
    %v1714 = vadd.f32 %v340, %v1713
    %1715 = vdwg.mxu0
    %1716 = vmatprep.subr.bf16.mxu0 %v1254
    %1717 = vmatpush1.bf16.msra.mxu0 %v1253
    %1718 = vmatprep.subr.bf16.mxu0 %v1250
    %1719 = vmatpush1.bf16.msra.mxu0 %v1249
    %1720 = vmatprep.subr.bf16.mxu0 %v1246
    %1721 = vmatpush1.bf16.msra.mxu0 %v1245
    %1722 = vmatprep.subr.bf16.mxu0 %v1242
    %1723 = vmatpush1.bf16.msra.mxu0 %v1241
    %1724 = vmatprep.subr.bf16.mxu0 %v1238
    %1725 = vmatpush1.bf16.msra.mxu0 %v1237
    %1726 = vmatprep.subr.bf16.mxu0 %v1234
    %1727 = vmatpush1.bf16.msra.mxu0 %v1233
    %1728 = vmatprep.subr.bf16.mxu0 %v1230
    %1729 = vmatpush1.bf16.msra.mxu0 %v1229
    %1730 = vmatprep.subr.bf16.mxu0 %v1226
    %1731 = vmatpush1.bf16.msra.mxu0 %v1225
    %1732 = vmatprep.subr.bf16.mxu0 %v1286
    %1733 = vmatpush2.bf16.msra.mxu0 %v1285
    %1734 = vmatprep.subr.bf16.mxu0 %v1282
    %1735 = vmatpush2.bf16.msra.mxu0 %v1281
    %1736 = vmatprep.subr.bf16.mxu0 %v1278
    %1737 = vmatpush2.bf16.msra.mxu0 %v1277
    %1738 = vmatprep.subr.bf16.mxu0 %v1274
    %1739 = vmatpush2.bf16.msra.mxu0 %v1273
    %1740 = vmatprep.subr.bf16.mxu0 %v1270
    %1741 = vmatpush2.bf16.msra.mxu0 %v1269
    %1742 = vmatprep.subr.bf16.mxu0 %v1266
    %1743 = vmatpush2.bf16.msra.mxu0 %v1265
    %1744 = vmatprep.subr.bf16.mxu0 %v1262
    %1745 = vmatpush2.bf16.msra.mxu0 %v1261
    %1746 = vmatprep.subr.bf16.mxu0 %v1258
    %1747 = vmatpush2.bf16.msra.mxu0 %v1257
    %1748 = vmatprep.mubr.bf16.mxu0 %v380
    %1749 = vmatmul.mubr.bf16.gmra.mxu0 %v379
    %v1750 = vpop.f32.mrf.mxu0
    %v1751 = vadd.f32 %v1708, %v1750
    %v1752 = vpop.f32.mrf.mxu0
    %v1753 = vadd.f32 %v1710, %v1752
    %v1754 = vpop.f32.mrf.mxu0
    %v1755 = vadd.f32 %v1712, %v1754
    %v1756 = vpop.f32.mrf.mxu0
    %v1757 = vadd.f32 %v1714, %v1756
    %1758 = vdwg.mxu0
    %1759 = vmatprep.subr.bf16.mxu0 %v1318
    %1760 = vmatpush1.bf16.msra.mxu0 %v1317
    %1761 = vmatprep.subr.bf16.mxu0 %v1314
    %1762 = vmatpush1.bf16.msra.mxu0 %v1313
    %1763 = vmatprep.subr.bf16.mxu0 %v1310
    %1764 = vmatpush1.bf16.msra.mxu0 %v1309
    %1765 = vmatprep.subr.bf16.mxu0 %v1306
    %1766 = vmatpush1.bf16.msra.mxu0 %v1305
    %1767 = vmatprep.subr.bf16.mxu0 %v1302
    %1768 = vmatpush1.bf16.msra.mxu0 %v1301
    %1769 = vmatprep.subr.bf16.mxu0 %v1298
    %1770 = vmatpush1.bf16.msra.mxu0 %v1297
    %1771 = vmatprep.subr.bf16.mxu0 %v1294
    %1772 = vmatpush1.bf16.msra.mxu0 %v1293
    %1773 = vmatprep.subr.bf16.mxu0 %v1290
    %1774 = vmatpush1.bf16.msra.mxu0 %v1289
    %1775 = vmatprep.subr.bf16.mxu0 %v1350
    %1776 = vmatpush2.bf16.msra.mxu0 %v1349
    %1777 = vmatprep.subr.bf16.mxu0 %v1346
    %1778 = vmatpush2.bf16.msra.mxu0 %v1345
    %1779 = vmatprep.subr.bf16.mxu0 %v1342
    %1780 = vmatpush2.bf16.msra.mxu0 %v1341
    %1781 = vmatprep.subr.bf16.mxu0 %v1338
    %1782 = vmatpush2.bf16.msra.mxu0 %v1337
    %1783 = vmatprep.subr.bf16.mxu0 %v1334
    %1784 = vmatpush2.bf16.msra.mxu0 %v1333
    %1785 = vmatprep.subr.bf16.mxu0 %v1330
    %1786 = vmatpush2.bf16.msra.mxu0 %v1329
    %1787 = vmatprep.subr.bf16.mxu0 %v1326
    %1788 = vmatpush2.bf16.msra.mxu0 %v1325
    %1789 = vmatprep.subr.bf16.mxu0 %v1322
    %1790 = vmatpush2.bf16.msra.mxu0 %v1321
    %1791 = vmatprep.mubr.bf16.mxu0 %v382
    %1792 = vmatmul.mubr.bf16.gmra.mxu0 %v381
    %v1793 = vpop.f32.mrf.mxu0
    %v1794 = vadd.f32 %v1751, %v1793
    %v1795 = vpop.f32.mrf.mxu0
    %v1796 = vadd.f32 %v1753, %v1795
    %v1797 = vpop.f32.mrf.mxu0
    %v1798 = vadd.f32 %v1755, %v1797
    %v1799 = vpop.f32.mrf.mxu0
    %v1800 = vadd.f32 %v1757, %v1799
    %1801 = vdwg.mxu0
    %1802 = vmatprep.subr.bf16.mxu0 %v1382
    %1803 = vmatpush1.bf16.msra.mxu0 %v1381
    %1804 = vmatprep.subr.bf16.mxu0 %v1378
    %1805 = vmatpush1.bf16.msra.mxu0 %v1377
    %1806 = vmatprep.subr.bf16.mxu0 %v1374
    %1807 = vmatpush1.bf16.msra.mxu0 %v1373
    %1808 = vmatprep.subr.bf16.mxu0 %v1370
    %1809 = vmatpush1.bf16.msra.mxu0 %v1369
    %1810 = vmatprep.subr.bf16.mxu0 %v1366
    %1811 = vmatpush1.bf16.msra.mxu0 %v1365
    %1812 = vmatprep.subr.bf16.mxu0 %v1362
    %1813 = vmatpush1.bf16.msra.mxu0 %v1361
    %1814 = vmatprep.subr.bf16.mxu0 %v1358
    %1815 = vmatpush1.bf16.msra.mxu0 %v1357
    %1816 = vmatprep.subr.bf16.mxu0 %v1354
    %1817 = vmatpush1.bf16.msra.mxu0 %v1353
    %1818 = vmatprep.subr.bf16.mxu0 %v1414
    %1819 = vmatpush2.bf16.msra.mxu0 %v1413
    %1820 = vmatprep.subr.bf16.mxu0 %v1410
    %1821 = vmatpush2.bf16.msra.mxu0 %v1409
    %1822 = vmatprep.subr.bf16.mxu0 %v1406
    %1823 = vmatpush2.bf16.msra.mxu0 %v1405
    %1824 = vmatprep.subr.bf16.mxu0 %v1402
    %1825 = vmatpush2.bf16.msra.mxu0 %v1401
    %1826 = vmatprep.subr.bf16.mxu0 %v1398
    %1827 = vmatpush2.bf16.msra.mxu0 %v1397
    %1828 = vmatprep.subr.bf16.mxu0 %v1394
    %1829 = vmatpush2.bf16.msra.mxu0 %v1393
    %1830 = vmatprep.subr.bf16.mxu0 %v1390
    %1831 = vmatpush2.bf16.msra.mxu0 %v1389
    %1832 = vmatprep.subr.bf16.mxu0 %v1386
    %1833 = vmatpush2.bf16.msra.mxu0 %v1385
    %1834 = vmatprep.mubr.bf16.mxu0 %v384
    %1835 = vmatmul.mubr.bf16.gmra.mxu0 %v383
    %v1836 = vpop.f32.mrf.mxu0
    %v1837 = vadd.f32 %v1794, %v1836
    %v1838 = vpop.f32.mrf.mxu0
    %v1839 = vadd.f32 %v1796, %v1838
    %v1840 = vpop.f32.mrf.mxu0
    %v1841 = vadd.f32 %v1798, %v1840
    %v1842 = vpop.f32.mrf.mxu0
    %v1843 = vadd.f32 %v1800, %v1842
    %1844 = vdwg.mxu0
    %1845 = vmatprep.subr.bf16.mxu0 %v1192
    %1846 = vmatpush1.bf16.msra.mxu0 %v1191
    %1847 = vmatprep.subr.bf16.mxu0 %v1188
    %1848 = vmatpush1.bf16.msra.mxu0 %v1187
    %1849 = vmatprep.subr.bf16.mxu0 %v1184
    %1850 = vmatpush1.bf16.msra.mxu0 %v1183
    %1851 = vmatprep.subr.bf16.mxu0 %v1180
    %1852 = vmatpush1.bf16.msra.mxu0 %v1179
    %1853 = vmatprep.subr.bf16.mxu0 %v1176
    %1854 = vmatpush1.bf16.msra.mxu0 %v1175
    %1855 = vmatprep.subr.bf16.mxu0 %v1172
    %1856 = vmatpush1.bf16.msra.mxu0 %v1171
    %1857 = vmatprep.subr.bf16.mxu0 %v1168
    %1858 = vmatpush1.bf16.msra.mxu0 %v1167
    %1859 = vmatprep.subr.bf16.mxu0 %v1164
    %1860 = vmatpush1.bf16.msra.mxu0 %v1163
    %1861 = vmatprep.subr.bf16.mxu0 %v1224
    %1862 = vmatpush2.bf16.msra.mxu0 %v1223
    %1863 = vmatprep.subr.bf16.mxu0 %v1220
    %1864 = vmatpush2.bf16.msra.mxu0 %v1219
    %1865 = vmatprep.subr.bf16.mxu0 %v1216
    %1866 = vmatpush2.bf16.msra.mxu0 %v1215
    %1867 = vmatprep.subr.bf16.mxu0 %v1212
    %1868 = vmatpush2.bf16.msra.mxu0 %v1211
    %1869 = vmatprep.subr.bf16.mxu0 %v1208
    %1870 = vmatpush2.bf16.msra.mxu0 %v1207
    %1871 = vmatprep.subr.bf16.mxu0 %v1204
    %1872 = vmatpush2.bf16.msra.mxu0 %v1203
    %1873 = vmatprep.subr.bf16.mxu0 %v1200
    %1874 = vmatpush2.bf16.msra.mxu0 %v1199
    %1875 = vmatprep.subr.bf16.mxu0 %v1196
    %1876 = vmatpush2.bf16.msra.mxu0 %v1195
    %1877 = vmatprep.mubr.bf16.mxu0 %v378
    %1878 = vmatmul.mubr.bf16.gmra.mxu0 %v377
    %v1879 = vpop.f32.mrf.mxu0
    %v1880 = vadd.f32 %v344, %v1879
    %v1881 = vpop.f32.mrf.mxu0
    %v1882 = vadd.f32 %v348, %v1881
    %v1883 = vpop.f32.mrf.mxu0
    %v1884 = vadd.f32 %v344, %v1883
    %v1885 = vpop.f32.mrf.mxu0
    %v1886 = vadd.f32 %v348, %v1885
    %1887 = vdwg.mxu0
    %1888 = vmatprep.subr.bf16.mxu0 %v1256
    %1889 = vmatpush1.bf16.msra.mxu0 %v1255
    %1890 = vmatprep.subr.bf16.mxu0 %v1252
    %1891 = vmatpush1.bf16.msra.mxu0 %v1251
    %1892 = vmatprep.subr.bf16.mxu0 %v1248
    %1893 = vmatpush1.bf16.msra.mxu0 %v1247
    %1894 = vmatprep.subr.bf16.mxu0 %v1244
    %1895 = vmatpush1.bf16.msra.mxu0 %v1243
    %1896 = vmatprep.subr.bf16.mxu0 %v1240
    %1897 = vmatpush1.bf16.msra.mxu0 %v1239
    %1898 = vmatprep.subr.bf16.mxu0 %v1236
    %1899 = vmatpush1.bf16.msra.mxu0 %v1235
    %1900 = vmatprep.subr.bf16.mxu0 %v1232
    %1901 = vmatpush1.bf16.msra.mxu0 %v1231
    %1902 = vmatprep.subr.bf16.mxu0 %v1228
    %1903 = vmatpush1.bf16.msra.mxu0 %v1227
    %1904 = vmatprep.subr.bf16.mxu0 %v1288
    %1905 = vmatpush2.bf16.msra.mxu0 %v1287
    %1906 = vmatprep.subr.bf16.mxu0 %v1284
    %1907 = vmatpush2.bf16.msra.mxu0 %v1283
    %1908 = vmatprep.subr.bf16.mxu0 %v1280
    %1909 = vmatpush2.bf16.msra.mxu0 %v1279
    %1910 = vmatprep.subr.bf16.mxu0 %v1276
    %1911 = vmatpush2.bf16.msra.mxu0 %v1275
    %1912 = vmatprep.subr.bf16.mxu0 %v1272
    %1913 = vmatpush2.bf16.msra.mxu0 %v1271
    %1914 = vmatprep.subr.bf16.mxu0 %v1268
    %1915 = vmatpush2.bf16.msra.mxu0 %v1267
    %1916 = vmatprep.subr.bf16.mxu0 %v1264
    %1917 = vmatpush2.bf16.msra.mxu0 %v1263
    %1918 = vmatprep.subr.bf16.mxu0 %v1260
    %1919 = vmatpush2.bf16.msra.mxu0 %v1259
    %1920 = vmatprep.mubr.bf16.mxu0 %v380
    %1921 = vmatmul.mubr.bf16.gmra.mxu0 %v379
    %v1922 = vpop.f32.mrf.mxu0
    %v1923 = vadd.f32 %v1880, %v1922
    %v1924 = vpop.f32.mrf.mxu0
    %v1925 = vadd.f32 %v1882, %v1924
    %v1926 = vpop.f32.mrf.mxu0
    %v1927 = vadd.f32 %v1884, %v1926
    %v1928 = vpop.f32.mrf.mxu0
    %v1929 = vadd.f32 %v1886, %v1928
    %1930 = vdwg.mxu0
    %1931 = vmatprep.subr.bf16.mxu0 %v1320
    %1932 = vmatpush1.bf16.msra.mxu0 %v1319
    %1933 = vmatprep.subr.bf16.mxu0 %v1316
    %1934 = vmatpush1.bf16.msra.mxu0 %v1315
    %1935 = vmatprep.subr.bf16.mxu0 %v1312
    %1936 = vmatpush1.bf16.msra.mxu0 %v1311
    %1937 = vmatprep.subr.bf16.mxu0 %v1308
    %1938 = vmatpush1.bf16.msra.mxu0 %v1307
    %1939 = vmatprep.subr.bf16.mxu0 %v1304
    %1940 = vmatpush1.bf16.msra.mxu0 %v1303
    %1941 = vmatprep.subr.bf16.mxu0 %v1300
    %1942 = vmatpush1.bf16.msra.mxu0 %v1299
    %1943 = vmatprep.subr.bf16.mxu0 %v1296
    %1944 = vmatpush1.bf16.msra.mxu0 %v1295
    %1945 = vmatprep.subr.bf16.mxu0 %v1292
    %1946 = vmatpush1.bf16.msra.mxu0 %v1291
    %1947 = vmatprep.subr.bf16.mxu0 %v1352
    %1948 = vmatpush2.bf16.msra.mxu0 %v1351
    %1949 = vmatprep.subr.bf16.mxu0 %v1348
    %1950 = vmatpush2.bf16.msra.mxu0 %v1347
    %1951 = vmatprep.subr.bf16.mxu0 %v1344
    %1952 = vmatpush2.bf16.msra.mxu0 %v1343
    %1953 = vmatprep.subr.bf16.mxu0 %v1340
    %1954 = vmatpush2.bf16.msra.mxu0 %v1339
    %1955 = vmatprep.subr.bf16.mxu0 %v1336
    %1956 = vmatpush2.bf16.msra.mxu0 %v1335
    %1957 = vmatprep.subr.bf16.mxu0 %v1332
    %1958 = vmatpush2.bf16.msra.mxu0 %v1331
    %1959 = vmatprep.subr.bf16.mxu0 %v1328
    %1960 = vmatpush2.bf16.msra.mxu0 %v1327
    %1961 = vmatprep.subr.bf16.mxu0 %v1324
    %1962 = vmatpush2.bf16.msra.mxu0 %v1323
    %1963 = vmatprep.mubr.bf16.mxu0 %v382
    %1964 = vmatmul.mubr.bf16.gmra.mxu0 %v381
    %v1965 = vpop.f32.mrf.mxu0
    %v1966 = vadd.f32 %v1923, %v1965
    %v1967 = vpop.f32.mrf.mxu0
    %v1968 = vadd.f32 %v1925, %v1967
    %v1969 = vpop.f32.mrf.mxu0
    %v1970 = vadd.f32 %v1927, %v1969
    %v1971 = vpop.f32.mrf.mxu0
    %v1972 = vadd.f32 %v1929, %v1971
    %1973 = vdwg.mxu0
    %1974 = vmatprep.subr.bf16.mxu0 %v1384
    %1975 = vmatpush1.bf16.msra.mxu0 %v1383
    %1976 = vmatprep.subr.bf16.mxu0 %v1380
    %1977 = vmatpush1.bf16.msra.mxu0 %v1379
    %1978 = vmatprep.subr.bf16.mxu0 %v1376
    %1979 = vmatpush1.bf16.msra.mxu0 %v1375
    %1980 = vmatprep.subr.bf16.mxu0 %v1372
    %1981 = vmatpush1.bf16.msra.mxu0 %v1371
    %1982 = vmatprep.subr.bf16.mxu0 %v1368
    %1983 = vmatpush1.bf16.msra.mxu0 %v1367
    %1984 = vmatprep.subr.bf16.mxu0 %v1364
    %1985 = vmatpush1.bf16.msra.mxu0 %v1363
    %1986 = vmatprep.subr.bf16.mxu0 %v1360
    %1987 = vmatpush1.bf16.msra.mxu0 %v1359
    %1988 = vmatprep.subr.bf16.mxu0 %v1356
    %1989 = vmatpush1.bf16.msra.mxu0 %v1355
    %1990 = vmatprep.subr.bf16.mxu0 %v1416
    %1991 = vmatpush2.bf16.msra.mxu0 %v1415
    %1992 = vmatprep.subr.bf16.mxu0 %v1412
    %1993 = vmatpush2.bf16.msra.mxu0 %v1411
    %1994 = vmatprep.subr.bf16.mxu0 %v1408
    %1995 = vmatpush2.bf16.msra.mxu0 %v1407
    %1996 = vmatprep.subr.bf16.mxu0 %v1404
    %1997 = vmatpush2.bf16.msra.mxu0 %v1403
    %1998 = vmatprep.subr.bf16.mxu0 %v1400
    %1999 = vmatpush2.bf16.msra.mxu0 %v1399
    %2000 = vmatprep.subr.bf16.mxu0 %v1396
    %2001 = vmatpush2.bf16.msra.mxu0 %v1395
    %2002 = vmatprep.subr.bf16.mxu0 %v1392
    %2003 = vmatpush2.bf16.msra.mxu0 %v1391
    %2004 = vmatprep.subr.bf16.mxu0 %v1388
    %2005 = vmatpush2.bf16.msra.mxu0 %v1387
    %2006 = vmatprep.mubr.bf16.mxu0 %v384
    %2007 = vmatmul.mubr.bf16.gmra.mxu0 %v383
    %v2008 = vpop.f32.mrf.mxu0
    %v2009 = vadd.f32 %v1966, %v2008
    %v2010 = vpop.f32.mrf.mxu0
    %v2011 = vadd.f32 %v1968, %v2010
    %v2012 = vpop.f32.mrf.mxu0
    %v2013 = vadd.f32 %v1970, %v2012
    %v2014 = vpop.f32.mrf.mxu0
    %v2015 = vadd.f32 %v1972, %v2014
    %2016 = vdwg.mxu0
    %v2017 = vmax.f32 %v1837, 0.0
    %v2018 = vmax.f32 %v1839, 0.0
    %v2019 = vmax.f32 %v2009, 0.0
    %v2020 = vmax.f32 %v2011, 0.0
    %v2021 = vmax.f32 %v1841, 0.0
    %v2022 = vmax.f32 %v1843, 0.0
    %v2023 = vmax.f32 %v2013, 0.0
    %v2024 = vmax.f32 %v2015, 0.0
    %v2025 = vld [vmem:[#allocation5] sm:$0xff]
    %v2026 = vld [vmem:[#allocation5 + $0x8] sm:$0xff]
    %v2027 = vld [vmem:[#allocation5 + $0x10] sm:$0xff]
    %v2028 = vld [vmem:[#allocation5 + $0x18] sm:$0xff]
    %v2029 = vld [vmem:[#allocation5 + $0x20] sm:$0xff]
    %v2030 = vld [vmem:[#allocation5 + $0x28] sm:$0xff]
    %v2031 = vld [vmem:[#allocation5 + $0x30] sm:$0xff]
    %v2032 = vld [vmem:[#allocation5 + $0x38] sm:$0xff]
    %v2033 = vld [vmem:[#allocation5 + $0x40] sm:$0xff]
    %v2034 = vld [vmem:[#allocation5 + $0x48] sm:$0xff]
    %v2035 = vld [vmem:[#allocation5 + $0x50] sm:$0xff]
    %v2036 = vld [vmem:[#allocation5 + $0x58] sm:$0xff]
    %v2037 = vld [vmem:[#allocation5 + $0x60] sm:$0xff]
    %v2038 = vld [vmem:[#allocation5 + $0x68] sm:$0xff]
    %v2039 = vld [vmem:[#allocation5 + $0x70] sm:$0xff]
    %v2040 = vld [vmem:[#allocation5 + $0x78] sm:$0xff]
    %v2041 = vld [vmem:[#allocation5 + $0x80] sm:$0xff]
    %v2042 = vld [vmem:[#allocation5 + $0x88] sm:$0xff]
    %v2043 = vld [vmem:[#allocation5 + $0x90] sm:$0xff]
    %v2044 = vld [vmem:[#allocation5 + $0x98] sm:$0xff]
    %v2045 = vld [vmem:[#allocation5 + $0xa0] sm:$0xff]
    %v2046 = vld [vmem:[#allocation5 + $0xa8] sm:$0xff]
    %v2047 = vld [vmem:[#allocation5 + $0xb0] sm:$0xff]
    %v2048 = vld [vmem:[#allocation5 + $0xb8] sm:$0xff]
    %v2049 = vld [vmem:[#allocation5 + $0xc0] sm:$0xff]
    %v2050 = vld [vmem:[#allocation5 + $0xc8] sm:$0xff]
    %v2051 = vld [vmem:[#allocation5 + $0xd0] sm:$0xff]
    %v2052 = vld [vmem:[#allocation5 + $0xd8] sm:$0xff]
    %v2053 = vld [vmem:[#allocation5 + $0xe0] sm:$0xff]
    %v2054 = vld [vmem:[#allocation5 + $0xe8] sm:$0xff]
    %v2055 = vld [vmem:[#allocation5 + $0xf0] sm:$0xff]
    %v2056 = vld [vmem:[#allocation5 + $0xf8] sm:$0xff]
    %v2057 = vld [vmem:[#allocation5 + $0x100] sm:$0xff]
    %v2058 = vld [vmem:[#allocation5 + $0x108] sm:$0xff]
    %v2059 = vld [vmem:[#allocation5 + $0x110] sm:$0xff]
    %v2060 = vld [vmem:[#allocation5 + $0x118] sm:$0xff]
    %v2061 = vld [vmem:[#allocation5 + $0x120] sm:$0xff]
    %v2062 = vld [vmem:[#allocation5 + $0x128] sm:$0xff]
    %v2063 = vld [vmem:[#allocation5 + $0x130] sm:$0xff]
    %v2064 = vld [vmem:[#allocation5 + $0x138] sm:$0xff]
    %v2065 = vld [vmem:[#allocation5 + $0x140] sm:$0xff]
    %v2066 = vld [vmem:[#allocation5 + $0x148] sm:$0xff]
    %v2067 = vld [vmem:[#allocation5 + $0x150] sm:$0xff]
    %v2068 = vld [vmem:[#allocation5 + $0x158] sm:$0xff]
    %v2069 = vld [vmem:[#allocation5 + $0x160] sm:$0xff]
    %v2070 = vld [vmem:[#allocation5 + $0x168] sm:$0xff]
    %v2071 = vld [vmem:[#allocation5 + $0x170] sm:$0xff]
    %v2072 = vld [vmem:[#allocation5 + $0x178] sm:$0xff]
    %v2073 = vld [vmem:[#allocation5 + $0x180] sm:$0xff]
    %v2074 = vld [vmem:[#allocation5 + $0x188] sm:$0xff]
    %v2075 = vld [vmem:[#allocation5 + $0x190] sm:$0xff]
    %v2076 = vld [vmem:[#allocation5 + $0x198] sm:$0xff]
    %v2077 = vld [vmem:[#allocation5 + $0x1a0] sm:$0xff]
    %v2078 = vld [vmem:[#allocation5 + $0x1a8] sm:$0xff]
    %v2079 = vld [vmem:[#allocation5 + $0x1b0] sm:$0xff]
    %v2080 = vld [vmem:[#allocation5 + $0x1b8] sm:$0xff]
    %v2081 = vld [vmem:[#allocation5 + $0x1c0] sm:$0xff]
    %v2082 = vld [vmem:[#allocation5 + $0x1c8] sm:$0xff]
    %v2083 = vld [vmem:[#allocation5 + $0x1d0] sm:$0xff]
    %v2084 = vld [vmem:[#allocation5 + $0x1d8] sm:$0xff]
    %v2085 = vld [vmem:[#allocation5 + $0x1e0] sm:$0xff]
    %v2086 = vld [vmem:[#allocation5 + $0x1e8] sm:$0xff]
    %v2087 = vld [vmem:[#allocation5 + $0x1f0] sm:$0xff]
    %v2088 = vld [vmem:[#allocation5 + $0x1f8] sm:$0xff]
    %v2089 = vld [vmem:[#allocation5 + $0x200] sm:$0xff]
    %v2090 = vld [vmem:[#allocation5 + $0x208] sm:$0xff]
    %v2091 = vld [vmem:[#allocation5 + $0x210] sm:$0xff]
    %v2092 = vld [vmem:[#allocation5 + $0x218] sm:$0xff]
    %v2093 = vld [vmem:[#allocation5 + $0x220] sm:$0xff]
    %v2094 = vld [vmem:[#allocation5 + $0x228] sm:$0xff]
    %v2095 = vld [vmem:[#allocation5 + $0x230] sm:$0xff]
    %v2096 = vld [vmem:[#allocation5 + $0x238] sm:$0xff]
    %v2097 = vld [vmem:[#allocation5 + $0x240] sm:$0xff]
    %v2098 = vld [vmem:[#allocation5 + $0x248] sm:$0xff]
    %v2099 = vld [vmem:[#allocation5 + $0x250] sm:$0xff]
    %v2100 = vld [vmem:[#allocation5 + $0x258] sm:$0xff]
    %v2101 = vld [vmem:[#allocation5 + $0x260] sm:$0xff]
    %v2102 = vld [vmem:[#allocation5 + $0x268] sm:$0xff]
    %v2103 = vld [vmem:[#allocation5 + $0x270] sm:$0xff]
    %v2104 = vld [vmem:[#allocation5 + $0x278] sm:$0xff]
    %v2105 = vld [vmem:[#allocation5 + $0x280] sm:$0xff]
    %v2106 = vld [vmem:[#allocation5 + $0x288] sm:$0xff]
    %v2107 = vld [vmem:[#allocation5 + $0x290] sm:$0xff]
    %v2108 = vld [vmem:[#allocation5 + $0x298] sm:$0xff]
    %v2109 = vld [vmem:[#allocation5 + $0x2a0] sm:$0xff]
    %v2110 = vld [vmem:[#allocation5 + $0x2a8] sm:$0xff]
    %v2111 = vld [vmem:[#allocation5 + $0x2b0] sm:$0xff]
    %v2112 = vld [vmem:[#allocation5 + $0x2b8] sm:$0xff]
    %v2113 = vld [vmem:[#allocation5 + $0x2c0] sm:$0xff]
    %v2114 = vld [vmem:[#allocation5 + $0x2c8] sm:$0xff]
    %v2115 = vld [vmem:[#allocation5 + $0x2d0] sm:$0xff]
    %v2116 = vld [vmem:[#allocation5 + $0x2d8] sm:$0xff]
    %v2117 = vld [vmem:[#allocation5 + $0x2e0] sm:$0xff]
    %v2118 = vld [vmem:[#allocation5 + $0x2e8] sm:$0xff]
    %v2119 = vld [vmem:[#allocation5 + $0x2f0] sm:$0xff]
    %v2120 = vld [vmem:[#allocation5 + $0x2f8] sm:$0xff]
    %v2121 = vld [vmem:[#allocation5 + $0x300] sm:$0xff]
    %v2122 = vld [vmem:[#allocation5 + $0x308] sm:$0xff]
    %v2123 = vld [vmem:[#allocation5 + $0x310] sm:$0xff]
    %v2124 = vld [vmem:[#allocation5 + $0x318] sm:$0xff]
    %v2125 = vld [vmem:[#allocation5 + $0x320] sm:$0xff]
    %v2126 = vld [vmem:[#allocation5 + $0x328] sm:$0xff]
    %v2127 = vld [vmem:[#allocation5 + $0x330] sm:$0xff]
    %v2128 = vld [vmem:[#allocation5 + $0x338] sm:$0xff]
    %v2129 = vld [vmem:[#allocation5 + $0x340] sm:$0xff]
    %v2130 = vld [vmem:[#allocation5 + $0x348] sm:$0xff]
    %v2131 = vld [vmem:[#allocation5 + $0x350] sm:$0xff]
    %v2132 = vld [vmem:[#allocation5 + $0x358] sm:$0xff]
    %v2133 = vld [vmem:[#allocation5 + $0x360] sm:$0xff]
    %v2134 = vld [vmem:[#allocation5 + $0x368] sm:$0xff]
    %v2135 = vld [vmem:[#allocation5 + $0x370] sm:$0xff]
    %v2136 = vld [vmem:[#allocation5 + $0x378] sm:$0xff]
    %v2137 = vld [vmem:[#allocation5 + $0x380] sm:$0xff]
    %v2138 = vld [vmem:[#allocation5 + $0x388] sm:$0xff]
    %v2139 = vld [vmem:[#allocation5 + $0x390] sm:$0xff]
    %v2140 = vld [vmem:[#allocation5 + $0x398] sm:$0xff]
    %v2141 = vld [vmem:[#allocation5 + $0x3a0] sm:$0xff]
    %v2142 = vld [vmem:[#allocation5 + $0x3a8] sm:$0xff]
    %v2143 = vld [vmem:[#allocation5 + $0x3b0] sm:$0xff]
    %v2144 = vld [vmem:[#allocation5 + $0x3b8] sm:$0xff]
    %v2145 = vld [vmem:[#allocation5 + $0x3c0] sm:$0xff]
    %v2146 = vld [vmem:[#allocation5 + $0x3c8] sm:$0xff]
    %v2147 = vld [vmem:[#allocation5 + $0x3d0] sm:$0xff]
    %v2148 = vld [vmem:[#allocation5 + $0x3d8] sm:$0xff]
    %v2149 = vld [vmem:[#allocation5 + $0x3e0] sm:$0xff]
    %v2150 = vld [vmem:[#allocation5 + $0x3e8] sm:$0xff]
    %v2151 = vld [vmem:[#allocation5 + $0x3f0] sm:$0xff]
    %v2152 = vld [vmem:[#allocation5 + $0x3f8] sm:$0xff]
    %v2153 = vld [vmem:[#allocation5 + $0x400] sm:$0xff]
    %v2154 = vld [vmem:[#allocation5 + $0x408] sm:$0xff]
    %v2155 = vld [vmem:[#allocation5 + $0x410] sm:$0xff]
    %v2156 = vld [vmem:[#allocation5 + $0x418] sm:$0xff]
    %v2157 = vld [vmem:[#allocation5 + $0x420] sm:$0xff]
    %v2158 = vld [vmem:[#allocation5 + $0x428] sm:$0xff]
    %v2159 = vld [vmem:[#allocation5 + $0x430] sm:$0xff]
    %v2160 = vld [vmem:[#allocation5 + $0x438] sm:$0xff]
    %v2161 = vld [vmem:[#allocation5 + $0x440] sm:$0xff]
    %v2162 = vld [vmem:[#allocation5 + $0x448] sm:$0xff]
    %v2163 = vld [vmem:[#allocation5 + $0x450] sm:$0xff]
    %v2164 = vld [vmem:[#allocation5 + $0x458] sm:$0xff]
    %v2165 = vld [vmem:[#allocation5 + $0x460] sm:$0xff]
    %v2166 = vld [vmem:[#allocation5 + $0x468] sm:$0xff]
    %v2167 = vld [vmem:[#allocation5 + $0x470] sm:$0xff]
    %v2168 = vld [vmem:[#allocation5 + $0x478] sm:$0xff]
    %v2169 = vld [vmem:[#allocation5 + $0x480] sm:$0xff]
    %v2170 = vld [vmem:[#allocation5 + $0x488] sm:$0xff]
    %v2171 = vld [vmem:[#allocation5 + $0x490] sm:$0xff]
    %v2172 = vld [vmem:[#allocation5 + $0x498] sm:$0xff]
    %v2173 = vld [vmem:[#allocation5 + $0x4a0] sm:$0xff]
    %v2174 = vld [vmem:[#allocation5 + $0x4a8] sm:$0xff]
    %v2175 = vld [vmem:[#allocation5 + $0x4b0] sm:$0xff]
    %v2176 = vld [vmem:[#allocation5 + $0x4b8] sm:$0xff]
    %v2177 = vld [vmem:[#allocation5 + $0x4c0] sm:$0xff]
    %v2178 = vld [vmem:[#allocation5 + $0x4c8] sm:$0xff]
    %v2179 = vld [vmem:[#allocation5 + $0x4d0] sm:$0xff]
    %v2180 = vld [vmem:[#allocation5 + $0x4d8] sm:$0xff]
    %v2181 = vld [vmem:[#allocation5 + $0x4e0] sm:$0xff]
    %v2182 = vld [vmem:[#allocation5 + $0x4e8] sm:$0xff]
    %v2183 = vld [vmem:[#allocation5 + $0x4f0] sm:$0xff]
    %v2184 = vld [vmem:[#allocation5 + $0x4f8] sm:$0xff]
    %v2185 = vld [vmem:[#allocation5 + $0x500] sm:$0xff]
    %v2186 = vld [vmem:[#allocation5 + $0x508] sm:$0xff]
    %v2187 = vld [vmem:[#allocation5 + $0x510] sm:$0xff]
    %v2188 = vld [vmem:[#allocation5 + $0x518] sm:$0xff]
    %v2189 = vld [vmem:[#allocation5 + $0x520] sm:$0xff]
    %v2190 = vld [vmem:[#allocation5 + $0x528] sm:$0xff]
    %v2191 = vld [vmem:[#allocation5 + $0x530] sm:$0xff]
    %v2192 = vld [vmem:[#allocation5 + $0x538] sm:$0xff]
    %v2193 = vld [vmem:[#allocation5 + $0x540] sm:$0xff]
    %v2194 = vld [vmem:[#allocation5 + $0x548] sm:$0xff]
    %v2195 = vld [vmem:[#allocation5 + $0x550] sm:$0xff]
    %v2196 = vld [vmem:[#allocation5 + $0x558] sm:$0xff]
    %v2197 = vld [vmem:[#allocation5 + $0x560] sm:$0xff]
    %v2198 = vld [vmem:[#allocation5 + $0x568] sm:$0xff]
    %v2199 = vld [vmem:[#allocation5 + $0x570] sm:$0xff]
    %v2200 = vld [vmem:[#allocation5 + $0x578] sm:$0xff]
    %v2201 = vld [vmem:[#allocation5 + $0x580] sm:$0xff]
    %v2202 = vld [vmem:[#allocation5 + $0x588] sm:$0xff]
    %v2203 = vld [vmem:[#allocation5 + $0x590] sm:$0xff]
    %v2204 = vld [vmem:[#allocation5 + $0x598] sm:$0xff]
    %v2205 = vld [vmem:[#allocation5 + $0x5a0] sm:$0xff]
    %v2206 = vld [vmem:[#allocation5 + $0x5a8] sm:$0xff]
    %v2207 = vld [vmem:[#allocation5 + $0x5b0] sm:$0xff]
    %v2208 = vld [vmem:[#allocation5 + $0x5b8] sm:$0xff]
    %v2209 = vld [vmem:[#allocation5 + $0x5c0] sm:$0xff]
    %v2210 = vld [vmem:[#allocation5 + $0x5c8] sm:$0xff]
    %v2211 = vld [vmem:[#allocation5 + $0x5d0] sm:$0xff]
    %v2212 = vld [vmem:[#allocation5 + $0x5d8] sm:$0xff]
    %v2213 = vld [vmem:[#allocation5 + $0x5e0] sm:$0xff]
    %v2214 = vld [vmem:[#allocation5 + $0x5e8] sm:$0xff]
    %v2215 = vld [vmem:[#allocation5 + $0x5f0] sm:$0xff]
    %v2216 = vld [vmem:[#allocation5 + $0x5f8] sm:$0xff]
    %v2217 = vld [vmem:[#allocation5 + $0x600] sm:$0xff]
    %v2218 = vld [vmem:[#allocation5 + $0x608] sm:$0xff]
    %v2219 = vld [vmem:[#allocation5 + $0x610] sm:$0xff]
    %v2220 = vld [vmem:[#allocation5 + $0x618] sm:$0xff]
    %v2221 = vld [vmem:[#allocation5 + $0x620] sm:$0xff]
    %v2222 = vld [vmem:[#allocation5 + $0x628] sm:$0xff]
    %v2223 = vld [vmem:[#allocation5 + $0x630] sm:$0xff]
    %v2224 = vld [vmem:[#allocation5 + $0x638] sm:$0xff]
    %v2225 = vld [vmem:[#allocation5 + $0x640] sm:$0xff]
    %v2226 = vld [vmem:[#allocation5 + $0x648] sm:$0xff]
    %v2227 = vld [vmem:[#allocation5 + $0x650] sm:$0xff]
    %v2228 = vld [vmem:[#allocation5 + $0x658] sm:$0xff]
    %v2229 = vld [vmem:[#allocation5 + $0x660] sm:$0xff]
    %v2230 = vld [vmem:[#allocation5 + $0x668] sm:$0xff]
    %v2231 = vld [vmem:[#allocation5 + $0x670] sm:$0xff]
    %v2232 = vld [vmem:[#allocation5 + $0x678] sm:$0xff]
    %v2233 = vld [vmem:[#allocation5 + $0x680] sm:$0xff]
    %v2234 = vld [vmem:[#allocation5 + $0x688] sm:$0xff]
    %v2235 = vld [vmem:[#allocation5 + $0x690] sm:$0xff]
    %v2236 = vld [vmem:[#allocation5 + $0x698] sm:$0xff]
    %v2237 = vld [vmem:[#allocation5 + $0x6a0] sm:$0xff]
    %v2238 = vld [vmem:[#allocation5 + $0x6a8] sm:$0xff]
    %v2239 = vld [vmem:[#allocation5 + $0x6b0] sm:$0xff]
    %v2240 = vld [vmem:[#allocation5 + $0x6b8] sm:$0xff]
    %v2241 = vld [vmem:[#allocation5 + $0x6c0] sm:$0xff]
    %v2242 = vld [vmem:[#allocation5 + $0x6c8] sm:$0xff]
    %v2243 = vld [vmem:[#allocation5 + $0x6d0] sm:$0xff]
    %v2244 = vld [vmem:[#allocation5 + $0x6d8] sm:$0xff]
    %v2245 = vld [vmem:[#allocation5 + $0x6e0] sm:$0xff]
    %v2246 = vld [vmem:[#allocation5 + $0x6e8] sm:$0xff]
    %v2247 = vld [vmem:[#allocation5 + $0x6f0] sm:$0xff]
    %v2248 = vld [vmem:[#allocation5 + $0x6f8] sm:$0xff]
    %v2249 = vld [vmem:[#allocation5 + $0x700] sm:$0xff]
    %v2250 = vld [vmem:[#allocation5 + $0x708] sm:$0xff]
    %v2251 = vld [vmem:[#allocation5 + $0x710] sm:$0xff]
    %v2252 = vld [vmem:[#allocation5 + $0x718] sm:$0xff]
    %v2253 = vld [vmem:[#allocation5 + $0x720] sm:$0xff]
    %v2254 = vld [vmem:[#allocation5 + $0x728] sm:$0xff]
    %v2255 = vld [vmem:[#allocation5 + $0x730] sm:$0xff]
    %v2256 = vld [vmem:[#allocation5 + $0x738] sm:$0xff]
    %v2257 = vld [vmem:[#allocation5 + $0x740] sm:$0xff]
    %v2258 = vld [vmem:[#allocation5 + $0x748] sm:$0xff]
    %v2259 = vld [vmem:[#allocation5 + $0x750] sm:$0xff]
    %v2260 = vld [vmem:[#allocation5 + $0x758] sm:$0xff]
    %v2261 = vld [vmem:[#allocation5 + $0x760] sm:$0xff]
    %v2262 = vld [vmem:[#allocation5 + $0x768] sm:$0xff]
    %v2263 = vld [vmem:[#allocation5 + $0x770] sm:$0xff]
    %v2264 = vld [vmem:[#allocation5 + $0x778] sm:$0xff]
    %v2265 = vld [vmem:[#allocation5 + $0x780] sm:$0xff]
    %v2266 = vld [vmem:[#allocation5 + $0x788] sm:$0xff]
    %v2267 = vld [vmem:[#allocation5 + $0x790] sm:$0xff]
    %v2268 = vld [vmem:[#allocation5 + $0x798] sm:$0xff]
    %v2269 = vld [vmem:[#allocation5 + $0x7a0] sm:$0xff]
    %v2270 = vld [vmem:[#allocation5 + $0x7a8] sm:$0xff]
    %v2271 = vld [vmem:[#allocation5 + $0x7b0] sm:$0xff]
    %v2272 = vld [vmem:[#allocation5 + $0x7b8] sm:$0xff]
    %v2273 = vld [vmem:[#allocation5 + $0x7c0] sm:$0xff]
    %v2274 = vld [vmem:[#allocation5 + $0x7c8] sm:$0xff]
    %v2275 = vld [vmem:[#allocation5 + $0x7d0] sm:$0xff]
    %v2276 = vld [vmem:[#allocation5 + $0x7d8] sm:$0xff]
    %v2277 = vld [vmem:[#allocation5 + $0x7e0] sm:$0xff]
    %v2278 = vld [vmem:[#allocation5 + $0x7e8] sm:$0xff]
    %v2279 = vld [vmem:[#allocation5 + $0x7f0] sm:$0xff]
    %v2280 = vld [vmem:[#allocation5 + $0x7f8] sm:$0xff]
    %v2281 = vld [vmem:[%s4] sm:$0xf]
    %v2283 = vlaneseq
    %v2284 = vshrl.u32 %v2283, 7
    %v2285 = vsub.s32 0, %v2284
    %v2286 = vrot.slane %v2281, %v2285
    %v2287 = vlaneseq
    %v2288 = vshrl.u32 %v2287, 7
    %v2289 = vsub.s32 1, %v2288
    %v2290 = vrot.slane %v2281, %v2289
    %v2291 = vlaneseq
    %v2292 = vshrl.u32 %v2291, 7
    %v2293 = vsub.s32 2, %v2292
    %v2294 = vrot.slane %v2281, %v2293
    %v2295 = vlaneseq
    %v2296 = vshrl.u32 %v2295, 7
    %v2297 = vsub.s32 3, %v2296
    %v2298 = vrot.slane %v2281, %v2297
    %v2311 = vunpack.c.l.b16 %v67
    %v2312 = vunpack.c.h.b16 %v67
    %v2313 = vunpack.c.l.b16 %v68
    %v2314 = vunpack.c.h.b16 %v68
    %v2315 = vunpack.c.l.b16 %v69
    %v2316 = vunpack.c.h.b16 %v69
    %v2317 = vunpack.c.l.b16 %v70
    %v2318 = vunpack.c.h.b16 %v70
    %v2319 = vunpack.c.l.b16 %v71
    %v2320 = vunpack.c.h.b16 %v71
    %v2321 = vunpack.c.l.b16 %v72
    %v2322 = vunpack.c.h.b16 %v72
    %v2323 = vunpack.c.l.b16 %v73
    %v2324 = vunpack.c.h.b16 %v73
    %v2325 = vunpack.c.l.b16 %v74
    %v2326 = vunpack.c.h.b16 %v74
    %v2327 = vpack.c.b16 %v2319, %v2311
    %v2328 = vpack.c.b16 %v2320, %v2312
    %v2329 = vpack.c.b16 %v2321, %v2313
    %v2330 = vpack.c.b16 %v2322, %v2314
    %v2331 = vpack.c.b16 %v2323, %v2315
    %v2332 = vpack.c.b16 %v2324, %v2316
    %v2333 = vpack.c.b16 %v2325, %v2317
    %v2334 = vpack.c.b16 %v2326, %v2318
    %v2599 = vunpack.c.l.b16 %v2025
    %v2600 = vunpack.c.h.b16 %v2025
    %v2601 = vunpack.c.l.b16 %v2026
    %v2602 = vunpack.c.h.b16 %v2026
    %v2603 = vunpack.c.l.b16 %v2027
    %v2604 = vunpack.c.h.b16 %v2027
    %v2605 = vunpack.c.l.b16 %v2028
    %v2606 = vunpack.c.h.b16 %v2028
    %v2607 = vunpack.c.l.b16 %v2029
    %v2608 = vunpack.c.h.b16 %v2029
    %v2609 = vunpack.c.l.b16 %v2030
    %v2610 = vunpack.c.h.b16 %v2030
    %v2611 = vunpack.c.l.b16 %v2031
    %v2612 = vunpack.c.h.b16 %v2031
    %v2613 = vunpack.c.l.b16 %v2032
    %v2614 = vunpack.c.h.b16 %v2032
    %v2615 = vunpack.c.l.b16 %v2033
    %v2616 = vunpack.c.h.b16 %v2033
    %v2617 = vunpack.c.l.b16 %v2034
    %v2618 = vunpack.c.h.b16 %v2034
    %v2619 = vunpack.c.l.b16 %v2035
    %v2620 = vunpack.c.h.b16 %v2035
    %v2621 = vunpack.c.l.b16 %v2036
    %v2622 = vunpack.c.h.b16 %v2036
    %v2623 = vunpack.c.l.b16 %v2037
    %v2624 = vunpack.c.h.b16 %v2037
    %v2625 = vunpack.c.l.b16 %v2038
    %v2626 = vunpack.c.h.b16 %v2038
    %v2627 = vunpack.c.l.b16 %v2039
    %v2628 = vunpack.c.h.b16 %v2039
    %v2629 = vunpack.c.l.b16 %v2040
    %v2630 = vunpack.c.h.b16 %v2040
    %v2631 = vunpack.c.l.b16 %v2041
    %v2632 = vunpack.c.h.b16 %v2041
    %v2633 = vunpack.c.l.b16 %v2042
    %v2634 = vunpack.c.h.b16 %v2042
    %v2635 = vunpack.c.l.b16 %v2043
    %v2636 = vunpack.c.h.b16 %v2043
    %v2637 = vunpack.c.l.b16 %v2044
    %v2638 = vunpack.c.h.b16 %v2044
    %v2639 = vunpack.c.l.b16 %v2045
    %v2640 = vunpack.c.h.b16 %v2045
    %v2641 = vunpack.c.l.b16 %v2046
    %v2642 = vunpack.c.h.b16 %v2046
    %v2643 = vunpack.c.l.b16 %v2047
    %v2644 = vunpack.c.h.b16 %v2047
    %v2645 = vunpack.c.l.b16 %v2048
    %v2646 = vunpack.c.h.b16 %v2048
    %v2647 = vunpack.c.l.b16 %v2049
    %v2648 = vunpack.c.h.b16 %v2049
    %v2649 = vunpack.c.l.b16 %v2050
    %v2650 = vunpack.c.h.b16 %v2050
    %v2651 = vunpack.c.l.b16 %v2051
    %v2652 = vunpack.c.h.b16 %v2051
    %v2653 = vunpack.c.l.b16 %v2052
    %v2654 = vunpack.c.h.b16 %v2052
    %v2655 = vunpack.c.l.b16 %v2053
    %v2656 = vunpack.c.h.b16 %v2053
    %v2657 = vunpack.c.l.b16 %v2054
    %v2658 = vunpack.c.h.b16 %v2054
    %v2659 = vunpack.c.l.b16 %v2055
    %v2660 = vunpack.c.h.b16 %v2055
    %v2661 = vunpack.c.l.b16 %v2056
    %v2662 = vunpack.c.h.b16 %v2056
    %v2663 = vunpack.c.l.b16 %v2057
    %v2664 = vunpack.c.h.b16 %v2057
    %v2665 = vunpack.c.l.b16 %v2058
    %v2666 = vunpack.c.h.b16 %v2058
    %v2667 = vunpack.c.l.b16 %v2059
    %v2668 = vunpack.c.h.b16 %v2059
    %v2669 = vunpack.c.l.b16 %v2060
    %v2670 = vunpack.c.h.b16 %v2060
    %v2671 = vunpack.c.l.b16 %v2061
    %v2672 = vunpack.c.h.b16 %v2061
    %v2673 = vunpack.c.l.b16 %v2062
    %v2674 = vunpack.c.h.b16 %v2062
    %v2675 = vunpack.c.l.b16 %v2063
    %v2676 = vunpack.c.h.b16 %v2063
    %v2677 = vunpack.c.l.b16 %v2064
    %v2678 = vunpack.c.h.b16 %v2064
    %v2679 = vunpack.c.l.b16 %v2065
    %v2680 = vunpack.c.h.b16 %v2065
    %v2681 = vunpack.c.l.b16 %v2066
    %v2682 = vunpack.c.h.b16 %v2066
    %v2683 = vunpack.c.l.b16 %v2067
    %v2684 = vunpack.c.h.b16 %v2067
    %v2685 = vunpack.c.l.b16 %v2068
    %v2686 = vunpack.c.h.b16 %v2068
    %v2687 = vunpack.c.l.b16 %v2069
    %v2688 = vunpack.c.h.b16 %v2069
    %v2689 = vunpack.c.l.b16 %v2070
    %v2690 = vunpack.c.h.b16 %v2070
    %v2691 = vunpack.c.l.b16 %v2071
    %v2692 = vunpack.c.h.b16 %v2071
    %v2693 = vunpack.c.l.b16 %v2072
    %v2694 = vunpack.c.h.b16 %v2072
    %v2695 = vunpack.c.l.b16 %v2073
    %v2696 = vunpack.c.h.b16 %v2073
    %v2697 = vunpack.c.l.b16 %v2074
    %v2698 = vunpack.c.h.b16 %v2074
    %v2699 = vunpack.c.l.b16 %v2075
    %v2700 = vunpack.c.h.b16 %v2075
    %v2701 = vunpack.c.l.b16 %v2076
    %v2702 = vunpack.c.h.b16 %v2076
    %v2703 = vunpack.c.l.b16 %v2077
    %v2704 = vunpack.c.h.b16 %v2077
    %v2705 = vunpack.c.l.b16 %v2078
    %v2706 = vunpack.c.h.b16 %v2078
    %v2707 = vunpack.c.l.b16 %v2079
    %v2708 = vunpack.c.h.b16 %v2079
    %v2709 = vunpack.c.l.b16 %v2080
    %v2710 = vunpack.c.h.b16 %v2080
    %v2711 = vunpack.c.l.b16 %v2081
    %v2712 = vunpack.c.h.b16 %v2081
    %v2713 = vunpack.c.l.b16 %v2082
    %v2714 = vunpack.c.h.b16 %v2082
    %v2715 = vunpack.c.l.b16 %v2083
    %v2716 = vunpack.c.h.b16 %v2083
    %v2717 = vunpack.c.l.b16 %v2084
    %v2718 = vunpack.c.h.b16 %v2084
    %v2719 = vunpack.c.l.b16 %v2085
    %v2720 = vunpack.c.h.b16 %v2085
    %v2721 = vunpack.c.l.b16 %v2086
    %v2722 = vunpack.c.h.b16 %v2086
    %v2723 = vunpack.c.l.b16 %v2087
    %v2724 = vunpack.c.h.b16 %v2087
    %v2725 = vunpack.c.l.b16 %v2088
    %v2726 = vunpack.c.h.b16 %v2088
    %v2727 = vunpack.c.l.b16 %v2089
    %v2728 = vunpack.c.h.b16 %v2089
    %v2729 = vunpack.c.l.b16 %v2090
    %v2730 = vunpack.c.h.b16 %v2090
    %v2731 = vunpack.c.l.b16 %v2091
    %v2732 = vunpack.c.h.b16 %v2091
    %v2733 = vunpack.c.l.b16 %v2092
    %v2734 = vunpack.c.h.b16 %v2092
    %v2735 = vunpack.c.l.b16 %v2093
    %v2736 = vunpack.c.h.b16 %v2093
    %v2737 = vunpack.c.l.b16 %v2094
    %v2738 = vunpack.c.h.b16 %v2094
    %v2739 = vunpack.c.l.b16 %v2095
    %v2740 = vunpack.c.h.b16 %v2095
    %v2741 = vunpack.c.l.b16 %v2096
    %v2742 = vunpack.c.h.b16 %v2096
    %v2743 = vunpack.c.l.b16 %v2097
    %v2744 = vunpack.c.h.b16 %v2097
    %v2745 = vunpack.c.l.b16 %v2098
    %v2746 = vunpack.c.h.b16 %v2098
    %v2747 = vunpack.c.l.b16 %v2099
    %v2748 = vunpack.c.h.b16 %v2099
    %v2749 = vunpack.c.l.b16 %v2100
    %v2750 = vunpack.c.h.b16 %v2100
    %v2751 = vunpack.c.l.b16 %v2101
    %v2752 = vunpack.c.h.b16 %v2101
    %v2753 = vunpack.c.l.b16 %v2102
    %v2754 = vunpack.c.h.b16 %v2102
    %v2755 = vunpack.c.l.b16 %v2103
    %v2756 = vunpack.c.h.b16 %v2103
    %v2757 = vunpack.c.l.b16 %v2104
    %v2758 = vunpack.c.h.b16 %v2104
    %v2759 = vunpack.c.l.b16 %v2105
    %v2760 = vunpack.c.h.b16 %v2105
    %v2761 = vunpack.c.l.b16 %v2106
    %v2762 = vunpack.c.h.b16 %v2106
    %v2763 = vunpack.c.l.b16 %v2107
    %v2764 = vunpack.c.h.b16 %v2107
    %v2765 = vunpack.c.l.b16 %v2108
    %v2766 = vunpack.c.h.b16 %v2108
    %v2767 = vunpack.c.l.b16 %v2109
    %v2768 = vunpack.c.h.b16 %v2109
    %v2769 = vunpack.c.l.b16 %v2110
    %v2770 = vunpack.c.h.b16 %v2110
    %v2771 = vunpack.c.l.b16 %v2111
    %v2772 = vunpack.c.h.b16 %v2111
    %v2773 = vunpack.c.l.b16 %v2112
    %v2774 = vunpack.c.h.b16 %v2112
    %v2775 = vunpack.c.l.b16 %v2113
    %v2776 = vunpack.c.h.b16 %v2113
    %v2777 = vunpack.c.l.b16 %v2114
    %v2778 = vunpack.c.h.b16 %v2114
    %v2779 = vunpack.c.l.b16 %v2115
    %v2780 = vunpack.c.h.b16 %v2115
    %v2781 = vunpack.c.l.b16 %v2116
    %v2782 = vunpack.c.h.b16 %v2116
    %v2783 = vunpack.c.l.b16 %v2117
    %v2784 = vunpack.c.h.b16 %v2117
    %v2785 = vunpack.c.l.b16 %v2118
    %v2786 = vunpack.c.h.b16 %v2118
    %v2787 = vunpack.c.l.b16 %v2119
    %v2788 = vunpack.c.h.b16 %v2119
    %v2789 = vunpack.c.l.b16 %v2120
    %v2790 = vunpack.c.h.b16 %v2120
    %v2791 = vunpack.c.l.b16 %v2121
    %v2792 = vunpack.c.h.b16 %v2121
    %v2793 = vunpack.c.l.b16 %v2122
    %v2794 = vunpack.c.h.b16 %v2122
    %v2795 = vunpack.c.l.b16 %v2123
    %v2796 = vunpack.c.h.b16 %v2123
    %v2797 = vunpack.c.l.b16 %v2124
    %v2798 = vunpack.c.h.b16 %v2124
    %v2799 = vunpack.c.l.b16 %v2125
    %v2800 = vunpack.c.h.b16 %v2125
    %v2801 = vunpack.c.l.b16 %v2126
    %v2802 = vunpack.c.h.b16 %v2126
    %v2803 = vunpack.c.l.b16 %v2127
    %v2804 = vunpack.c.h.b16 %v2127
    %v2805 = vunpack.c.l.b16 %v2128
    %v2806 = vunpack.c.h.b16 %v2128
    %v2807 = vunpack.c.l.b16 %v2129
    %v2808 = vunpack.c.h.b16 %v2129
    %v2809 = vunpack.c.l.b16 %v2130
    %v2810 = vunpack.c.h.b16 %v2130
    %v2811 = vunpack.c.l.b16 %v2131
    %v2812 = vunpack.c.h.b16 %v2131
    %v2813 = vunpack.c.l.b16 %v2132
    %v2814 = vunpack.c.h.b16 %v2132
    %v2815 = vunpack.c.l.b16 %v2133
    %v2816 = vunpack.c.h.b16 %v2133
    %v2817 = vunpack.c.l.b16 %v2134
    %v2818 = vunpack.c.h.b16 %v2134
    %v2819 = vunpack.c.l.b16 %v2135
    %v2820 = vunpack.c.h.b16 %v2135
    %v2821 = vunpack.c.l.b16 %v2136
    %v2822 = vunpack.c.h.b16 %v2136
    %v2823 = vunpack.c.l.b16 %v2137
    %v2824 = vunpack.c.h.b16 %v2137
    %v2825 = vunpack.c.l.b16 %v2138
    %v2826 = vunpack.c.h.b16 %v2138
    %v2827 = vunpack.c.l.b16 %v2139
    %v2828 = vunpack.c.h.b16 %v2139
    %v2829 = vunpack.c.l.b16 %v2140
    %v2830 = vunpack.c.h.b16 %v2140
    %v2831 = vunpack.c.l.b16 %v2141
    %v2832 = vunpack.c.h.b16 %v2141
    %v2833 = vunpack.c.l.b16 %v2142
    %v2834 = vunpack.c.h.b16 %v2142
    %v2835 = vunpack.c.l.b16 %v2143
    %v2836 = vunpack.c.h.b16 %v2143
    %v2837 = vunpack.c.l.b16 %v2144
    %v2838 = vunpack.c.h.b16 %v2144
    %v2839 = vunpack.c.l.b16 %v2145
    %v2840 = vunpack.c.h.b16 %v2145
    %v2841 = vunpack.c.l.b16 %v2146
    %v2842 = vunpack.c.h.b16 %v2146
    %v2843 = vunpack.c.l.b16 %v2147
    %v2844 = vunpack.c.h.b16 %v2147
    %v2845 = vunpack.c.l.b16 %v2148
    %v2846 = vunpack.c.h.b16 %v2148
    %v2847 = vunpack.c.l.b16 %v2149
    %v2848 = vunpack.c.h.b16 %v2149
    %v2849 = vunpack.c.l.b16 %v2150
    %v2850 = vunpack.c.h.b16 %v2150
    %v2851 = vunpack.c.l.b16 %v2151
    %v2852 = vunpack.c.h.b16 %v2151
    %v2853 = vunpack.c.l.b16 %v2152
    %v2854 = vunpack.c.h.b16 %v2152
    %v2855 = vunpack.c.l.b16 %v2153
    %v2856 = vunpack.c.h.b16 %v2153
    %v2857 = vunpack.c.l.b16 %v2154
    %v2858 = vunpack.c.h.b16 %v2154
    %v2859 = vunpack.c.l.b16 %v2155
    %v2860 = vunpack.c.h.b16 %v2155
    %v2861 = vunpack.c.l.b16 %v2156
    %v2862 = vunpack.c.h.b16 %v2156
    %v2863 = vunpack.c.l.b16 %v2157
    %v2864 = vunpack.c.h.b16 %v2157
    %v2865 = vunpack.c.l.b16 %v2158
    %v2866 = vunpack.c.h.b16 %v2158
    %v2867 = vunpack.c.l.b16 %v2159
    %v2868 = vunpack.c.h.b16 %v2159
    %v2869 = vunpack.c.l.b16 %v2160
    %v2870 = vunpack.c.h.b16 %v2160
    %v2871 = vunpack.c.l.b16 %v2161
    %v2872 = vunpack.c.h.b16 %v2161
    %v2873 = vunpack.c.l.b16 %v2162
    %v2874 = vunpack.c.h.b16 %v2162
    %v2875 = vunpack.c.l.b16 %v2163
    %v2876 = vunpack.c.h.b16 %v2163
    %v2877 = vunpack.c.l.b16 %v2164
    %v2878 = vunpack.c.h.b16 %v2164
    %v2879 = vunpack.c.l.b16 %v2165
    %v2880 = vunpack.c.h.b16 %v2165
    %v2881 = vunpack.c.l.b16 %v2166
    %v2882 = vunpack.c.h.b16 %v2166
    %v2883 = vunpack.c.l.b16 %v2167
    %v2884 = vunpack.c.h.b16 %v2167
    %v2885 = vunpack.c.l.b16 %v2168
    %v2886 = vunpack.c.h.b16 %v2168
    %v2887 = vunpack.c.l.b16 %v2169
    %v2888 = vunpack.c.h.b16 %v2169
    %v2889 = vunpack.c.l.b16 %v2170
    %v2890 = vunpack.c.h.b16 %v2170
    %v2891 = vunpack.c.l.b16 %v2171
    %v2892 = vunpack.c.h.b16 %v2171
    %v2893 = vunpack.c.l.b16 %v2172
    %v2894 = vunpack.c.h.b16 %v2172
    %v2895 = vunpack.c.l.b16 %v2173
    %v2896 = vunpack.c.h.b16 %v2173
    %v2897 = vunpack.c.l.b16 %v2174
    %v2898 = vunpack.c.h.b16 %v2174
    %v2899 = vunpack.c.l.b16 %v2175
    %v2900 = vunpack.c.h.b16 %v2175
    %v2901 = vunpack.c.l.b16 %v2176
    %v2902 = vunpack.c.h.b16 %v2176
    %v2903 = vunpack.c.l.b16 %v2177
    %v2904 = vunpack.c.h.b16 %v2177
    %v2905 = vunpack.c.l.b16 %v2178
    %v2906 = vunpack.c.h.b16 %v2178
    %v2907 = vunpack.c.l.b16 %v2179
    %v2908 = vunpack.c.h.b16 %v2179
    %v2909 = vunpack.c.l.b16 %v2180
    %v2910 = vunpack.c.h.b16 %v2180
    %v2911 = vunpack.c.l.b16 %v2181
    %v2912 = vunpack.c.h.b16 %v2181
    %v2913 = vunpack.c.l.b16 %v2182
    %v2914 = vunpack.c.h.b16 %v2182
    %v2915 = vunpack.c.l.b16 %v2183
    %v2916 = vunpack.c.h.b16 %v2183
    %v2917 = vunpack.c.l.b16 %v2184
    %v2918 = vunpack.c.h.b16 %v2184
    %v2919 = vunpack.c.l.b16 %v2185
    %v2920 = vunpack.c.h.b16 %v2185
    %v2921 = vunpack.c.l.b16 %v2186
    %v2922 = vunpack.c.h.b16 %v2186
    %v2923 = vunpack.c.l.b16 %v2187
    %v2924 = vunpack.c.h.b16 %v2187
    %v2925 = vunpack.c.l.b16 %v2188
    %v2926 = vunpack.c.h.b16 %v2188
    %v2927 = vunpack.c.l.b16 %v2189
    %v2928 = vunpack.c.h.b16 %v2189
    %v2929 = vunpack.c.l.b16 %v2190
    %v2930 = vunpack.c.h.b16 %v2190
    %v2931 = vunpack.c.l.b16 %v2191
    %v2932 = vunpack.c.h.b16 %v2191
    %v2933 = vunpack.c.l.b16 %v2192
    %v2934 = vunpack.c.h.b16 %v2192
    %v2935 = vunpack.c.l.b16 %v2193
    %v2936 = vunpack.c.h.b16 %v2193
    %v2937 = vunpack.c.l.b16 %v2194
    %v2938 = vunpack.c.h.b16 %v2194
    %v2939 = vunpack.c.l.b16 %v2195
    %v2940 = vunpack.c.h.b16 %v2195
    %v2941 = vunpack.c.l.b16 %v2196
    %v2942 = vunpack.c.h.b16 %v2196
    %v2943 = vunpack.c.l.b16 %v2197
    %v2944 = vunpack.c.h.b16 %v2197
    %v2945 = vunpack.c.l.b16 %v2198
    %v2946 = vunpack.c.h.b16 %v2198
    %v2947 = vunpack.c.l.b16 %v2199
    %v2948 = vunpack.c.h.b16 %v2199
    %v2949 = vunpack.c.l.b16 %v2200
    %v2950 = vunpack.c.h.b16 %v2200
    %v2951 = vunpack.c.l.b16 %v2201
    %v2952 = vunpack.c.h.b16 %v2201
    %v2953 = vunpack.c.l.b16 %v2202
    %v2954 = vunpack.c.h.b16 %v2202
    %v2955 = vunpack.c.l.b16 %v2203
    %v2956 = vunpack.c.h.b16 %v2203
    %v2957 = vunpack.c.l.b16 %v2204
    %v2958 = vunpack.c.h.b16 %v2204
    %v2959 = vunpack.c.l.b16 %v2205
    %v2960 = vunpack.c.h.b16 %v2205
    %v2961 = vunpack.c.l.b16 %v2206
    %v2962 = vunpack.c.h.b16 %v2206
    %v2963 = vunpack.c.l.b16 %v2207
    %v2964 = vunpack.c.h.b16 %v2207
    %v2965 = vunpack.c.l.b16 %v2208
    %v2966 = vunpack.c.h.b16 %v2208
    %v2967 = vunpack.c.l.b16 %v2209
    %v2968 = vunpack.c.h.b16 %v2209
    %v2969 = vunpack.c.l.b16 %v2210
    %v2970 = vunpack.c.h.b16 %v2210
    %v2971 = vunpack.c.l.b16 %v2211
    %v2972 = vunpack.c.h.b16 %v2211
    %v2973 = vunpack.c.l.b16 %v2212
    %v2974 = vunpack.c.h.b16 %v2212
    %v2975 = vunpack.c.l.b16 %v2213
    %v2976 = vunpack.c.h.b16 %v2213
    %v2977 = vunpack.c.l.b16 %v2214
    %v2978 = vunpack.c.h.b16 %v2214
    %v2979 = vunpack.c.l.b16 %v2215
    %v2980 = vunpack.c.h.b16 %v2215
    %v2981 = vunpack.c.l.b16 %v2216
    %v2982 = vunpack.c.h.b16 %v2216
    %v2983 = vunpack.c.l.b16 %v2217
    %v2984 = vunpack.c.h.b16 %v2217
    %v2985 = vunpack.c.l.b16 %v2218
    %v2986 = vunpack.c.h.b16 %v2218
    %v2987 = vunpack.c.l.b16 %v2219
    %v2988 = vunpack.c.h.b16 %v2219
    %v2989 = vunpack.c.l.b16 %v2220
    %v2990 = vunpack.c.h.b16 %v2220
    %v2991 = vunpack.c.l.b16 %v2221
    %v2992 = vunpack.c.h.b16 %v2221
    %v2993 = vunpack.c.l.b16 %v2222
    %v2994 = vunpack.c.h.b16 %v2222
    %v2995 = vunpack.c.l.b16 %v2223
    %v2996 = vunpack.c.h.b16 %v2223
    %v2997 = vunpack.c.l.b16 %v2224
    %v2998 = vunpack.c.h.b16 %v2224
    %v2999 = vunpack.c.l.b16 %v2225
    %v3000 = vunpack.c.h.b16 %v2225
    %v3001 = vunpack.c.l.b16 %v2226
    %v3002 = vunpack.c.h.b16 %v2226
    %v3003 = vunpack.c.l.b16 %v2227
    %v3004 = vunpack.c.h.b16 %v2227
    %v3005 = vunpack.c.l.b16 %v2228
    %v3006 = vunpack.c.h.b16 %v2228
    %v3007 = vunpack.c.l.b16 %v2229
    %v3008 = vunpack.c.h.b16 %v2229
    %v3009 = vunpack.c.l.b16 %v2230
    %v3010 = vunpack.c.h.b16 %v2230
    %v3011 = vunpack.c.l.b16 %v2231
    %v3012 = vunpack.c.h.b16 %v2231
    %v3013 = vunpack.c.l.b16 %v2232
    %v3014 = vunpack.c.h.b16 %v2232
    %v3015 = vunpack.c.l.b16 %v2233
    %v3016 = vunpack.c.h.b16 %v2233
    %v3017 = vunpack.c.l.b16 %v2234
    %v3018 = vunpack.c.h.b16 %v2234
    %v3019 = vunpack.c.l.b16 %v2235
    %v3020 = vunpack.c.h.b16 %v2235
    %v3021 = vunpack.c.l.b16 %v2236
    %v3022 = vunpack.c.h.b16 %v2236
    %v3023 = vunpack.c.l.b16 %v2237
    %v3024 = vunpack.c.h.b16 %v2237
    %v3025 = vunpack.c.l.b16 %v2238
    %v3026 = vunpack.c.h.b16 %v2238
    %v3027 = vunpack.c.l.b16 %v2239
    %v3028 = vunpack.c.h.b16 %v2239
    %v3029 = vunpack.c.l.b16 %v2240
    %v3030 = vunpack.c.h.b16 %v2240
    %v3031 = vunpack.c.l.b16 %v2241
    %v3032 = vunpack.c.h.b16 %v2241
    %v3033 = vunpack.c.l.b16 %v2242
    %v3034 = vunpack.c.h.b16 %v2242
    %v3035 = vunpack.c.l.b16 %v2243
    %v3036 = vunpack.c.h.b16 %v2243
    %v3037 = vunpack.c.l.b16 %v2244
    %v3038 = vunpack.c.h.b16 %v2244
    %v3039 = vunpack.c.l.b16 %v2245
    %v3040 = vunpack.c.h.b16 %v2245
    %v3041 = vunpack.c.l.b16 %v2246
    %v3042 = vunpack.c.h.b16 %v2246
    %v3043 = vunpack.c.l.b16 %v2247
    %v3044 = vunpack.c.h.b16 %v2247
    %v3045 = vunpack.c.l.b16 %v2248
    %v3046 = vunpack.c.h.b16 %v2248
    %v3047 = vunpack.c.l.b16 %v2249
    %v3048 = vunpack.c.h.b16 %v2249
    %v3049 = vunpack.c.l.b16 %v2250
    %v3050 = vunpack.c.h.b16 %v2250
    %v3051 = vunpack.c.l.b16 %v2251
    %v3052 = vunpack.c.h.b16 %v2251
    %v3053 = vunpack.c.l.b16 %v2252
    %v3054 = vunpack.c.h.b16 %v2252
    %v3055 = vunpack.c.l.b16 %v2253
    %v3056 = vunpack.c.h.b16 %v2253
    %v3057 = vunpack.c.l.b16 %v2254
    %v3058 = vunpack.c.h.b16 %v2254
    %v3059 = vunpack.c.l.b16 %v2255
    %v3060 = vunpack.c.h.b16 %v2255
    %v3061 = vunpack.c.l.b16 %v2256
    %v3062 = vunpack.c.h.b16 %v2256
    %v3063 = vunpack.c.l.b16 %v2257
    %v3064 = vunpack.c.h.b16 %v2257
    %v3065 = vunpack.c.l.b16 %v2258
    %v3066 = vunpack.c.h.b16 %v2258
    %v3067 = vunpack.c.l.b16 %v2259
    %v3068 = vunpack.c.h.b16 %v2259
    %v3069 = vunpack.c.l.b16 %v2260
    %v3070 = vunpack.c.h.b16 %v2260
    %v3071 = vunpack.c.l.b16 %v2261
    %v3072 = vunpack.c.h.b16 %v2261
    %v3073 = vunpack.c.l.b16 %v2262
    %v3074 = vunpack.c.h.b16 %v2262
    %v3075 = vunpack.c.l.b16 %v2263
    %v3076 = vunpack.c.h.b16 %v2263
    %v3077 = vunpack.c.l.b16 %v2264
    %v3078 = vunpack.c.h.b16 %v2264
    %v3079 = vunpack.c.l.b16 %v2265
    %v3080 = vunpack.c.h.b16 %v2265
    %v3081 = vunpack.c.l.b16 %v2266
    %v3082 = vunpack.c.h.b16 %v2266
    %v3083 = vunpack.c.l.b16 %v2267
    %v3084 = vunpack.c.h.b16 %v2267
    %v3085 = vunpack.c.l.b16 %v2268
    %v3086 = vunpack.c.h.b16 %v2268
    %v3087 = vunpack.c.l.b16 %v2269
    %v3088 = vunpack.c.h.b16 %v2269
    %v3089 = vunpack.c.l.b16 %v2270
    %v3090 = vunpack.c.h.b16 %v2270
    %v3091 = vunpack.c.l.b16 %v2271
    %v3092 = vunpack.c.h.b16 %v2271
    %v3093 = vunpack.c.l.b16 %v2272
    %v3094 = vunpack.c.h.b16 %v2272
    %v3095 = vunpack.c.l.b16 %v2273
    %v3096 = vunpack.c.h.b16 %v2273
    %v3097 = vunpack.c.l.b16 %v2274
    %v3098 = vunpack.c.h.b16 %v2274
    %v3099 = vunpack.c.l.b16 %v2275
    %v3100 = vunpack.c.h.b16 %v2275
    %v3101 = vunpack.c.l.b16 %v2276
    %v3102 = vunpack.c.h.b16 %v2276
    %v3103 = vunpack.c.l.b16 %v2277
    %v3104 = vunpack.c.h.b16 %v2277
    %v3105 = vunpack.c.l.b16 %v2278
    %v3106 = vunpack.c.h.b16 %v2278
    %v3107 = vunpack.c.l.b16 %v2279
    %v3108 = vunpack.c.h.b16 %v2279
    %v3109 = vunpack.c.l.b16 %v2280
    %v3110 = vunpack.c.h.b16 %v2280
    %v3111 = vpack.c.b16 %v2603, %v2599
    %v3112 = vpack.c.b16 %v2604, %v2600
    %v3113 = vpack.c.b16 %v2605, %v2601
    %v3114 = vpack.c.b16 %v2606, %v2602
    %v3115 = vpack.c.b16 %v2611, %v2607
    %v3116 = vpack.c.b16 %v2612, %v2608
    %v3117 = vpack.c.b16 %v2613, %v2609
    %v3118 = vpack.c.b16 %v2614, %v2610
    %v3119 = vpack.c.b16 %v2619, %v2615
    %v3120 = vpack.c.b16 %v2620, %v2616
    %v3121 = vpack.c.b16 %v2621, %v2617
    %v3122 = vpack.c.b16 %v2622, %v2618
    %v3123 = vpack.c.b16 %v2627, %v2623
    %v3124 = vpack.c.b16 %v2628, %v2624
    %v3125 = vpack.c.b16 %v2629, %v2625
    %v3126 = vpack.c.b16 %v2630, %v2626
    %v3127 = vpack.c.b16 %v2635, %v2631
    %v3128 = vpack.c.b16 %v2636, %v2632
    %v3129 = vpack.c.b16 %v2637, %v2633
    %v3130 = vpack.c.b16 %v2638, %v2634
    %v3131 = vpack.c.b16 %v2643, %v2639
    %v3132 = vpack.c.b16 %v2644, %v2640
    %v3133 = vpack.c.b16 %v2645, %v2641
    %v3134 = vpack.c.b16 %v2646, %v2642
    %v3135 = vpack.c.b16 %v2651, %v2647
    %v3136 = vpack.c.b16 %v2652, %v2648
    %v3137 = vpack.c.b16 %v2653, %v2649
    %v3138 = vpack.c.b16 %v2654, %v2650
    %v3139 = vpack.c.b16 %v2659, %v2655
    %v3140 = vpack.c.b16 %v2660, %v2656
    %v3141 = vpack.c.b16 %v2661, %v2657
    %v3142 = vpack.c.b16 %v2662, %v2658
    %v3143 = vpack.c.b16 %v2667, %v2663
    %v3144 = vpack.c.b16 %v2668, %v2664
    %v3145 = vpack.c.b16 %v2669, %v2665
    %v3146 = vpack.c.b16 %v2670, %v2666
    %v3147 = vpack.c.b16 %v2675, %v2671
    %v3148 = vpack.c.b16 %v2676, %v2672
    %v3149 = vpack.c.b16 %v2677, %v2673
    %v3150 = vpack.c.b16 %v2678, %v2674
    %v3151 = vpack.c.b16 %v2683, %v2679
    %v3152 = vpack.c.b16 %v2684, %v2680
    %v3153 = vpack.c.b16 %v2685, %v2681
    %v3154 = vpack.c.b16 %v2686, %v2682
    %v3155 = vpack.c.b16 %v2691, %v2687
    %v3156 = vpack.c.b16 %v2692, %v2688
    %v3157 = vpack.c.b16 %v2693, %v2689
    %v3158 = vpack.c.b16 %v2694, %v2690
    %v3159 = vpack.c.b16 %v2699, %v2695
    %v3160 = vpack.c.b16 %v2700, %v2696
    %v3161 = vpack.c.b16 %v2701, %v2697
    %v3162 = vpack.c.b16 %v2702, %v2698
    %v3163 = vpack.c.b16 %v2707, %v2703
    %v3164 = vpack.c.b16 %v2708, %v2704
    %v3165 = vpack.c.b16 %v2709, %v2705
    %v3166 = vpack.c.b16 %v2710, %v2706
    %v3167 = vpack.c.b16 %v2715, %v2711
    %v3168 = vpack.c.b16 %v2716, %v2712
    %v3169 = vpack.c.b16 %v2717, %v2713
    %v3170 = vpack.c.b16 %v2718, %v2714
    %v3171 = vpack.c.b16 %v2723, %v2719
    %v3172 = vpack.c.b16 %v2724, %v2720
    %v3173 = vpack.c.b16 %v2725, %v2721
    %v3174 = vpack.c.b16 %v2726, %v2722
    %v3175 = vpack.c.b16 %v2731, %v2727
    %v3176 = vpack.c.b16 %v2732, %v2728
    %v3177 = vpack.c.b16 %v2733, %v2729
    %v3178 = vpack.c.b16 %v2734, %v2730
    %v3179 = vpack.c.b16 %v2739, %v2735
    %v3180 = vpack.c.b16 %v2740, %v2736
    %v3181 = vpack.c.b16 %v2741, %v2737
    %v3182 = vpack.c.b16 %v2742, %v2738
    %v3183 = vpack.c.b16 %v2747, %v2743
    %v3184 = vpack.c.b16 %v2748, %v2744
    %v3185 = vpack.c.b16 %v2749, %v2745
    %v3186 = vpack.c.b16 %v2750, %v2746
    %v3187 = vpack.c.b16 %v2755, %v2751
    %v3188 = vpack.c.b16 %v2756, %v2752
    %v3189 = vpack.c.b16 %v2757, %v2753
    %v3190 = vpack.c.b16 %v2758, %v2754
    %v3191 = vpack.c.b16 %v2763, %v2759
    %v3192 = vpack.c.b16 %v2764, %v2760
    %v3193 = vpack.c.b16 %v2765, %v2761
    %v3194 = vpack.c.b16 %v2766, %v2762
    %v3195 = vpack.c.b16 %v2771, %v2767
    %v3196 = vpack.c.b16 %v2772, %v2768
    %v3197 = vpack.c.b16 %v2773, %v2769
    %v3198 = vpack.c.b16 %v2774, %v2770
    %v3199 = vpack.c.b16 %v2779, %v2775
    %v3200 = vpack.c.b16 %v2780, %v2776
    %v3201 = vpack.c.b16 %v2781, %v2777
    %v3202 = vpack.c.b16 %v2782, %v2778
    %v3203 = vpack.c.b16 %v2787, %v2783
    %v3204 = vpack.c.b16 %v2788, %v2784
    %v3205 = vpack.c.b16 %v2789, %v2785
    %v3206 = vpack.c.b16 %v2790, %v2786
    %v3207 = vpack.c.b16 %v2795, %v2791
    %v3208 = vpack.c.b16 %v2796, %v2792
    %v3209 = vpack.c.b16 %v2797, %v2793
    %v3210 = vpack.c.b16 %v2798, %v2794
    %v3211 = vpack.c.b16 %v2803, %v2799
    %v3212 = vpack.c.b16 %v2804, %v2800
    %v3213 = vpack.c.b16 %v2805, %v2801
    %v3214 = vpack.c.b16 %v2806, %v2802
    %v3215 = vpack.c.b16 %v2811, %v2807
    %v3216 = vpack.c.b16 %v2812, %v2808
    %v3217 = vpack.c.b16 %v2813, %v2809
    %v3218 = vpack.c.b16 %v2814, %v2810
    %v3219 = vpack.c.b16 %v2819, %v2815
    %v3220 = vpack.c.b16 %v2820, %v2816
    %v3221 = vpack.c.b16 %v2821, %v2817
    %v3222 = vpack.c.b16 %v2822, %v2818
    %v3223 = vpack.c.b16 %v2827, %v2823
    %v3224 = vpack.c.b16 %v2828, %v2824
    %v3225 = vpack.c.b16 %v2829, %v2825
    %v3226 = vpack.c.b16 %v2830, %v2826
    %v3227 = vpack.c.b16 %v2835, %v2831
    %v3228 = vpack.c.b16 %v2836, %v2832
    %v3229 = vpack.c.b16 %v2837, %v2833
    %v3230 = vpack.c.b16 %v2838, %v2834
    %v3231 = vpack.c.b16 %v2843, %v2839
    %v3232 = vpack.c.b16 %v2844, %v2840
    %v3233 = vpack.c.b16 %v2845, %v2841
    %v3234 = vpack.c.b16 %v2846, %v2842
    %v3235 = vpack.c.b16 %v2851, %v2847
    %v3236 = vpack.c.b16 %v2852, %v2848
    %v3237 = vpack.c.b16 %v2853, %v2849
    %v3238 = vpack.c.b16 %v2854, %v2850
    %v3239 = vpack.c.b16 %v2859, %v2855
    %v3240 = vpack.c.b16 %v2860, %v2856
    %v3241 = vpack.c.b16 %v2861, %v2857
    %v3242 = vpack.c.b16 %v2862, %v2858
    %v3243 = vpack.c.b16 %v2867, %v2863
    %v3244 = vpack.c.b16 %v2868, %v2864
    %v3245 = vpack.c.b16 %v2869, %v2865
    %v3246 = vpack.c.b16 %v2870, %v2866
    %v3247 = vpack.c.b16 %v2875, %v2871
    %v3248 = vpack.c.b16 %v2876, %v2872
    %v3249 = vpack.c.b16 %v2877, %v2873
    %v3250 = vpack.c.b16 %v2878, %v2874
    %v3251 = vpack.c.b16 %v2883, %v2879
    %v3252 = vpack.c.b16 %v2884, %v2880
    %v3253 = vpack.c.b16 %v2885, %v2881
    %v3254 = vpack.c.b16 %v2886, %v2882
    %v3255 = vpack.c.b16 %v2891, %v2887
    %v3256 = vpack.c.b16 %v2892, %v2888
    %v3257 = vpack.c.b16 %v2893, %v2889
    %v3258 = vpack.c.b16 %v2894, %v2890
    %v3259 = vpack.c.b16 %v2899, %v2895
    %v3260 = vpack.c.b16 %v2900, %v2896
    %v3261 = vpack.c.b16 %v2901, %v2897
    %v3262 = vpack.c.b16 %v2902, %v2898
    %v3263 = vpack.c.b16 %v2907, %v2903
    %v3264 = vpack.c.b16 %v2908, %v2904
    %v3265 = vpack.c.b16 %v2909, %v2905
    %v3266 = vpack.c.b16 %v2910, %v2906
    %v3267 = vpack.c.b16 %v2915, %v2911
    %v3268 = vpack.c.b16 %v2916, %v2912
    %v3269 = vpack.c.b16 %v2917, %v2913
    %v3270 = vpack.c.b16 %v2918, %v2914
    %v3271 = vpack.c.b16 %v2923, %v2919
    %v3272 = vpack.c.b16 %v2924, %v2920
    %v3273 = vpack.c.b16 %v2925, %v2921
    %v3274 = vpack.c.b16 %v2926, %v2922
    %v3275 = vpack.c.b16 %v2931, %v2927
    %v3276 = vpack.c.b16 %v2932, %v2928
    %v3277 = vpack.c.b16 %v2933, %v2929
    %v3278 = vpack.c.b16 %v2934, %v2930
    %v3279 = vpack.c.b16 %v2939, %v2935
    %v3280 = vpack.c.b16 %v2940, %v2936
    %v3281 = vpack.c.b16 %v2941, %v2937
    %v3282 = vpack.c.b16 %v2942, %v2938
    %v3283 = vpack.c.b16 %v2947, %v2943
    %v3284 = vpack.c.b16 %v2948, %v2944
    %v3285 = vpack.c.b16 %v2949, %v2945
    %v3286 = vpack.c.b16 %v2950, %v2946
    %v3287 = vpack.c.b16 %v2955, %v2951
    %v3288 = vpack.c.b16 %v2956, %v2952
    %v3289 = vpack.c.b16 %v2957, %v2953
    %v3290 = vpack.c.b16 %v2958, %v2954
    %v3291 = vpack.c.b16 %v2963, %v2959
    %v3292 = vpack.c.b16 %v2964, %v2960
    %v3293 = vpack.c.b16 %v2965, %v2961
    %v3294 = vpack.c.b16 %v2966, %v2962
    %v3295 = vpack.c.b16 %v2971, %v2967
    %v3296 = vpack.c.b16 %v2972, %v2968
    %v3297 = vpack.c.b16 %v2973, %v2969
    %v3298 = vpack.c.b16 %v2974, %v2970
    %v3299 = vpack.c.b16 %v2979, %v2975
    %v3300 = vpack.c.b16 %v2980, %v2976
    %v3301 = vpack.c.b16 %v2981, %v2977
    %v3302 = vpack.c.b16 %v2982, %v2978
    %v3303 = vpack.c.b16 %v2987, %v2983
    %v3304 = vpack.c.b16 %v2988, %v2984
    %v3305 = vpack.c.b16 %v2989, %v2985
    %v3306 = vpack.c.b16 %v2990, %v2986
    %v3307 = vpack.c.b16 %v2995, %v2991
    %v3308 = vpack.c.b16 %v2996, %v2992
    %v3309 = vpack.c.b16 %v2997, %v2993
    %v3310 = vpack.c.b16 %v2998, %v2994
    %v3311 = vpack.c.b16 %v3003, %v2999
    %v3312 = vpack.c.b16 %v3004, %v3000
    %v3313 = vpack.c.b16 %v3005, %v3001
    %v3314 = vpack.c.b16 %v3006, %v3002
    %v3315 = vpack.c.b16 %v3011, %v3007
    %v3316 = vpack.c.b16 %v3012, %v3008
    %v3317 = vpack.c.b16 %v3013, %v3009
    %v3318 = vpack.c.b16 %v3014, %v3010
    %v3319 = vpack.c.b16 %v3019, %v3015
    %v3320 = vpack.c.b16 %v3020, %v3016
    %v3321 = vpack.c.b16 %v3021, %v3017
    %v3322 = vpack.c.b16 %v3022, %v3018
    %v3323 = vpack.c.b16 %v3027, %v3023
    %v3324 = vpack.c.b16 %v3028, %v3024
    %v3325 = vpack.c.b16 %v3029, %v3025
    %v3326 = vpack.c.b16 %v3030, %v3026
    %v3327 = vpack.c.b16 %v3035, %v3031
    %v3328 = vpack.c.b16 %v3036, %v3032
    %v3329 = vpack.c.b16 %v3037, %v3033
    %v3330 = vpack.c.b16 %v3038, %v3034
    %v3331 = vpack.c.b16 %v3043, %v3039
    %v3332 = vpack.c.b16 %v3044, %v3040
    %v3333 = vpack.c.b16 %v3045, %v3041
    %v3334 = vpack.c.b16 %v3046, %v3042
    %v3335 = vpack.c.b16 %v3051, %v3047
    %v3336 = vpack.c.b16 %v3052, %v3048
    %v3337 = vpack.c.b16 %v3053, %v3049
    %v3338 = vpack.c.b16 %v3054, %v3050
    %v3339 = vpack.c.b16 %v3059, %v3055
    %v3340 = vpack.c.b16 %v3060, %v3056
    %v3341 = vpack.c.b16 %v3061, %v3057
    %v3342 = vpack.c.b16 %v3062, %v3058
    %v3343 = vpack.c.b16 %v3067, %v3063
    %v3344 = vpack.c.b16 %v3068, %v3064
    %v3345 = vpack.c.b16 %v3069, %v3065
    %v3346 = vpack.c.b16 %v3070, %v3066
    %v3347 = vpack.c.b16 %v3075, %v3071
    %v3348 = vpack.c.b16 %v3076, %v3072
    %v3349 = vpack.c.b16 %v3077, %v3073
    %v3350 = vpack.c.b16 %v3078, %v3074
    %v3351 = vpack.c.b16 %v3083, %v3079
    %v3352 = vpack.c.b16 %v3084, %v3080
    %v3353 = vpack.c.b16 %v3085, %v3081
    %v3354 = vpack.c.b16 %v3086, %v3082
    %v3355 = vpack.c.b16 %v3091, %v3087
    %v3356 = vpack.c.b16 %v3092, %v3088
    %v3357 = vpack.c.b16 %v3093, %v3089
    %v3358 = vpack.c.b16 %v3094, %v3090
    %v3359 = vpack.c.b16 %v3099, %v3095
    %v3360 = vpack.c.b16 %v3100, %v3096
    %v3361 = vpack.c.b16 %v3101, %v3097
    %v3362 = vpack.c.b16 %v3102, %v3098
    %v3363 = vpack.c.b16 %v3107, %v3103
    %v3364 = vpack.c.b16 %v3108, %v3104
    %v3365 = vpack.c.b16 %v3109, %v3105
    %v3366 = vpack.c.b16 %v3110, %v3106
    %3623 = vmatprep.subr.bf16.mxu0 %v3140
    %3624 = vmatpush1.bf16.msra.mxu0 %v3139
    %3625 = vmatprep.subr.bf16.mxu0 %v3136
    %3626 = vmatpush1.bf16.msra.mxu0 %v3135
    %3627 = vmatprep.subr.bf16.mxu0 %v3132
    %3628 = vmatpush1.bf16.msra.mxu0 %v3131
    %3629 = vmatprep.subr.bf16.mxu0 %v3128
    %3630 = vmatpush1.bf16.msra.mxu0 %v3127
    %3631 = vmatprep.subr.bf16.mxu0 %v3124
    %3632 = vmatpush1.bf16.msra.mxu0 %v3123
    %3633 = vmatprep.subr.bf16.mxu0 %v3120
    %3634 = vmatpush1.bf16.msra.mxu0 %v3119
    %3635 = vmatprep.subr.bf16.mxu0 %v3116
    %3636 = vmatpush1.bf16.msra.mxu0 %v3115
    %3637 = vmatprep.subr.bf16.mxu0 %v3112
    %3638 = vmatpush1.bf16.msra.mxu0 %v3111
    %3639 = vmatprep.subr.bf16.mxu0 %v3172
    %3640 = vmatpush2.bf16.msra.mxu0 %v3171
    %3641 = vmatprep.subr.bf16.mxu0 %v3168
    %3642 = vmatpush2.bf16.msra.mxu0 %v3167
    %3643 = vmatprep.subr.bf16.mxu0 %v3164
    %3644 = vmatpush2.bf16.msra.mxu0 %v3163
    %3645 = vmatprep.subr.bf16.mxu0 %v3160
    %3646 = vmatpush2.bf16.msra.mxu0 %v3159
    %3647 = vmatprep.subr.bf16.mxu0 %v3156
    %3648 = vmatpush2.bf16.msra.mxu0 %v3155
    %3649 = vmatprep.subr.bf16.mxu0 %v3152
    %3650 = vmatpush2.bf16.msra.mxu0 %v3151
    %3651 = vmatprep.subr.bf16.mxu0 %v3148
    %3652 = vmatpush2.bf16.msra.mxu0 %v3147
    %3653 = vmatprep.subr.bf16.mxu0 %v3144
    %3654 = vmatpush2.bf16.msra.mxu0 %v3143
    %3655 = vmatprep.mubr.bf16.mxu0 %v2328
    %3656 = vmatmul.mubr.bf16.gmra.mxu0 %v2327
    %v3657 = vpop.f32.mrf.mxu0
    %v3658 = vadd.f32 %v2286, %v3657
    %v3659 = vpop.f32.mrf.mxu0
    %v3660 = vadd.f32 %v2290, %v3659
    %v3661 = vpop.f32.mrf.mxu0
    %v3662 = vadd.f32 %v2286, %v3661
    %v3663 = vpop.f32.mrf.mxu0
    %v3664 = vadd.f32 %v2290, %v3663
    %3665 = vdwg.mxu0
    %3666 = vmatprep.subr.bf16.mxu0 %v3204
    %3667 = vmatpush1.bf16.msra.mxu0 %v3203
    %3668 = vmatprep.subr.bf16.mxu0 %v3200
    %3669 = vmatpush1.bf16.msra.mxu0 %v3199
    %3670 = vmatprep.subr.bf16.mxu0 %v3196
    %3671 = vmatpush1.bf16.msra.mxu0 %v3195
    %3672 = vmatprep.subr.bf16.mxu0 %v3192
    %3673 = vmatpush1.bf16.msra.mxu0 %v3191
    %3674 = vmatprep.subr.bf16.mxu0 %v3188
    %3675 = vmatpush1.bf16.msra.mxu0 %v3187
    %3676 = vmatprep.subr.bf16.mxu0 %v3184
    %3677 = vmatpush1.bf16.msra.mxu0 %v3183
    %3678 = vmatprep.subr.bf16.mxu0 %v3180
    %3679 = vmatpush1.bf16.msra.mxu0 %v3179
    %3680 = vmatprep.subr.bf16.mxu0 %v3176
    %3681 = vmatpush1.bf16.msra.mxu0 %v3175
    %3682 = vmatprep.subr.bf16.mxu0 %v3236
    %3683 = vmatpush2.bf16.msra.mxu0 %v3235
    %3684 = vmatprep.subr.bf16.mxu0 %v3232
    %3685 = vmatpush2.bf16.msra.mxu0 %v3231
    %3686 = vmatprep.subr.bf16.mxu0 %v3228
    %3687 = vmatpush2.bf16.msra.mxu0 %v3227
    %3688 = vmatprep.subr.bf16.mxu0 %v3224
    %3689 = vmatpush2.bf16.msra.mxu0 %v3223
    %3690 = vmatprep.subr.bf16.mxu0 %v3220
    %3691 = vmatpush2.bf16.msra.mxu0 %v3219
    %3692 = vmatprep.subr.bf16.mxu0 %v3216
    %3693 = vmatpush2.bf16.msra.mxu0 %v3215
    %3694 = vmatprep.subr.bf16.mxu0 %v3212
    %3695 = vmatpush2.bf16.msra.mxu0 %v3211
    %3696 = vmatprep.subr.bf16.mxu0 %v3208
    %3697 = vmatpush2.bf16.msra.mxu0 %v3207
    %3698 = vmatprep.mubr.bf16.mxu0 %v2330
    %3699 = vmatmul.mubr.bf16.gmra.mxu0 %v2329
    %v3700 = vpop.f32.mrf.mxu0
    %v3701 = vadd.f32 %v3658, %v3700
    %v3702 = vpop.f32.mrf.mxu0
    %v3703 = vadd.f32 %v3660, %v3702
    %v3704 = vpop.f32.mrf.mxu0
    %v3705 = vadd.f32 %v3662, %v3704
    %v3706 = vpop.f32.mrf.mxu0
    %v3707 = vadd.f32 %v3664, %v3706
    %3708 = vdwg.mxu0
    %3709 = vmatprep.subr.bf16.mxu0 %v3268
    %3710 = vmatpush1.bf16.msra.mxu0 %v3267
    %3711 = vmatprep.subr.bf16.mxu0 %v3264
    %3712 = vmatpush1.bf16.msra.mxu0 %v3263
    %3713 = vmatprep.subr.bf16.mxu0 %v3260
    %3714 = vmatpush1.bf16.msra.mxu0 %v3259
    %3715 = vmatprep.subr.bf16.mxu0 %v3256
    %3716 = vmatpush1.bf16.msra.mxu0 %v3255
    %3717 = vmatprep.subr.bf16.mxu0 %v3252
    %3718 = vmatpush1.bf16.msra.mxu0 %v3251
    %3719 = vmatprep.subr.bf16.mxu0 %v3248
    %3720 = vmatpush1.bf16.msra.mxu0 %v3247
    %3721 = vmatprep.subr.bf16.mxu0 %v3244
    %3722 = vmatpush1.bf16.msra.mxu0 %v3243
    %3723 = vmatprep.subr.bf16.mxu0 %v3240
    %3724 = vmatpush1.bf16.msra.mxu0 %v3239
    %3725 = vmatprep.subr.bf16.mxu0 %v3300
    %3726 = vmatpush2.bf16.msra.mxu0 %v3299
    %3727 = vmatprep.subr.bf16.mxu0 %v3296
    %3728 = vmatpush2.bf16.msra.mxu0 %v3295
    %3729 = vmatprep.subr.bf16.mxu0 %v3292
    %3730 = vmatpush2.bf16.msra.mxu0 %v3291
    %3731 = vmatprep.subr.bf16.mxu0 %v3288
    %3732 = vmatpush2.bf16.msra.mxu0 %v3287
    %3733 = vmatprep.subr.bf16.mxu0 %v3284
    %3734 = vmatpush2.bf16.msra.mxu0 %v3283
    %3735 = vmatprep.subr.bf16.mxu0 %v3280
    %3736 = vmatpush2.bf16.msra.mxu0 %v3279
    %3737 = vmatprep.subr.bf16.mxu0 %v3276
    %3738 = vmatpush2.bf16.msra.mxu0 %v3275
    %3739 = vmatprep.subr.bf16.mxu0 %v3272
    %3740 = vmatpush2.bf16.msra.mxu0 %v3271
    %3741 = vmatprep.mubr.bf16.mxu0 %v2332
    %3742 = vmatmul.mubr.bf16.gmra.mxu0 %v2331
    %v3743 = vpop.f32.mrf.mxu0
    %v3744 = vadd.f32 %v3701, %v3743
    %v3745 = vpop.f32.mrf.mxu0
    %v3746 = vadd.f32 %v3703, %v3745
    %v3747 = vpop.f32.mrf.mxu0
    %v3748 = vadd.f32 %v3705, %v3747
    %v3749 = vpop.f32.mrf.mxu0
    %v3750 = vadd.f32 %v3707, %v3749
    %3751 = vdwg.mxu0
    %3752 = vmatprep.subr.bf16.mxu0 %v3332
    %3753 = vmatpush1.bf16.msra.mxu0 %v3331
    %3754 = vmatprep.subr.bf16.mxu0 %v3328
    %3755 = vmatpush1.bf16.msra.mxu0 %v3327
    %3756 = vmatprep.subr.bf16.mxu0 %v3324
    %3757 = vmatpush1.bf16.msra.mxu0 %v3323
    %3758 = vmatprep.subr.bf16.mxu0 %v3320
    %3759 = vmatpush1.bf16.msra.mxu0 %v3319
    %3760 = vmatprep.subr.bf16.mxu0 %v3316
    %3761 = vmatpush1.bf16.msra.mxu0 %v3315
    %3762 = vmatprep.subr.bf16.mxu0 %v3312
    %3763 = vmatpush1.bf16.msra.mxu0 %v3311
    %3764 = vmatprep.subr.bf16.mxu0 %v3308
    %3765 = vmatpush1.bf16.msra.mxu0 %v3307
    %3766 = vmatprep.subr.bf16.mxu0 %v3304
    %3767 = vmatpush1.bf16.msra.mxu0 %v3303
    %3768 = vmatprep.subr.bf16.mxu0 %v3364
    %3769 = vmatpush2.bf16.msra.mxu0 %v3363
    %3770 = vmatprep.subr.bf16.mxu0 %v3360
    %3771 = vmatpush2.bf16.msra.mxu0 %v3359
    %3772 = vmatprep.subr.bf16.mxu0 %v3356
    %3773 = vmatpush2.bf16.msra.mxu0 %v3355
    %3774 = vmatprep.subr.bf16.mxu0 %v3352
    %3775 = vmatpush2.bf16.msra.mxu0 %v3351
    %3776 = vmatprep.subr.bf16.mxu0 %v3348
    %3777 = vmatpush2.bf16.msra.mxu0 %v3347
    %3778 = vmatprep.subr.bf16.mxu0 %v3344
    %3779 = vmatpush2.bf16.msra.mxu0 %v3343
    %3780 = vmatprep.subr.bf16.mxu0 %v3340
    %3781 = vmatpush2.bf16.msra.mxu0 %v3339
    %3782 = vmatprep.subr.bf16.mxu0 %v3336
    %3783 = vmatpush2.bf16.msra.mxu0 %v3335
    %3784 = vmatprep.mubr.bf16.mxu0 %v2334
    %3785 = vmatmul.mubr.bf16.gmra.mxu0 %v2333
    %v3786 = vpop.f32.mrf.mxu0
    %v3787 = vadd.f32 %v3744, %v3786
    %v3788 = vpop.f32.mrf.mxu0
    %v3789 = vadd.f32 %v3746, %v3788
    %v3790 = vpop.f32.mrf.mxu0
    %v3791 = vadd.f32 %v3748, %v3790
    %v3792 = vpop.f32.mrf.mxu0
    %v3793 = vadd.f32 %v3750, %v3792
    %3794 = vdwg.mxu0
    %3795 = vmatprep.subr.bf16.mxu0 %v3142
    %3796 = vmatpush1.bf16.msra.mxu0 %v3141
    %3797 = vmatprep.subr.bf16.mxu0 %v3138
    %3798 = vmatpush1.bf16.msra.mxu0 %v3137
    %3799 = vmatprep.subr.bf16.mxu0 %v3134
    %3800 = vmatpush1.bf16.msra.mxu0 %v3133
    %3801 = vmatprep.subr.bf16.mxu0 %v3130
    %3802 = vmatpush1.bf16.msra.mxu0 %v3129
    %3803 = vmatprep.subr.bf16.mxu0 %v3126
    %3804 = vmatpush1.bf16.msra.mxu0 %v3125
    %3805 = vmatprep.subr.bf16.mxu0 %v3122
    %3806 = vmatpush1.bf16.msra.mxu0 %v3121
    %3807 = vmatprep.subr.bf16.mxu0 %v3118
    %3808 = vmatpush1.bf16.msra.mxu0 %v3117
    %3809 = vmatprep.subr.bf16.mxu0 %v3114
    %3810 = vmatpush1.bf16.msra.mxu0 %v3113
    %3811 = vmatprep.subr.bf16.mxu0 %v3174
    %3812 = vmatpush2.bf16.msra.mxu0 %v3173
    %3813 = vmatprep.subr.bf16.mxu0 %v3170
    %3814 = vmatpush2.bf16.msra.mxu0 %v3169
    %3815 = vmatprep.subr.bf16.mxu0 %v3166
    %3816 = vmatpush2.bf16.msra.mxu0 %v3165
    %3817 = vmatprep.subr.bf16.mxu0 %v3162
    %3818 = vmatpush2.bf16.msra.mxu0 %v3161
    %3819 = vmatprep.subr.bf16.mxu0 %v3158
    %3820 = vmatpush2.bf16.msra.mxu0 %v3157
    %3821 = vmatprep.subr.bf16.mxu0 %v3154
    %3822 = vmatpush2.bf16.msra.mxu0 %v3153
    %3823 = vmatprep.subr.bf16.mxu0 %v3150
    %3824 = vmatpush2.bf16.msra.mxu0 %v3149
    %3825 = vmatprep.subr.bf16.mxu0 %v3146
    %3826 = vmatpush2.bf16.msra.mxu0 %v3145
    %3827 = vmatprep.mubr.bf16.mxu0 %v2328
    %3828 = vmatmul.mubr.bf16.gmra.mxu0 %v2327
    %v3829 = vpop.f32.mrf.mxu0
    %v3830 = vadd.f32 %v2294, %v3829
    %v3831 = vpop.f32.mrf.mxu0
    %v3832 = vadd.f32 %v2298, %v3831
    %v3833 = vpop.f32.mrf.mxu0
    %v3834 = vadd.f32 %v2294, %v3833
    %v3835 = vpop.f32.mrf.mxu0
    %v3836 = vadd.f32 %v2298, %v3835
    %3837 = vdwg.mxu0
    %3838 = vmatprep.subr.bf16.mxu0 %v3206
    %3839 = vmatpush1.bf16.msra.mxu0 %v3205
    %3840 = vmatprep.subr.bf16.mxu0 %v3202
    %3841 = vmatpush1.bf16.msra.mxu0 %v3201
    %3842 = vmatprep.subr.bf16.mxu0 %v3198
    %3843 = vmatpush1.bf16.msra.mxu0 %v3197
    %3844 = vmatprep.subr.bf16.mxu0 %v3194
    %3845 = vmatpush1.bf16.msra.mxu0 %v3193
    %3846 = vmatprep.subr.bf16.mxu0 %v3190
    %3847 = vmatpush1.bf16.msra.mxu0 %v3189
    %3848 = vmatprep.subr.bf16.mxu0 %v3186
    %3849 = vmatpush1.bf16.msra.mxu0 %v3185
    %3850 = vmatprep.subr.bf16.mxu0 %v3182
    %3851 = vmatpush1.bf16.msra.mxu0 %v3181
    %3852 = vmatprep.subr.bf16.mxu0 %v3178
    %3853 = vmatpush1.bf16.msra.mxu0 %v3177
    %3854 = vmatprep.subr.bf16.mxu0 %v3238
    %3855 = vmatpush2.bf16.msra.mxu0 %v3237
    %3856 = vmatprep.subr.bf16.mxu0 %v3234
    %3857 = vmatpush2.bf16.msra.mxu0 %v3233
    %3858 = vmatprep.subr.bf16.mxu0 %v3230
    %3859 = vmatpush2.bf16.msra.mxu0 %v3229
    %3860 = vmatprep.subr.bf16.mxu0 %v3226
    %3861 = vmatpush2.bf16.msra.mxu0 %v3225
    %3862 = vmatprep.subr.bf16.mxu0 %v3222
    %3863 = vmatpush2.bf16.msra.mxu0 %v3221
    %3864 = vmatprep.subr.bf16.mxu0 %v3218
    %3865 = vmatpush2.bf16.msra.mxu0 %v3217
    %3866 = vmatprep.subr.bf16.mxu0 %v3214
    %3867 = vmatpush2.bf16.msra.mxu0 %v3213
    %3868 = vmatprep.subr.bf16.mxu0 %v3210
    %3869 = vmatpush2.bf16.msra.mxu0 %v3209
    %3870 = vmatprep.mubr.bf16.mxu0 %v2330
    %3871 = vmatmul.mubr.bf16.gmra.mxu0 %v2329
    %v3872 = vpop.f32.mrf.mxu0
    %v3873 = vadd.f32 %v3830, %v3872
    %v3874 = vpop.f32.mrf.mxu0
    %v3875 = vadd.f32 %v3832, %v3874
    %v3876 = vpop.f32.mrf.mxu0
    %v3877 = vadd.f32 %v3834, %v3876
    %v3878 = vpop.f32.mrf.mxu0
    %v3879 = vadd.f32 %v3836, %v3878
    %3880 = vdwg.mxu0
    %3881 = vmatprep.subr.bf16.mxu0 %v3270
    %3882 = vmatpush1.bf16.msra.mxu0 %v3269
    %3883 = vmatprep.subr.bf16.mxu0 %v3266
    %3884 = vmatpush1.bf16.msra.mxu0 %v3265
    %3885 = vmatprep.subr.bf16.mxu0 %v3262
    %3886 = vmatpush1.bf16.msra.mxu0 %v3261
    %3887 = vmatprep.subr.bf16.mxu0 %v3258
    %3888 = vmatpush1.bf16.msra.mxu0 %v3257
    %3889 = vmatprep.subr.bf16.mxu0 %v3254
    %3890 = vmatpush1.bf16.msra.mxu0 %v3253
    %3891 = vmatprep.subr.bf16.mxu0 %v3250
    %3892 = vmatpush1.bf16.msra.mxu0 %v3249
    %3893 = vmatprep.subr.bf16.mxu0 %v3246
    %3894 = vmatpush1.bf16.msra.mxu0 %v3245
    %3895 = vmatprep.subr.bf16.mxu0 %v3242
    %3896 = vmatpush1.bf16.msra.mxu0 %v3241
    %3897 = vmatprep.subr.bf16.mxu0 %v3302
    %3898 = vmatpush2.bf16.msra.mxu0 %v3301
    %3899 = vmatprep.subr.bf16.mxu0 %v3298
    %3900 = vmatpush2.bf16.msra.mxu0 %v3297
    %3901 = vmatprep.subr.bf16.mxu0 %v3294
    %3902 = vmatpush2.bf16.msra.mxu0 %v3293
    %3903 = vmatprep.subr.bf16.mxu0 %v3290
    %3904 = vmatpush2.bf16.msra.mxu0 %v3289
    %3905 = vmatprep.subr.bf16.mxu0 %v3286
    %3906 = vmatpush2.bf16.msra.mxu0 %v3285
    %3907 = vmatprep.subr.bf16.mxu0 %v3282
    %3908 = vmatpush2.bf16.msra.mxu0 %v3281
    %3909 = vmatprep.subr.bf16.mxu0 %v3278
    %3910 = vmatpush2.bf16.msra.mxu0 %v3277
    %3911 = vmatprep.subr.bf16.mxu0 %v3274
    %3912 = vmatpush2.bf16.msra.mxu0 %v3273
    %3913 = vmatprep.mubr.bf16.mxu0 %v2332
    %3914 = vmatmul.mubr.bf16.gmra.mxu0 %v2331
    %v3915 = vpop.f32.mrf.mxu0
    %v3916 = vadd.f32 %v3873, %v3915
    %v3917 = vpop.f32.mrf.mxu0
    %v3918 = vadd.f32 %v3875, %v3917
    %v3919 = vpop.f32.mrf.mxu0
    %v3920 = vadd.f32 %v3877, %v3919
    %v3921 = vpop.f32.mrf.mxu0
    %v3922 = vadd.f32 %v3879, %v3921
    %3923 = vdwg.mxu0
    %3924 = vmatprep.subr.bf16.mxu0 %v3334
    %3925 = vmatpush1.bf16.msra.mxu0 %v3333
    %3926 = vmatprep.subr.bf16.mxu0 %v3330
    %3927 = vmatpush1.bf16.msra.mxu0 %v3329
    %3928 = vmatprep.subr.bf16.mxu0 %v3326
    %3929 = vmatpush1.bf16.msra.mxu0 %v3325
    %3930 = vmatprep.subr.bf16.mxu0 %v3322
    %3931 = vmatpush1.bf16.msra.mxu0 %v3321
    %3932 = vmatprep.subr.bf16.mxu0 %v3318
    %3933 = vmatpush1.bf16.msra.mxu0 %v3317
    %3934 = vmatprep.subr.bf16.mxu0 %v3314
    %3935 = vmatpush1.bf16.msra.mxu0 %v3313
    %3936 = vmatprep.subr.bf16.mxu0 %v3310
    %3937 = vmatpush1.bf16.msra.mxu0 %v3309
    %3938 = vmatprep.subr.bf16.mxu0 %v3306
    %3939 = vmatpush1.bf16.msra.mxu0 %v3305
    %3940 = vmatprep.subr.bf16.mxu0 %v3366
    %3941 = vmatpush2.bf16.msra.mxu0 %v3365
    %3942 = vmatprep.subr.bf16.mxu0 %v3362
    %3943 = vmatpush2.bf16.msra.mxu0 %v3361
    %3944 = vmatprep.subr.bf16.mxu0 %v3358
    %3945 = vmatpush2.bf16.msra.mxu0 %v3357
    %3946 = vmatprep.subr.bf16.mxu0 %v3354
    %3947 = vmatpush2.bf16.msra.mxu0 %v3353
    %3948 = vmatprep.subr.bf16.mxu0 %v3350
    %3949 = vmatpush2.bf16.msra.mxu0 %v3349
    %3950 = vmatprep.subr.bf16.mxu0 %v3346
    %3951 = vmatpush2.bf16.msra.mxu0 %v3345
    %3952 = vmatprep.subr.bf16.mxu0 %v3342
    %3953 = vmatpush2.bf16.msra.mxu0 %v3341
    %3954 = vmatprep.subr.bf16.mxu0 %v3338
    %3955 = vmatpush2.bf16.msra.mxu0 %v3337
    %3956 = vmatprep.mubr.bf16.mxu0 %v2334
    %3957 = vmatmul.mubr.bf16.gmra.mxu0 %v2333
    %v3958 = vpop.f32.mrf.mxu0
    %v3959 = vadd.f32 %v3916, %v3958
    %v3960 = vpop.f32.mrf.mxu0
    %v3961 = vadd.f32 %v3918, %v3960
    %v3962 = vpop.f32.mrf.mxu0
    %v3963 = vadd.f32 %v3920, %v3962
    %v3964 = vpop.f32.mrf.mxu0
    %v3965 = vadd.f32 %v3922, %v3964
    %3966 = vdwg.mxu0
    %v3967 = vmax.f32 %v3787, 0.0
    %v3968 = vmax.f32 %v3789, 0.0
    %v3969 = vmax.f32 %v3959, 0.0
    %v3970 = vmax.f32 %v3961, 0.0
    %v3971 = vmax.f32 %v3791, 0.0
    %v3972 = vmax.f32 %v3793, 0.0
    %v3973 = vmax.f32 %v3963, 0.0
    %v3974 = vmax.f32 %v3965, 0.0
    %v3975 = vld [vmem:[%s5] sm:$0xff]
    %v3976 = vld [vmem:[%s5 + $0x8] sm:$0xff]
    %v3977 = vld [vmem:[%s5 + $0x10] sm:$0xff]
    %v3978 = vld [vmem:[%s5 + $0x18] sm:$0xff]
    %v3979 = vld [vmem:[%s5 + $0x20] sm:$0xff]
    %v3980 = vld [vmem:[%s5 + $0x28] sm:$0xff]
    %v3981 = vld [vmem:[%s5 + $0x30] sm:$0xff]
    %v3982 = vld [vmem:[%s5 + $0x38] sm:$0xff]
    %v3983 = vld [vmem:[%s5 + $0x40] sm:$0xff]
    %v3984 = vld [vmem:[%s5 + $0x48] sm:$0xff]
    %v3985 = vld [vmem:[%s5 + $0x50] sm:$0xff]
    %v3986 = vld [vmem:[%s5 + $0x58] sm:$0xff]
    %v3987 = vld [vmem:[%s5 + $0x60] sm:$0xff]
    %v3988 = vld [vmem:[%s5 + $0x68] sm:$0xff]
    %v3989 = vld [vmem:[%s5 + $0x70] sm:$0xff]
    %v3990 = vld [vmem:[%s5 + $0x78] sm:$0xff]
    %v3991 = vld [vmem:[%s5 + $0x80] sm:$0xff]
    %v3992 = vld [vmem:[%s5 + $0x88] sm:$0xff]
    %v3993 = vld [vmem:[%s5 + $0x90] sm:$0xff]
    %v3994 = vld [vmem:[%s5 + $0x98] sm:$0xff]
    %v3995 = vld [vmem:[%s5 + $0xa0] sm:$0xff]
    %v3996 = vld [vmem:[%s5 + $0xa8] sm:$0xff]
    %v3997 = vld [vmem:[%s5 + $0xb0] sm:$0xff]
    %v3998 = vld [vmem:[%s5 + $0xb8] sm:$0xff]
    %v3999 = vld [vmem:[%s5 + $0xc0] sm:$0xff]
    %v4000 = vld [vmem:[%s5 + $0xc8] sm:$0xff]
    %v4001 = vld [vmem:[%s5 + $0xd0] sm:$0xff]
    %v4002 = vld [vmem:[%s5 + $0xd8] sm:$0xff]
    %v4003 = vld [vmem:[%s5 + $0xe0] sm:$0xff]
    %v4004 = vld [vmem:[%s5 + $0xe8] sm:$0xff]
    %v4005 = vld [vmem:[%s5 + $0xf0] sm:$0xff]
    %v4006 = vld [vmem:[%s5 + $0xf8] sm:$0xff]
    %v4007 = vld [vmem:[%s5 + $0x100] sm:$0xff]
    %v4008 = vld [vmem:[%s5 + $0x108] sm:$0xff]
    %v4009 = vld [vmem:[%s5 + $0x110] sm:$0xff]
    %v4010 = vld [vmem:[%s5 + $0x118] sm:$0xff]
    %v4011 = vld [vmem:[%s5 + $0x120] sm:$0xff]
    %v4012 = vld [vmem:[%s5 + $0x128] sm:$0xff]
    %v4013 = vld [vmem:[%s5 + $0x130] sm:$0xff]
    %v4014 = vld [vmem:[%s5 + $0x138] sm:$0xff]
    %v4015 = vld [vmem:[%s5 + $0x140] sm:$0xff]
    %v4016 = vld [vmem:[%s5 + $0x148] sm:$0xff]
    %v4017 = vld [vmem:[%s5 + $0x150] sm:$0xff]
    %v4018 = vld [vmem:[%s5 + $0x158] sm:$0xff]
    %v4019 = vld [vmem:[%s5 + $0x160] sm:$0xff]
    %v4020 = vld [vmem:[%s5 + $0x168] sm:$0xff]
    %v4021 = vld [vmem:[%s5 + $0x170] sm:$0xff]
    %v4022 = vld [vmem:[%s5 + $0x178] sm:$0xff]
    %v4023 = vld [vmem:[%s5 + $0x180] sm:$0xff]
    %v4024 = vld [vmem:[%s5 + $0x188] sm:$0xff]
    %v4025 = vld [vmem:[%s5 + $0x190] sm:$0xff]
    %v4026 = vld [vmem:[%s5 + $0x198] sm:$0xff]
    %v4027 = vld [vmem:[%s5 + $0x1a0] sm:$0xff]
    %v4028 = vld [vmem:[%s5 + $0x1a8] sm:$0xff]
    %v4029 = vld [vmem:[%s5 + $0x1b0] sm:$0xff]
    %v4030 = vld [vmem:[%s5 + $0x1b8] sm:$0xff]
    %v4031 = vld [vmem:[%s5 + $0x1c0] sm:$0xff]
    %v4032 = vld [vmem:[%s5 + $0x1c8] sm:$0xff]
    %v4033 = vld [vmem:[%s5 + $0x1d0] sm:$0xff]
    %v4034 = vld [vmem:[%s5 + $0x1d8] sm:$0xff]
    %v4035 = vld [vmem:[%s5 + $0x1e0] sm:$0xff]
    %v4036 = vld [vmem:[%s5 + $0x1e8] sm:$0xff]
    %v4037 = vld [vmem:[%s5 + $0x1f0] sm:$0xff]
    %v4038 = vld [vmem:[%s5 + $0x1f8] sm:$0xff]
    %v4039 = vld [vmem:[%s6] sm:$0xff]
    %v4040 = vld [vmem:[%s6 + $0x8] sm:$0xff]
    %v4041 = vld [vmem:[%s6 + $0x10] sm:$0xff]
    %v4042 = vld [vmem:[%s6 + $0x18] sm:$0xff]
    %v4043 = vld [vmem:[%s6 + $0x20] sm:$0xff]
    %v4044 = vld [vmem:[%s6 + $0x28] sm:$0xff]
    %v4045 = vld [vmem:[%s6 + $0x30] sm:$0xff]
    %v4046 = vld [vmem:[%s6 + $0x38] sm:$0xff]
    %v4047 = vld [vmem:[%s6 + $0x40] sm:$0xff]
    %v4048 = vld [vmem:[%s6 + $0x48] sm:$0xff]
    %v4049 = vld [vmem:[%s6 + $0x50] sm:$0xff]
    %v4050 = vld [vmem:[%s6 + $0x58] sm:$0xff]
    %v4051 = vld [vmem:[%s6 + $0x60] sm:$0xff]
    %v4052 = vld [vmem:[%s6 + $0x68] sm:$0xff]
    %v4053 = vld [vmem:[%s6 + $0x70] sm:$0xff]
    %v4054 = vld [vmem:[%s6 + $0x78] sm:$0xff]
    %v4055 = vld [vmem:[%s6 + $0x80] sm:$0xff]
    %v4056 = vld [vmem:[%s6 + $0x88] sm:$0xff]
    %v4057 = vld [vmem:[%s6 + $0x90] sm:$0xff]
    %v4058 = vld [vmem:[%s6 + $0x98] sm:$0xff]
    %v4059 = vld [vmem:[%s6 + $0xa0] sm:$0xff]
    %v4060 = vld [vmem:[%s6 + $0xa8] sm:$0xff]
    %v4061 = vld [vmem:[%s6 + $0xb0] sm:$0xff]
    %v4062 = vld [vmem:[%s6 + $0xb8] sm:$0xff]
    %v4063 = vld [vmem:[%s6 + $0xc0] sm:$0xff]
    %v4064 = vld [vmem:[%s6 + $0xc8] sm:$0xff]
    %v4065 = vld [vmem:[%s6 + $0xd0] sm:$0xff]
    %v4066 = vld [vmem:[%s6 + $0xd8] sm:$0xff]
    %v4067 = vld [vmem:[%s6 + $0xe0] sm:$0xff]
    %v4068 = vld [vmem:[%s6 + $0xe8] sm:$0xff]
    %v4069 = vld [vmem:[%s6 + $0xf0] sm:$0xff]
    %v4070 = vld [vmem:[%s6 + $0xf8] sm:$0xff]
    %v4071 = vld [vmem:[%s6 + $0x100] sm:$0xff]
    %v4072 = vld [vmem:[%s6 + $0x108] sm:$0xff]
    %v4073 = vld [vmem:[%s6 + $0x110] sm:$0xff]
    %v4074 = vld [vmem:[%s6 + $0x118] sm:$0xff]
    %v4075 = vld [vmem:[%s6 + $0x120] sm:$0xff]
    %v4076 = vld [vmem:[%s6 + $0x128] sm:$0xff]
    %v4077 = vld [vmem:[%s6 + $0x130] sm:$0xff]
    %v4078 = vld [vmem:[%s6 + $0x138] sm:$0xff]
    %v4079 = vld [vmem:[%s6 + $0x140] sm:$0xff]
    %v4080 = vld [vmem:[%s6 + $0x148] sm:$0xff]
    %v4081 = vld [vmem:[%s6 + $0x150] sm:$0xff]
    %v4082 = vld [vmem:[%s6 + $0x158] sm:$0xff]
    %v4083 = vld [vmem:[%s6 + $0x160] sm:$0xff]
    %v4084 = vld [vmem:[%s6 + $0x168] sm:$0xff]
    %v4085 = vld [vmem:[%s6 + $0x170] sm:$0xff]
    %v4086 = vld [vmem:[%s6 + $0x178] sm:$0xff]
    %v4087 = vld [vmem:[%s6 + $0x180] sm:$0xff]
    %v4088 = vld [vmem:[%s6 + $0x188] sm:$0xff]
    %v4089 = vld [vmem:[%s6 + $0x190] sm:$0xff]
    %v4090 = vld [vmem:[%s6 + $0x198] sm:$0xff]
    %v4091 = vld [vmem:[%s6 + $0x1a0] sm:$0xff]
    %v4092 = vld [vmem:[%s6 + $0x1a8] sm:$0xff]
    %v4093 = vld [vmem:[%s6 + $0x1b0] sm:$0xff]
    %v4094 = vld [vmem:[%s6 + $0x1b8] sm:$0xff]
    %v4095 = vld [vmem:[%s6 + $0x1c0] sm:$0xff]
    %v4096 = vld [vmem:[%s6 + $0x1c8] sm:$0xff]
    %v4097 = vld [vmem:[%s6 + $0x1d0] sm:$0xff]
    %v4098 = vld [vmem:[%s6 + $0x1d8] sm:$0xff]
    %v4099 = vld [vmem:[%s6 + $0x1e0] sm:$0xff]
    %v4100 = vld [vmem:[%s6 + $0x1e8] sm:$0xff]
    %v4101 = vld [vmem:[%s6 + $0x1f0] sm:$0xff]
    %v4102 = vld [vmem:[%s6 + $0x1f8] sm:$0xff]
    %4103 = vmatprep.subr.mxu0 0.0
    %4104 = vmatpush1.msra.mxu0 %v4054
    %4105 = vmatprep.subr.mxu0 0.0
    %4106 = vmatpush1.msra.mxu0 %v4053
    %4107 = vmatprep.subr.mxu0 0.0
    %4108 = vmatpush1.msra.mxu0 %v4052
    %4109 = vmatprep.subr.mxu0 0.0
    %4110 = vmatpush1.msra.mxu0 %v4051
    %4111 = vmatprep.subr.mxu0 0.0
    %4112 = vmatpush1.msra.mxu0 %v4050
    %4113 = vmatprep.subr.mxu0 0.0
    %4114 = vmatpush1.msra.mxu0 %v4049
    %4115 = vmatprep.subr.mxu0 0.0
    %4116 = vmatpush1.msra.mxu0 %v4048
    %4117 = vmatprep.subr.mxu0 0.0
    %4118 = vmatpush1.msra.mxu0 %v4047
    %4119 = vmatprep.subr.mxu0 0.0
    %4120 = vmatpush1.msra.mxu0 %v4046
    %4121 = vmatprep.subr.mxu0 0.0
    %4122 = vmatpush1.msra.mxu0 %v4045
    %4123 = vmatprep.subr.mxu0 0.0
    %4124 = vmatpush1.msra.mxu0 %v4044
    %4125 = vmatprep.subr.mxu0 0.0
    %4126 = vmatpush1.msra.mxu0 %v4043
    %4127 = vmatprep.subr.mxu0 0.0
    %4128 = vmatpush1.msra.mxu0 %v4042
    %4129 = vmatprep.subr.mxu0 0.0
    %4130 = vmatpush1.msra.mxu0 %v4041
    %4131 = vmatprep.subr.mxu0 0.0
    %4132 = vmatpush1.msra.mxu0 %v4040
    %4133 = vmatprep.subr.mxu0 0.0
    %4134 = vmatpush1.msra.mxu0 %v4039
    %4135 = vmatprep.subr.mxu0 0.0
    %4136 = vmatpush2.msra.mxu0 %v4070
    %4137 = vmatprep.subr.mxu0 0.0
    %4138 = vmatpush2.msra.mxu0 %v4069
    %4139 = vmatprep.subr.mxu0 0.0
    %4140 = vmatpush2.msra.mxu0 %v4068
    %4141 = vmatprep.subr.mxu0 0.0
    %4142 = vmatpush2.msra.mxu0 %v4067
    %4143 = vmatprep.subr.mxu0 0.0
    %4144 = vmatpush2.msra.mxu0 %v4066
    %4145 = vmatprep.subr.mxu0 0.0
    %4146 = vmatpush2.msra.mxu0 %v4065
    %4147 = vmatprep.subr.mxu0 0.0
    %4148 = vmatpush2.msra.mxu0 %v4064
    %4149 = vmatprep.subr.mxu0 0.0
    %4150 = vmatpush2.msra.mxu0 %v4063
    %4151 = vmatprep.subr.mxu0 0.0
    %4152 = vmatpush2.msra.mxu0 %v4062
    %4153 = vmatprep.subr.mxu0 0.0
    %4154 = vmatpush2.msra.mxu0 %v4061
    %4155 = vmatprep.subr.mxu0 0.0
    %4156 = vmatpush2.msra.mxu0 %v4060
    %4157 = vmatprep.subr.mxu0 0.0
    %4158 = vmatpush2.msra.mxu0 %v4059
    %4159 = vmatprep.subr.mxu0 0.0
    %4160 = vmatpush2.msra.mxu0 %v4058
    %4161 = vmatprep.subr.mxu0 0.0
    %4162 = vmatpush2.msra.mxu0 %v4057
    %4163 = vmatprep.subr.mxu0 0.0
    %4164 = vmatpush2.msra.mxu0 %v4056
    %4165 = vmatprep.subr.mxu0 0.0
    %4166 = vmatpush2.msra.mxu0 %v4055
    %4167 = vmatprep.mubr.f32.mxu0 %v3968
    %4168 = vmatmul.mubr.f32.gmra.mxu0 %v3967
    %v4169 = vpop.f32.mrf.mxu0
    %v4170 = vadd.f32 0.0, %v4169
    %v4171 = vpop.f32.mrf.mxu0
    %4172 = vmatprep.mubr.f32.mxu0 %v3972
    %4173 = vmatmul.mubr.f32.gmra.mxu0 %v3971
    %v4174 = vpop.f32.mrf.mxu0
    %v4175 = vadd.f32 0.0, %v4174
    %v4176 = vpop.f32.mrf.mxu0
    %4177 = vdwg.mxu0
    %4178 = vmatprep.subr.mxu0 0.0
    %4179 = vmatpush1.msra.mxu0 %v4086
    %4180 = vmatprep.subr.mxu0 0.0
    %4181 = vmatpush1.msra.mxu0 %v4085
    %4182 = vmatprep.subr.mxu0 0.0
    %4183 = vmatpush1.msra.mxu0 %v4084
    %4184 = vmatprep.subr.mxu0 0.0
    %4185 = vmatpush1.msra.mxu0 %v4083
    %4186 = vmatprep.subr.mxu0 0.0
    %4187 = vmatpush1.msra.mxu0 %v4082
    %4188 = vmatprep.subr.mxu0 0.0
    %4189 = vmatpush1.msra.mxu0 %v4081
    %4190 = vmatprep.subr.mxu0 0.0
    %4191 = vmatpush1.msra.mxu0 %v4080
    %4192 = vmatprep.subr.mxu0 0.0
    %4193 = vmatpush1.msra.mxu0 %v4079
    %4194 = vmatprep.subr.mxu0 0.0
    %4195 = vmatpush1.msra.mxu0 %v4078
    %4196 = vmatprep.subr.mxu0 0.0
    %4197 = vmatpush1.msra.mxu0 %v4077
    %4198 = vmatprep.subr.mxu0 0.0
    %4199 = vmatpush1.msra.mxu0 %v4076
    %4200 = vmatprep.subr.mxu0 0.0
    %4201 = vmatpush1.msra.mxu0 %v4075
    %4202 = vmatprep.subr.mxu0 0.0
    %4203 = vmatpush1.msra.mxu0 %v4074
    %4204 = vmatprep.subr.mxu0 0.0
    %4205 = vmatpush1.msra.mxu0 %v4073
    %4206 = vmatprep.subr.mxu0 0.0
    %4207 = vmatpush1.msra.mxu0 %v4072
    %4208 = vmatprep.subr.mxu0 0.0
    %4209 = vmatpush1.msra.mxu0 %v4071
    %4210 = vmatprep.subr.mxu0 0.0
    %4211 = vmatpush2.msra.mxu0 %v4102
    %4212 = vmatprep.subr.mxu0 0.0
    %4213 = vmatpush2.msra.mxu0 %v4101
    %4214 = vmatprep.subr.mxu0 0.0
    %4215 = vmatpush2.msra.mxu0 %v4100
    %4216 = vmatprep.subr.mxu0 0.0
    %4217 = vmatpush2.msra.mxu0 %v4099
    %4218 = vmatprep.subr.mxu0 0.0
    %4219 = vmatpush2.msra.mxu0 %v4098
    %4220 = vmatprep.subr.mxu0 0.0
    %4221 = vmatpush2.msra.mxu0 %v4097
    %4222 = vmatprep.subr.mxu0 0.0
    %4223 = vmatpush2.msra.mxu0 %v4096
    %4224 = vmatprep.subr.mxu0 0.0
    %4225 = vmatpush2.msra.mxu0 %v4095
    %4226 = vmatprep.subr.mxu0 0.0
    %4227 = vmatpush2.msra.mxu0 %v4094
    %4228 = vmatprep.subr.mxu0 0.0
    %4229 = vmatpush2.msra.mxu0 %v4093
    %4230 = vmatprep.subr.mxu0 0.0
    %4231 = vmatpush2.msra.mxu0 %v4092
    %4232 = vmatprep.subr.mxu0 0.0
    %4233 = vmatpush2.msra.mxu0 %v4091
    %4234 = vmatprep.subr.mxu0 0.0
    %4235 = vmatpush2.msra.mxu0 %v4090
    %4236 = vmatprep.subr.mxu0 0.0
    %4237 = vmatpush2.msra.mxu0 %v4089
    %4238 = vmatprep.subr.mxu0 0.0
    %4239 = vmatpush2.msra.mxu0 %v4088
    %4240 = vmatprep.subr.mxu0 0.0
    %4241 = vmatpush2.msra.mxu0 %v4087
    %4242 = vmatprep.mubr.f32.mxu0 %v3970
    %4243 = vmatmul.mubr.f32.gmra.mxu0 %v3969
    %v4244 = vpop.f32.mrf.mxu0
    %v4245 = vadd.f32 %v4170, %v4244
    %v4246 = vpop.f32.mrf.mxu0
    %4247 = vmatprep.mubr.f32.mxu0 %v3974
    %4248 = vmatmul.mubr.f32.gmra.mxu0 %v3973
    %v4249 = vpop.f32.mrf.mxu0
    %v4250 = vadd.f32 %v4175, %v4249
    %v4251 = vpop.f32.mrf.mxu0
    %4252 = vdwg.mxu0
    %4253 = vmatprep.subr.mxu0 0.0
    %4254 = vmatpush1.msra.mxu0 %v3990
    %4255 = vmatprep.subr.mxu0 0.0
    %4256 = vmatpush1.msra.mxu0 %v3989
    %4257 = vmatprep.subr.mxu0 0.0
    %4258 = vmatpush1.msra.mxu0 %v3988
    %4259 = vmatprep.subr.mxu0 0.0
    %4260 = vmatpush1.msra.mxu0 %v3987
    %4261 = vmatprep.subr.mxu0 0.0
    %4262 = vmatpush1.msra.mxu0 %v3986
    %4263 = vmatprep.subr.mxu0 0.0
    %4264 = vmatpush1.msra.mxu0 %v3985
    %4265 = vmatprep.subr.mxu0 0.0
    %4266 = vmatpush1.msra.mxu0 %v3984
    %4267 = vmatprep.subr.mxu0 0.0
    %4268 = vmatpush1.msra.mxu0 %v3983
    %4269 = vmatprep.subr.mxu0 0.0
    %4270 = vmatpush1.msra.mxu0 %v3982
    %4271 = vmatprep.subr.mxu0 0.0
    %4272 = vmatpush1.msra.mxu0 %v3981
    %4273 = vmatprep.subr.mxu0 0.0
    %4274 = vmatpush1.msra.mxu0 %v3980
    %4275 = vmatprep.subr.mxu0 0.0
    %4276 = vmatpush1.msra.mxu0 %v3979
    %4277 = vmatprep.subr.mxu0 0.0
    %4278 = vmatpush1.msra.mxu0 %v3978
    %4279 = vmatprep.subr.mxu0 0.0
    %4280 = vmatpush1.msra.mxu0 %v3977
    %4281 = vmatprep.subr.mxu0 0.0
    %4282 = vmatpush1.msra.mxu0 %v3976
    %4283 = vmatprep.subr.mxu0 0.0
    %4284 = vmatpush1.msra.mxu0 %v3975
    %4285 = vmatprep.subr.mxu0 0.0
    %4286 = vmatpush2.msra.mxu0 %v4006
    %4287 = vmatprep.subr.mxu0 0.0
    %4288 = vmatpush2.msra.mxu0 %v4005
    %4289 = vmatprep.subr.mxu0 0.0
    %4290 = vmatpush2.msra.mxu0 %v4004
    %4291 = vmatprep.subr.mxu0 0.0
    %4292 = vmatpush2.msra.mxu0 %v4003
    %4293 = vmatprep.subr.mxu0 0.0
    %4294 = vmatpush2.msra.mxu0 %v4002
    %4295 = vmatprep.subr.mxu0 0.0
    %4296 = vmatpush2.msra.mxu0 %v4001
    %4297 = vmatprep.subr.mxu0 0.0
    %4298 = vmatpush2.msra.mxu0 %v4000
    %4299 = vmatprep.subr.mxu0 0.0
    %4300 = vmatpush2.msra.mxu0 %v3999
    %4301 = vmatprep.subr.mxu0 0.0
    %4302 = vmatpush2.msra.mxu0 %v3998
    %4303 = vmatprep.subr.mxu0 0.0
    %4304 = vmatpush2.msra.mxu0 %v3997
    %4305 = vmatprep.subr.mxu0 0.0
    %4306 = vmatpush2.msra.mxu0 %v3996
    %4307 = vmatprep.subr.mxu0 0.0
    %4308 = vmatpush2.msra.mxu0 %v3995
    %4309 = vmatprep.subr.mxu0 0.0
    %4310 = vmatpush2.msra.mxu0 %v3994
    %4311 = vmatprep.subr.mxu0 0.0
    %4312 = vmatpush2.msra.mxu0 %v3993
    %4313 = vmatprep.subr.mxu0 0.0
    %4314 = vmatpush2.msra.mxu0 %v3992
    %4315 = vmatprep.subr.mxu0 0.0
    %4316 = vmatpush2.msra.mxu0 %v3991
    %4317 = vmatprep.mubr.f32.mxu0 %v2018
    %4318 = vmatmul.mubr.f32.gmra.mxu0 %v2017
    %v4319 = vpop.f32.mrf.mxu0
    %v4320 = vadd.f32 %v4245, %v4319
    %v4321 = vpop.f32.mrf.mxu0
    %4322 = vmatprep.mubr.f32.mxu0 %v2022
    %4323 = vmatmul.mubr.f32.gmra.mxu0 %v2021
    %v4324 = vpop.f32.mrf.mxu0
    %v4325 = vadd.f32 %v4250, %v4324
    %v4326 = vpop.f32.mrf.mxu0
    %4327 = vdwg.mxu0
    %4328 = vmatprep.subr.mxu0 0.0
    %4329 = vmatpush1.msra.mxu0 %v4022
    %4330 = vmatprep.subr.mxu0 0.0
    %4331 = vmatpush1.msra.mxu0 %v4021
    %4332 = vmatprep.subr.mxu0 0.0
    %4333 = vmatpush1.msra.mxu0 %v4020
    %4334 = vmatprep.subr.mxu0 0.0
    %4335 = vmatpush1.msra.mxu0 %v4019
    %4336 = vmatprep.subr.mxu0 0.0
    %4337 = vmatpush1.msra.mxu0 %v4018
    %4338 = vmatprep.subr.mxu0 0.0
    %4339 = vmatpush1.msra.mxu0 %v4017
    %4340 = vmatprep.subr.mxu0 0.0
    %4341 = vmatpush1.msra.mxu0 %v4016
    %4342 = vmatprep.subr.mxu0 0.0
    %4343 = vmatpush1.msra.mxu0 %v4015
    %4344 = vmatprep.subr.mxu0 0.0
    %4345 = vmatpush1.msra.mxu0 %v4014
    %4346 = vmatprep.subr.mxu0 0.0
    %4347 = vmatpush1.msra.mxu0 %v4013
    %4348 = vmatprep.subr.mxu0 0.0
    %4349 = vmatpush1.msra.mxu0 %v4012
    %4350 = vmatprep.subr.mxu0 0.0
    %4351 = vmatpush1.msra.mxu0 %v4011
    %4352 = vmatprep.subr.mxu0 0.0
    %4353 = vmatpush1.msra.mxu0 %v4010
    %4354 = vmatprep.subr.mxu0 0.0
    %4355 = vmatpush1.msra.mxu0 %v4009
    %4356 = vmatprep.subr.mxu0 0.0
    %4357 = vmatpush1.msra.mxu0 %v4008
    %4358 = vmatprep.subr.mxu0 0.0
    %4359 = vmatpush1.msra.mxu0 %v4007
    %4360 = vmatprep.subr.mxu0 0.0
    %4361 = vmatpush2.msra.mxu0 %v4038
    %4362 = vmatprep.subr.mxu0 0.0
    %4363 = vmatpush2.msra.mxu0 %v4037
    %4364 = vmatprep.subr.mxu0 0.0
    %4365 = vmatpush2.msra.mxu0 %v4036
    %4366 = vmatprep.subr.mxu0 0.0
    %4367 = vmatpush2.msra.mxu0 %v4035
    %4368 = vmatprep.subr.mxu0 0.0
    %4369 = vmatpush2.msra.mxu0 %v4034
    %4370 = vmatprep.subr.mxu0 0.0
    %4371 = vmatpush2.msra.mxu0 %v4033
    %4372 = vmatprep.subr.mxu0 0.0
    %4373 = vmatpush2.msra.mxu0 %v4032
    %4374 = vmatprep.subr.mxu0 0.0
    %4375 = vmatpush2.msra.mxu0 %v4031
    %4376 = vmatprep.subr.mxu0 0.0
    %4377 = vmatpush2.msra.mxu0 %v4030
    %4378 = vmatprep.subr.mxu0 0.0
    %4379 = vmatpush2.msra.mxu0 %v4029
    %4380 = vmatprep.subr.mxu0 0.0
    %4381 = vmatpush2.msra.mxu0 %v4028
    %4382 = vmatprep.subr.mxu0 0.0
    %4383 = vmatpush2.msra.mxu0 %v4027
    %4384 = vmatprep.subr.mxu0 0.0
    %4385 = vmatpush2.msra.mxu0 %v4026
    %4386 = vmatprep.subr.mxu0 0.0
    %4387 = vmatpush2.msra.mxu0 %v4025
    %4388 = vmatprep.subr.mxu0 0.0
    %4389 = vmatpush2.msra.mxu0 %v4024
    %4390 = vmatprep.subr.mxu0 0.0
    %4391 = vmatpush2.msra.mxu0 %v4023
    %4392 = vmatprep.mubr.f32.mxu0 %v2020
    %4393 = vmatmul.mubr.f32.gmra.mxu0 %v2019
    %v4394 = vpop.f32.mrf.mxu0
    %v4395 = vadd.f32 %v4320, %v4394
    %v4396 = vpop.f32.mrf.mxu0
    %4397 = vmatprep.mubr.f32.mxu0 %v2024
    %4398 = vmatmul.mubr.f32.gmra.mxu0 %v2023
    %v4399 = vpop.f32.mrf.mxu0
    %v4400 = vadd.f32 %v4325, %v4399
    %v4401 = vpop.f32.mrf.mxu0
    %4402 = vdwg.mxu0
    %v4403 = vld [vmem:[#allocation2] sm:$0x1]
    %v4405 = vlaneseq
    %v4406 = vshrl.u32 %v4405, 7
    %v4407 = vsub.s32 0, %v4406
    %v4408 = vrot.slane %v4403, %v4407
    %v4410 = vadd.f32 %v4395, %v4408
    %v4411 = vadd.f32 %v4400, %v4408
    %v4412 = vxor.u32 %v4410, 2147483648
    %v4413 = vxor.u32 %v4411, 2147483648
    %v4414 = vmul.f32 %v4412, 1.442695
    %v4415 = vpow.pop %v4414
    %v4416 = vmul.f32 %v4413, 1.442695
    %v4417 = vpow.pop %v4416
    %v4418 = vadd.f32 %v4415, 1.0
    %v4419 = vadd.f32 %v4417, 1.0
    %v4420 = vrcp.pop %v4418
    %v4421 = vmul.f32 1.0, %v4420
    %v4422 = vrcp.pop %v4419
    %v4423 = vmul.f32 1.0, %v4422
    %vm4424 = vcmask 7168
    %4425 = vst.msk [vmem:[%s8] sm:$0xff] %vm4424, %v4421
    %4426 = vst.msk [vmem:[%s8 + $0x8] sm:$0xff] %vm4424, %v4423
    // Predicated region
    $region42: #{tpu_custom_call.1} parent=1 // pred_check
      _
    $region43: #{tpu_custom_call.1} parent=1 // pred_check_branch
      %4428 = sbr.rel (0) target = $region45
    $region44: #{tpu_custom_call.1} parent=1 // pred_region
      _
    $region45: #{tpu_custom_call.1} parent=1 // pred_fallthru
      _
    // Predicated region
    $region46: #{tpu_custom_call.1} parent=1 // pred_check
      _
    $region47: #{tpu_custom_call.1} parent=1 // pred_check_branch
      %4430 = sbr.rel (0) target = $region49
    $region48: #{tpu_custom_call.1} parent=1 // pred_region
      _
    $region49: #{tpu_custom_call.1} parent=1 // pred_fallthru
      _
    %4431 = vsyncpa [#allocation4], 1
    %4432 = vsyncpa [#allocation6], 1

</llo_original>
